<compile_context>
chip_gen: v7x
topology: tpu7x:2x2x1
jax: 0.10.0
libtpu: 0.0.40
codegen_flags: <defaults>
</compile_context>

<pallas_src>
import functools

import jax
import jax.numpy as jnp
import numpy as np
from jax import lax
from jax.experimental import pallas as pl
from jax.experimental.pallas import tpu as pltpu

_LANE = 128      # lane width: last dims padded to a multiple of this
_SUBLANE = 8     # sublane width: batch padded to a multiple of this


def _round_up(n, m):
    return ((n + m - 1) // m) * m


def _rqnet_kernel(h0_ref, x_ref,
                  wih_ref, whh_ref, bgi_ref, bhn_ref,
                  wfc_ref, bfc_ref, wout_ref, bout_ref,
                  gru_ref, ca1_ref, out_ref,
                  gi_ref):
    """Single invocation: fused gi GEMM -> serial recurrence -> head GEMMs.

    Shapes (all VMEM, f32, lane dims multiples of 128, sublane dims of 8):
      h0:(BP,HP)  x:(T*BP,D)
      W_ih_cat:(D,3HP)  W_hh_cat:(HP,3HP)          gate order = (r, z, n)
      b_gi:(1,3HP)  (r,z blocks carry b_ih+b_hh; n block carries b_ih only)
      b_hn:(1,HP)   (b_hh for the n gate — must stay inside r*(.))
      W_fc:(HP,HP) b_fc:(1,HP)  W_out:(HP,AP) b_out:(1,AP)
      gru:(T*BP,HP)  ca1:(T*BP,HP)  out:(T*BP,AP)
      gi scratch:(T*BP,3HP)
    """
    TB = x_ref.shape[0]
    BP, HP = h0_ref.shape
    T = TB // BP

    # ---- Phase 1: fused input projection for ALL timesteps (off the serial
    # path): one GEMM + one fused bias add, into a VMEM scratch.
    gi_ref[...] = (
        jnp.dot(x_ref[...], wih_ref[...], preferred_element_type=jnp.float32)
        + bgi_ref[...])

    bhn = bhn_ref[...]                                       # (1, HP), hoisted

    # ---- Phase 2: sequential GRU recurrence.  One fused (BP,HP)@(HP,3HP)
    # matmul per step; gates sliced at 128-lane tile boundaries; gi read back
    # via ref slicing so vreg pressure stays flat as T grows.
    # TODO(synk): pltpu.matmul_push_rhs to keep W_hh resident in the MXU
    # across timesteps would further shorten the serial path.
    def step(t, h):
        lo = pl.multiple_of(t * BP, BP)
        gi = gi_ref[pl.ds(lo, BP), :]                                 # (BP, 3HP)
        gh = jnp.dot(h, whh_ref[...], preferred_element_type=jnp.float32)
        r = jax.nn.sigmoid(gi[:, 0:HP] + gh[:, 0:HP])
        z = jax.nn.sigmoid(gi[:, HP:2 * HP] + gh[:, HP:2 * HP])
        n = jnp.tanh(gi[:, 2 * HP:3 * HP] + r * (gh[:, 2 * HP:3 * HP] + bhn))
        h_new = (1.0 - z) * n + z * h
        gru_ref[pl.ds(lo, BP), :] = h_new
        return h_new

    # T is small & static here -> full unroll; use unroll=4/8 for long T.
    lax.fori_loop(0, T, step, h0_ref[...], unroll=True)

    # ---- Phase 3: fc+ReLU and out head over the WHOLE sequence, as two
    # lane-dense batched GEMMs (row order irrelevant here).
    g_all = gru_ref[...]                                              # (T*BP, HP)
    ca1 = jnp.maximum(
        jnp.dot(g_all, wfc_ref[...], preferred_element_type=jnp.float32)
        + bfc_ref[...], 0.0)
    ca1_ref[...] = ca1
    out_ref[...] = (jnp.dot(ca1, wout_ref[...], preferred_element_type=jnp.float32)
                    + bout_ref[...])


def _pack_params(params, state_dim):
    """Build fused / lane-padded kernel operands from the logical params.

    Zero padding keeps f32 numerics exact (padded hidden columns stay exactly
    0 through the recurrence and heads).  For repeated inference, cache the
    result instead of re-packing per call.
    """
    H = params["w_fc_t"].shape[0]
    A = params["w_out_t"].shape[1]
    D = state_dim
    HP = _round_up(H, _LANE)
    AP = _round_up(A, _LANE)

    w_ih, w_hh = params["w_ih_g"], params["w_hh_g"]          # (3,D,H), (3,H,H)
    b_ih, b_hh = params["b_ih_g"], params["b_hh_g"]          # (3,1,H)

    def gate_cat(w, k, kp):
        # (3, k, H) -> (kp, 3*HP); gate g occupies lanes [g*HP, g*HP+H).
        out = jnp.zeros((kp, 3 * HP), jnp.float32)
        for g in range(3):
            out = out.at[:k, g * HP:g * HP + H].set(w[g])
        return out

    wih_cat = gate_cat(w_ih, D, D)                           # (D, 3HP)
    whh_cat = gate_cat(w_hh, H, HP)                          # (HP, 3HP)

    # Pre-merged gi bias: r,z blocks get b_ih+b_hh; n block gets b_ih only.
    bgi = jnp.zeros((1, 3 * HP), jnp.float32)
    bgi = bgi.at[:, 0 * HP:0 * HP + H].set(b_ih[0] + b_hh[0])
    bgi = bgi.at[:, 1 * HP:1 * HP + H].set(b_ih[1] + b_hh[1])
    bgi = bgi.at[:, 2 * HP:2 * HP + H].set(b_ih[2])
    bhn = jnp.zeros((1, HP), jnp.float32).at[:, :H].set(b_hh[2])

    wfc = jnp.zeros((HP, HP), jnp.float32).at[:H, :H].set(params["w_fc_t"])
    bfc = jnp.zeros((1, HP), jnp.float32).at[:, :H].set(params["b_fc"])
    wout = jnp.zeros((HP, AP), jnp.float32).at[:H, :A].set(params["w_out_t"])
    bout = jnp.zeros((1, AP), jnp.float32).at[:, :A].set(params["b_out"])

    return dict(wih=wih_cat, whh=whh_cat, bgi=bgi, bhn=bhn,
                wfc=wfc, bfc=bfc, wout=wout, bout=bout,
                H=H, A=A, HP=HP, AP=AP)


def recurrent_qnet_forward(x, params, hidden=None):
    """x: (B, T, state_dim) float32; hidden: optional (1, B, H).

    Returns (out, gru_hidden, ca1_out) with PyTorch shapes:
      out: (B, T, action_dim), gru_hidden: (1, B, H), ca1_out: (B, T, H).
    """
    B, T, D = x.shape
    pk = _pack_params(params, D)
    H, A, HP, AP = pk["H"], pk["A"], pk["HP"], pk["AP"]
    BP = _round_up(B, _SUBLANE)

    h0 = jnp.zeros((BP, HP), jnp.float32)
    if hidden is not None:
        h0 = h0.at[:B, :H].set(hidden.reshape(B, H).astype(jnp.float32))

    # Time-major, flattened, batch padded to the sublane width: row = t*BP + b.
    # TODO(synk): at scale fold this transpose into a time-chunked BlockSpec
    # index_map instead of a separate HBM round-trip.
    x_tm = jnp.zeros((T, BP, D), jnp.float32).at[:, :B, :].set(
        jnp.transpose(x, (1, 0, 2)).astype(jnp.float32))
    x2d = x_tm.reshape(T * BP, D)

    vmem = functools.partial(pl.BlockSpec, memory_space=pltpu.MemorySpace.VMEM)

    out_shapes = (
        jax.ShapeDtypeStruct((T * BP, HP), jnp.float32),   # gru_out (tm, flat)
        jax.ShapeDtypeStruct((T * BP, HP), jnp.float32),   # ca1     (tm, flat)
        jax.ShapeDtypeStruct((T * BP, AP), jnp.float32),   # out     (tm, flat)
    )

    gru_2d, ca1_2d, out_2d = pl.pallas_call(
        _rqnet_kernel,
        out_shape=out_shapes,
        in_specs=[vmem()] * 10,
        out_specs=(vmem(), vmem(), vmem()),
        scratch_shapes=[pltpu.VMEM((T * BP, 3 * HP), jnp.float32)],   # gi
        compiler_params=pltpu.CompilerParams(
            vmem_limit_bytes=32 * 1024 * 1024),
    )(h0, x2d,
      pk["wih"], pk["whh"], pk["bgi"], pk["bhn"],
      pk["wfc"], pk["bfc"], pk["wout"], pk["bout"])

    gru_hidden = gru_2d.reshape(T, BP, HP)[-1, :B, :H][None]          # (1,B,H)
    ca1_out = ca1_2d.reshape(T, BP, HP)[:, :B, :H].transpose(1, 0, 2)  # (B,T,H)
    out = out_2d.reshape(T, BP, AP)[:, :B, :A].transpose(1, 0, 2)      # (B,T,A)
    return out, gru_hidden, ca1_out


def make_params(key, state_dim, hidden_dim, action_dim):
    """Deterministic synthetic parameters (same shapes as the nn.Module).

    PyTorch GRU gate order along the 3H axis is (r, z, n); split into a leading
    gate axis so each gate's weight tile is lane-contiguous.
    """
    # TODO(synk): PyTorch's utils.weight_init is replaced by plain Gaussian init here.
    ks = jax.random.split(key, 8)
    s = 0.1
    H, D, A = hidden_dim, state_dim, action_dim
    w_ih = jax.random.normal(ks[0], (3 * H, D), jnp.float32) * s     # weight_ih_l0
    w_hh = jax.random.normal(ks[1], (3 * H, H), jnp.float32) * s     # weight_hh_l0
    b_ih = jax.random.normal(ks[2], (3 * H,), jnp.float32) * s
    b_hh = jax.random.normal(ks[3], (3 * H,), jnp.float32) * s
    w_fc = jax.random.normal(ks[4], (H, H), jnp.float32) * s         # Linear(H, H)
    b_fc = jax.random.normal(ks[5], (H,), jnp.float32) * s
    w_out = jax.random.normal(ks[6], (A, H), jnp.float32) * s        # Linear(H, A)
    b_out = jax.random.normal(ks[7], (A,), jnp.float32) * s
    return {
        # per-gate, pre-transposed so every matmul is activation @ weight
        "w_ih_g": w_ih.reshape(3, H, D).transpose(0, 2, 1),          # (3, D, H)
        "w_hh_g": w_hh.reshape(3, H, H).transpose(0, 2, 1),          # (3, H, H)
        "b_ih_g": b_ih.reshape(3, 1, H),                             # (3, 1, H)
        "b_hh_g": b_hh.reshape(3, 1, H),                             # (3, 1, H)
        "w_fc_t": w_fc.T, "b_fc": b_fc.reshape(1, H),
        "w_out_t": w_out.T, "b_out": b_out.reshape(1, A),
    }


def reference_forward(x, params, hidden=None):
    """Plain-JAX reference (mirrors torch.nn.GRU batch_first semantics)."""
    B, T, D = x.shape
    H = params["w_fc_t"].shape[0]
    h = jnp.zeros((B, H), jnp.float32) if hidden is None else hidden.reshape(B, H)
    wih, whh = params["w_ih_g"], params["w_hh_g"]
    bih, bhh = params["b_ih_g"], params["b_hh_g"]

    def step(h_prev, x_t):
        r = jax.nn.sigmoid(x_t @ wih[0] + bih[0] + h_prev @ whh[0] + bhh[0])
        z = jax.nn.sigmoid(x_t @ wih[1] + bih[1] + h_prev @ whh[1] + bhh[1])
        n = jnp.tanh(x_t @ wih[2] + bih[2] + r * (h_prev @ whh[2] + bhh[2]))
        h_new = (1.0 - z) * n + z * h_prev
        return h_new, h_new

    h_last, hs = jax.lax.scan(step, h, jnp.transpose(x, (1, 0, 2)))
    gru_out = jnp.transpose(hs, (1, 0, 2))
    ca1 = jnp.maximum(gru_out @ params["w_fc_t"] + params["b_fc"], 0.0)
    out = ca1 @ params["w_out_t"] + params["b_out"]
    return out, h_last[None], ca1


if __name__ == "__main__":
    B, T, STATE, HIDDEN, ACTION = 2, 8, 4, 32, 4

    key = jax.random.PRNGKey(0)
    kx, kp = jax.random.split(key)
    x = jax.random.normal(kx, (B, T, STATE), jnp.float32)
    params = make_params(kp, STATE, HIDDEN, ACTION)

    out, gru_hidden, ca1_out = recurrent_qnet_forward(x, params, hidden=None)
    jax.block_until_ready((out, gru_hidden, ca1_out))

    out_r, hid_r, ca1_r = reference_forward(x, params, hidden=None)
    np.testing.assert_allclose(np.asarray(out), np.asarray(out_r), atol=1e-5, rtol=1e-5)
    np.testing.assert_allclose(np.asarray(gru_hidden), np.asarray(hid_r), atol=1e-5, rtol=1e-5)
    np.testing.assert_allclose(np.asarray(ca1_out), np.asarray(ca1_r), atol=1e-5, rtol=1e-5)

    assert out.shape == (B, T, ACTION)
    assert gru_hidden.shape == (1, B, HIDDEN)
    assert ca1_out.shape == (B, T, HIDDEN)

    print("KERNEL_OK")
</pallas_src>

<mosaic_0001>
module attributes {stable_mosaic.version = 11 : i64} {
  func.func @_rqnet_kernel(%arg0: memref<8x128xf32, #tpu.memory_space<vmem>>, %arg1: memref<64x4xf32, #tpu.memory_space<vmem>>, %arg2: memref<4x384xf32, #tpu.memory_space<vmem>>, %arg3: memref<128x384xf32, #tpu.memory_space<vmem>>, %arg4: memref<1x384xf32, #tpu.memory_space<vmem>>, %arg5: memref<1x128xf32, #tpu.memory_space<vmem>>, %arg6: memref<128x128xf32, #tpu.memory_space<vmem>>, %arg7: memref<1x128xf32, #tpu.memory_space<vmem>>, %arg8: memref<128x128xf32, #tpu.memory_space<vmem>>, %arg9: memref<1x128xf32, #tpu.memory_space<vmem>>, %arg10: memref<64x128xf32, #tpu.memory_space<vmem>>, %arg11: memref<64x128xf32, #tpu.memory_space<vmem>>, %arg12: memref<64x128xf32, #tpu.memory_space<vmem>>, %arg13: memref<64x384xf32, #tpu.memory_space<vmem>>) attributes {dimension_semantics = [], scalar_prefetch = 0 : i64, scratch_operands = 1 : i64, tpu.core_type = #tpu.core_type<tc>} {
    %c0 = arith.constant 0 : index
    %c0_0 = arith.constant 0 : index
    %0 = vector.load %arg1[%c0, %c0_0] : memref<64x4xf32, #tpu.memory_space<vmem>>, vector<64x4xf32>
    %c0_1 = arith.constant 0 : index
    %c0_2 = arith.constant 0 : index
    %1 = vector.load %arg2[%c0_1, %c0_2] : memref<4x384xf32, #tpu.memory_space<vmem>>, vector<4x384xf32>
    %cst = arith.constant dense<0.000000e+00> : vector<64x384xf32>
    %2 = tpu.matmul %0, %1, %cst {dimension_numbers = #tpu.dot_dimension_numbers<[1], [0], [0], [1], [0, 0, 1, 1], [], []>} : vector<64x4xf32>, vector<4x384xf32>, vector<64x384xf32> -> vector<64x384xf32>
    %c0_3 = arith.constant 0 : index
    %c0_4 = arith.constant 0 : index
    %3 = vector.load %arg4[%c0_3, %c0_4] : memref<1x384xf32, #tpu.memory_space<vmem>>, vector<1x384xf32>
    %4 = vector.broadcast %3 : vector<1x384xf32> to vector<64x384xf32>
    %5 = arith.addf %2, %4 : vector<64x384xf32>
    %c0_5 = arith.constant 0 : index
    %c0_6 = arith.constant 0 : index
    %6 = vector.load %arg13[%c0_5, %c0_6] : memref<64x384xf32, #tpu.memory_space<vmem>>, vector<64x384xf32>
    tpu.vector_store %arg13[%c0_5, %c0_6], %5 {strides = array<i32>} : memref<64x384xf32, #tpu.memory_space<vmem>>, vector<64x384xf32>,
    %c0_7 = arith.constant 0 : index
    %c0_8 = arith.constant 0 : index
    %7 = vector.load %arg5[%c0_7, %c0_8] : memref<1x128xf32, #tpu.memory_space<vmem>>, vector<1x128xf32>
    %c0_9 = arith.constant 0 : index
    %c0_10 = arith.constant 0 : index
    %8 = vector.load %arg0[%c0_9, %c0_10] : memref<8x128xf32, #tpu.memory_space<vmem>>, vector<8x128xf32>
    %c0_i32 = arith.constant 0 : i32
    %c8_i32 = arith.constant 8 : i32
    %9 = arith.muli %c0_i32, %c8_i32 : i32
    %10 = tpu.assume_multiple %9, 8 : i32
    %11 = arith.index_cast %10 : i32 to index
    %c0_11 = arith.constant 0 : index
    %12 = vector.load %arg13[%11, %c0_11] : memref<64x384xf32, #tpu.memory_space<vmem>>, vector<8x384xf32>
    %c0_12 = arith.constant 0 : index
    %c0_13 = arith.constant 0 : index
    %13 = vector.load %arg3[%c0_12, %c0_13] : memref<128x384xf32, #tpu.memory_space<vmem>>, vector<128x384xf32>
    %cst_14 = arith.constant dense<0.000000e+00> : vector<8x384xf32>
    %14 = tpu.matmul %8, %13, %cst_14 {dimension_numbers = #tpu.dot_dimension_numbers<[1], [0], [0], [1], [0, 0, 1, 1], [], []>} : vector<8x128xf32>, vector<128x384xf32>, vector<8x384xf32> -> vector<8x384xf32>
    %15 = vector.extract_strided_slice %12 {offsets = [0, 0], sizes = [8, 128], strides = [1, 1]} : vector<8x384xf32> to vector<8x128xf32>
    %16 = vector.extract_strided_slice %14 {offsets = [0, 0], sizes = [8, 128], strides = [1, 1]} : vector<8x384xf32> to vector<8x128xf32>
    %17 = arith.addf %15, %16 : vector<8x128xf32>
    %18 = arith.negf %17 : vector<8x128xf32>
    %19 = math.exp %18 : vector<8x128xf32>
    %cst_15 = arith.constant 1.000000e+00 : f32
    %20 = vector.broadcast %cst_15 : f32 to vector<8x128xf32>
    %21 = arith.addf %20, %19 : vector<8x128xf32>
    %22 = arith.divf %20, %21 : vector<8x128xf32>
    %23 = vector.extract_strided_slice %12 {offsets = [0, 128], sizes = [8, 128], strides = [1, 1]} : vector<8x384xf32> to vector<8x128xf32>
    %24 = vector.extract_strided_slice %14 {offsets = [0, 128], sizes = [8, 128], strides = [1, 1]} : vector<8x384xf32> to vector<8x128xf32>
    %25 = arith.addf %23, %24 : vector<8x128xf32>
    %26 = arith.negf %25 : vector<8x128xf32>
    %27 = math.exp %26 : vector<8x128xf32>
    %cst_16 = arith.constant 1.000000e+00 : f32
    %28 = vector.broadcast %cst_16 : f32 to vector<8x128xf32>
    %29 = arith.addf %28, %27 : vector<8x128xf32>
    %30 = arith.divf %28, %29 : vector<8x128xf32>
    %31 = vector.extract_strided_slice %12 {offsets = [0, 256], sizes = [8, 128], strides = [1, 1]} : vector<8x384xf32> to vector<8x128xf32>
    %32 = vector.extract_strided_slice %14 {offsets = [0, 256], sizes = [8, 128], strides = [1, 1]} : vector<8x384xf32> to vector<8x128xf32>
    %33 = vector.broadcast %7 : vector<1x128xf32> to vector<8x128xf32>
    %34 = arith.addf %32, %33 : vector<8x128xf32>
    %35 = arith.mulf %22, %34 : vector<8x128xf32>
    %36 = arith.addf %31, %35 : vector<8x128xf32>
    %37 = math.tanh %36 : vector<8x128xf32>
    %cst_17 = arith.constant 1.000000e+00 : f32
    %38 = vector.broadcast %cst_17 : f32 to vector<8x128xf32>
    %39 = arith.subf %38, %30 : vector<8x128xf32>
    %40 = arith.mulf %39, %37 : vector<8x128xf32>
    %41 = arith.mulf %30, %8 : vector<8x128xf32>
    %42 = arith.addf %40, %41 : vector<8x128xf32>
    %43 = arith.index_cast %10 : i32 to index
    %c0_18 = arith.constant 0 : index
    %44 = vector.load %arg10[%43, %c0_18] : memref<64x128xf32, #tpu.memory_space<vmem>>, vector<8x128xf32>
    tpu.vector_store %arg10[%43, %c0_18], %42 {strides = array<i32>} : memref<64x128xf32, #tpu.memory_space<vmem>>, vector<8x128xf32>,
    %c1_i32 = arith.constant 1 : i32
    %c8_i32_19 = arith.constant 8 : i32
    %45 = arith.muli %c1_i32, %c8_i32_19 : i32
    %46 = tpu.assume_multiple %45, 8 : i32
    %47 = arith.index_cast %46 : i32 to index
    %c0_20 = arith.constant 0 : index
    %48 = vector.load %arg13[%47, %c0_20] : memref<64x384xf32, #tpu.memory_space<vmem>>, vector<8x384xf32>
    %c0_21 = arith.constant 0 : index
    %c0_22 = arith.constant 0 : index
    %49 = vector.load %arg3[%c0_21, %c0_22] : memref<128x384xf32, #tpu.memory_space<vmem>>, vector<128x384xf32>
    %cst_23 = arith.constant dense<0.000000e+00> : vector<8x384xf32>
    %50 = tpu.matmul %42, %49, %cst_23 {dimension_numbers = #tpu.dot_dimension_numbers<[1], [0], [0], [1], [0, 0, 1, 1], [], []>} : vector<8x128xf32>, vector<128x384xf32>, vector<8x384xf32> -> vector<8x384xf32>
    %51 = vector.extract_strided_slice %48 {offsets = [0, 0], sizes = [8, 128], strides = [1, 1]} : vector<8x384xf32> to vector<8x128xf32>
    %52 = vector.extract_strided_slice %50 {offsets = [0, 0], sizes = [8, 128], strides = [1, 1]} : vector<8x384xf32> to vector<8x128xf32>
    %53 = arith.addf %51, %52 : vector<8x128xf32>
    %54 = arith.negf %53 : vector<8x128xf32>
    %55 = math.exp %54 : vector<8x128xf32>
    %cst_24 = arith.constant 1.000000e+00 : f32
    %56 = vector.broadcast %cst_24 : f32 to vector<8x128xf32>
    %57 = arith.addf %56, %55 : vector<8x128xf32>
    %58 = arith.divf %56, %57 : vector<8x128xf32>
    %59 = vector.extract_strided_slice %48 {offsets = [0, 128], sizes = [8, 128], strides = [1, 1]} : vector<8x384xf32> to vector<8x128xf32>
    %60 = vector.extract_strided_slice %50 {offsets = [0, 128], sizes = [8, 128], strides = [1, 1]} : vector<8x384xf32> to vector<8x128xf32>
    %61 = arith.addf %59, %60 : vector<8x128xf32>
    %62 = arith.negf %61 : vector<8x128xf32>
    %63 = math.exp %62 : vector<8x128xf32>
    %cst_25 = arith.constant 1.000000e+00 : f32
    %64 = vector.broadcast %cst_25 : f32 to vector<8x128xf32>
    %65 = arith.addf %64, %63 : vector<8x128xf32>
    %66 = arith.divf %64, %65 : vector<8x128xf32>
    %67 = vector.extract_strided_slice %48 {offsets = [0, 256], sizes = [8, 128], strides = [1, 1]} : vector<8x384xf32> to vector<8x128xf32>
    %68 = vector.extract_strided_slice %50 {offsets = [0, 256], sizes = [8, 128], strides = [1, 1]} : vector<8x384xf32> to vector<8x128xf32>
    %69 = vector.broadcast %7 : vector<1x128xf32> to vector<8x128xf32>
    %70 = arith.addf %68, %69 : vector<8x128xf32>
    %71 = arith.mulf %58, %70 : vector<8x128xf32>
    %72 = arith.addf %67, %71 : vector<8x128xf32>
    %73 = math.tanh %72 : vector<8x128xf32>
    %cst_26 = arith.constant 1.000000e+00 : f32
    %74 = vector.broadcast %cst_26 : f32 to vector<8x128xf32>
    %75 = arith.subf %74, %66 : vector<8x128xf32>
    %76 = arith.mulf %75, %73 : vector<8x128xf32>
    %77 = arith.mulf %66, %42 : vector<8x128xf32>
    %78 = arith.addf %76, %77 : vector<8x128xf32>
    %79 = arith.index_cast %46 : i32 to index
    %c0_27 = arith.constant 0 : index
    %80 = vector.load %arg10[%79, %c0_27] : memref<64x128xf32, #tpu.memory_space<vmem>>, vector<8x128xf32>
    tpu.vector_store %arg10[%79, %c0_27], %78 {strides = array<i32>} : memref<64x128xf32, #tpu.memory_space<vmem>>, vector<8x128xf32>,
    %c2_i32 = arith.constant 2 : i32
    %c8_i32_28 = arith.constant 8 : i32
    %81 = arith.muli %c2_i32, %c8_i32_28 : i32
    %82 = tpu.assume_multiple %81, 8 : i32
    %83 = arith.index_cast %82 : i32 to index
    %c0_29 = arith.constant 0 : index
    %84 = vector.load %arg13[%83, %c0_29] : memref<64x384xf32, #tpu.memory_space<vmem>>, vector<8x384xf32>
    %c0_30 = arith.constant 0 : index
    %c0_31 = arith.constant 0 : index
    %85 = vector.load %arg3[%c0_30, %c0_31] : memref<128x384xf32, #tpu.memory_space<vmem>>, vector<128x384xf32>
    %cst_32 = arith.constant dense<0.000000e+00> : vector<8x384xf32>
    %86 = tpu.matmul %78, %85, %cst_32 {dimension_numbers = #tpu.dot_dimension_numbers<[1], [0], [0], [1], [0, 0, 1, 1], [], []>} : vector<8x128xf32>, vector<128x384xf32>, vector<8x384xf32> -> vector<8x384xf32>
    %87 = vector.extract_strided_slice %84 {offsets = [0, 0], sizes = [8, 128], strides = [1, 1]} : vector<8x384xf32> to vector<8x128xf32>
    %88 = vector.extract_strided_slice %86 {offsets = [0, 0], sizes = [8, 128], strides = [1, 1]} : vector<8x384xf32> to vector<8x128xf32>
    %89 = arith.addf %87, %88 : vector<8x128xf32>
    %90 = arith.negf %89 : vector<8x128xf32>
    %91 = math.exp %90 : vector<8x128xf32>
    %cst_33 = arith.constant 1.000000e+00 : f32
    %92 = vector.broadcast %cst_33 : f32 to vector<8x128xf32>
    %93 = arith.addf %92, %91 : vector<8x128xf32>
    %94 = arith.divf %92, %93 : vector<8x128xf32>
    %95 = vector.extract_strided_slice %84 {offsets = [0, 128], sizes = [8, 128], strides = [1, 1]} : vector<8x384xf32> to vector<8x128xf32>
    %96 = vector.extract_strided_slice %86 {offsets = [0, 128], sizes = [8, 128], strides = [1, 1]} : vector<8x384xf32> to vector<8x128xf32>
    %97 = arith.addf %95, %96 : vector<8x128xf32>
    %98 = arith.negf %97 : vector<8x128xf32>
    %99 = math.exp %98 : vector<8x128xf32>
    %cst_34 = arith.constant 1.000000e+00 : f32
    %100 = vector.broadcast %cst_34 : f32 to vector<8x128xf32>
    %101 = arith.addf %100, %99 : vector<8x128xf32>
    %102 = arith.divf %100, %101 : vector<8x128xf32>
    %103 = vector.extract_strided_slice %84 {offsets = [0, 256], sizes = [8, 128], strides = [1, 1]} : vector<8x384xf32> to vector<8x128xf32>
    %104 = vector.extract_strided_slice %86 {offsets = [0, 256], sizes = [8, 128], strides = [1, 1]} : vector<8x384xf32> to vector<8x128xf32>
    %105 = vector.broadcast %7 : vector<1x128xf32> to vector<8x128xf32>
    %106 = arith.addf %104, %105 : vector<8x128xf32>
    %107 = arith.mulf %94, %106 : vector<8x128xf32>
    %108 = arith.addf %103, %107 : vector<8x128xf32>
    %109 = math.tanh %108 : vector<8x128xf32>
    %cst_35 = arith.constant 1.000000e+00 : f32
    %110 = vector.broadcast %cst_35 : f32 to vector<8x128xf32>
    %111 = arith.subf %110, %102 : vector<8x128xf32>
    %112 = arith.mulf %111, %109 : vector<8x128xf32>
    %113 = arith.mulf %102, %78 : vector<8x128xf32>
    %114 = arith.addf %112, %113 : vector<8x128xf32>
    %115 = arith.index_cast %82 : i32 to index
    %c0_36 = arith.constant 0 : index
    %116 = vector.load %arg10[%115, %c0_36] : memref<64x128xf32, #tpu.memory_space<vmem>>, vector<8x128xf32>
    tpu.vector_store %arg10[%115, %c0_36], %114 {strides = array<i32>} : memref<64x128xf32, #tpu.memory_space<vmem>>, vector<8x128xf32>,
    %c3_i32 = arith.constant 3 : i32
    %c8_i32_37 = arith.constant 8 : i32
    %117 = arith.muli %c3_i32, %c8_i32_37 : i32
    %118 = tpu.assume_multiple %117, 8 : i32
    %119 = arith.index_cast %118 : i32 to index
    %c0_38 = arith.constant 0 : index
    %120 = vector.load %arg13[%119, %c0_38] : memref<64x384xf32, #tpu.memory_space<vmem>>, vector<8x384xf32>
    %c0_39 = arith.constant 0 : index
    %c0_40 = arith.constant 0 : index
    %121 = vector.load %arg3[%c0_39, %c0_40] : memref<128x384xf32, #tpu.memory_space<vmem>>, vector<128x384xf32>
    %cst_41 = arith.constant dense<0.000000e+00> : vector<8x384xf32>
    %122 = tpu.matmul %114, %121, %cst_41 {dimension_numbers = #tpu.dot_dimension_numbers<[1], [0], [0], [1], [0, 0, 1, 1], [], []>} : vector<8x128xf32>, vector<128x384xf32>, vector<8x384xf32> -> vector<8x384xf32>
    %123 = vector.extract_strided_slice %120 {offsets = [0, 0], sizes = [8, 128], strides = [1, 1]} : vector<8x384xf32> to vector<8x128xf32>
    %124 = vector.extract_strided_slice %122 {offsets = [0, 0], sizes = [8, 128], strides = [1, 1]} : vector<8x384xf32> to vector<8x128xf32>
    %125 = arith.addf %123, %124 : vector<8x128xf32>
    %126 = arith.negf %125 : vector<8x128xf32>
    %127 = math.exp %126 : vector<8x128xf32>
    %cst_42 = arith.constant 1.000000e+00 : f32
    %128 = vector.broadcast %cst_42 : f32 to vector<8x128xf32>
    %129 = arith.addf %128, %127 : vector<8x128xf32>
    %130 = arith.divf %128, %129 : vector<8x128xf32>
    %131 = vector.extract_strided_slice %120 {offsets = [0, 128], sizes = [8, 128], strides = [1, 1]} : vector<8x384xf32> to vector<8x128xf32>
    %132 = vector.extract_strided_slice %122 {offsets = [0, 128], sizes = [8, 128], strides = [1, 1]} : vector<8x384xf32> to vector<8x128xf32>
    %133 = arith.addf %131, %132 : vector<8x128xf32>
    %134 = arith.negf %133 : vector<8x128xf32>
    %135 = math.exp %134 : vector<8x128xf32>
    %cst_43 = arith.constant 1.000000e+00 : f32
    %136 = vector.broadcast %cst_43 : f32 to vector<8x128xf32>
    %137 = arith.addf %136, %135 : vector<8x128xf32>
    %138 = arith.divf %136, %137 : vector<8x128xf32>
    %139 = vector.extract_strided_slice %120 {offsets = [0, 256], sizes = [8, 128], strides = [1, 1]} : vector<8x384xf32> to vector<8x128xf32>
    %140 = vector.extract_strided_slice %122 {offsets = [0, 256], sizes = [8, 128], strides = [1, 1]} : vector<8x384xf32> to vector<8x128xf32>
    %141 = vector.broadcast %7 : vector<1x128xf32> to vector<8x128xf32>
    %142 = arith.addf %140, %141 : vector<8x128xf32>
    %143 = arith.mulf %130, %142 : vector<8x128xf32>
    %144 = arith.addf %139, %143 : vector<8x128xf32>
    %145 = math.tanh %144 : vector<8x128xf32>
    %cst_44 = arith.constant 1.000000e+00 : f32
    %146 = vector.broadcast %cst_44 : f32 to vector<8x128xf32>
    %147 = arith.subf %146, %138 : vector<8x128xf32>
    %148 = arith.mulf %147, %145 : vector<8x128xf32>
    %149 = arith.mulf %138, %114 : vector<8x128xf32>
    %150 = arith.addf %148, %149 : vector<8x128xf32>
    %151 = arith.index_cast %118 : i32 to index
    %c0_45 = arith.constant 0 : index
    %152 = vector.load %arg10[%151, %c0_45] : memref<64x128xf32, #tpu.memory_space<vmem>>, vector<8x128xf32>
    tpu.vector_store %arg10[%151, %c0_45], %150 {strides = array<i32>} : memref<64x128xf32, #tpu.memory_space<vmem>>, vector<8x128xf32>,
    %c4_i32 = arith.constant 4 : i32
    %c8_i32_46 = arith.constant 8 : i32
    %153 = arith.muli %c4_i32, %c8_i32_46 : i32
    %154 = tpu.assume_multiple %153, 8 : i32
    %155 = arith.index_cast %154 : i32 to index
    %c0_47 = arith.constant 0 : index
    %156 = vector.load %arg13[%155, %c0_47] : memref<64x384xf32, #tpu.memory_space<vmem>>, vector<8x384xf32>
    %c0_48 = arith.constant 0 : index
    %c0_49 = arith.constant 0 : index
    %157 = vector.load %arg3[%c0_48, %c0_49] : memref<128x384xf32, #tpu.memory_space<vmem>>, vector<128x384xf32>
    %cst_50 = arith.constant dense<0.000000e+00> : vector<8x384xf32>
    %158 = tpu.matmul %150, %157, %cst_50 {dimension_numbers = #tpu.dot_dimension_numbers<[1], [0], [0], [1], [0, 0, 1, 1], [], []>} : vector<8x128xf32>, vector<128x384xf32>, vector<8x384xf32> -> vector<8x384xf32>
    %159 = vector.extract_strided_slice %156 {offsets = [0, 0], sizes = [8, 128], strides = [1, 1]} : vector<8x384xf32> to vector<8x128xf32>
    %160 = vector.extract_strided_slice %158 {offsets = [0, 0], sizes = [8, 128], strides = [1, 1]} : vector<8x384xf32> to vector<8x128xf32>
    %161 = arith.addf %159, %160 : vector<8x128xf32>
    %162 = arith.negf %161 : vector<8x128xf32>
    %163 = math.exp %162 : vector<8x128xf32>
    %cst_51 = arith.constant 1.000000e+00 : f32
    %164 = vector.broadcast %cst_51 : f32 to vector<8x128xf32>
    %165 = arith.addf %164, %163 : vector<8x128xf32>
    %166 = arith.divf %164, %165 : vector<8x128xf32>
    %167 = vector.extract_strided_slice %156 {offsets = [0, 128], sizes = [8, 128], strides = [1, 1]} : vector<8x384xf32> to vector<8x128xf32>
    %168 = vector.extract_strided_slice %158 {offsets = [0, 128], sizes = [8, 128], strides = [1, 1]} : vector<8x384xf32> to vector<8x128xf32>
    %169 = arith.addf %167, %168 : vector<8x128xf32>
    %170 = arith.negf %169 : vector<8x128xf32>
    %171 = math.exp %170 : vector<8x128xf32>
    %cst_52 = arith.constant 1.000000e+00 : f32
    %172 = vector.broadcast %cst_52 : f32 to vector<8x128xf32>
    %173 = arith.addf %172, %171 : vector<8x128xf32>
    %174 = arith.divf %172, %173 : vector<8x128xf32>
    %175 = vector.extract_strided_slice %156 {offsets = [0, 256], sizes = [8, 128], strides = [1, 1]} : vector<8x384xf32> to vector<8x128xf32>
    %176 = vector.extract_strided_slice %158 {offsets = [0, 256], sizes = [8, 128], strides = [1, 1]} : vector<8x384xf32> to vector<8x128xf32>
    %177 = vector.broadcast %7 : vector<1x128xf32> to vector<8x128xf32>
    %178 = arith.addf %176, %177 : vector<8x128xf32>
    %179 = arith.mulf %166, %178 : vector<8x128xf32>
    %180 = arith.addf %175, %179 : vector<8x128xf32>
    %181 = math.tanh %180 : vector<8x128xf32>
    %cst_53 = arith.constant 1.000000e+00 : f32
    %182 = vector.broadcast %cst_53 : f32 to vector<8x128xf32>
    %183 = arith.subf %182, %174 : vector<8x128xf32>
    %184 = arith.mulf %183, %181 : vector<8x128xf32>
    %185 = arith.mulf %174, %150 : vector<8x128xf32>
    %186 = arith.addf %184, %185 : vector<8x128xf32>
    %187 = arith.index_cast %154 : i32 to index
    %c0_54 = arith.constant 0 : index
    %188 = vector.load %arg10[%187, %c0_54] : memref<64x128xf32, #tpu.memory_space<vmem>>, vector<8x128xf32>
    tpu.vector_store %arg10[%187, %c0_54], %186 {strides = array<i32>} : memref<64x128xf32, #tpu.memory_space<vmem>>, vector<8x128xf32>,
    %c5_i32 = arith.constant 5 : i32
    %c8_i32_55 = arith.constant 8 : i32
    %189 = arith.muli %c5_i32, %c8_i32_55 : i32
    %190 = tpu.assume_multiple %189, 8 : i32
    %191 = arith.index_cast %190 : i32 to index
    %c0_56 = arith.constant 0 : index
    %192 = vector.load %arg13[%191, %c0_56] : memref<64x384xf32, #tpu.memory_space<vmem>>, vector<8x384xf32>
    %c0_57 = arith.constant 0 : index
    %c0_58 = arith.constant 0 : index
    %193 = vector.load %arg3[%c0_57, %c0_58] : memref<128x384xf32, #tpu.memory_space<vmem>>, vector<128x384xf32>
    %cst_59 = arith.constant dense<0.000000e+00> : vector<8x384xf32>
    %194 = tpu.matmul %186, %193, %cst_59 {dimension_numbers = #tpu.dot_dimension_numbers<[1], [0], [0], [1], [0, 0, 1, 1], [], []>} : vector<8x128xf32>, vector<128x384xf32>, vector<8x384xf32> -> vector<8x384xf32>
    %195 = vector.extract_strided_slice %192 {offsets = [0, 0], sizes = [8, 128], strides = [1, 1]} : vector<8x384xf32> to vector<8x128xf32>
    %196 = vector.extract_strided_slice %194 {offsets = [0, 0], sizes = [8, 128], strides = [1, 1]} : vector<8x384xf32> to vector<8x128xf32>
    %197 = arith.addf %195, %196 : vector<8x128xf32>
    %198 = arith.negf %197 : vector<8x128xf32>
    %199 = math.exp %198 : vector<8x128xf32>
    %cst_60 = arith.constant 1.000000e+00 : f32
    %200 = vector.broadcast %cst_60 : f32 to vector<8x128xf32>
    %201 = arith.addf %200, %199 : vector<8x128xf32>
    %202 = arith.divf %200, %201 : vector<8x128xf32>
    %203 = vector.extract_strided_slice %192 {offsets = [0, 128], sizes = [8, 128], strides = [1, 1]} : vector<8x384xf32> to vector<8x128xf32>
    %204 = vector.extract_strided_slice %194 {offsets = [0, 128], sizes = [8, 128], strides = [1, 1]} : vector<8x384xf32> to vector<8x128xf32>
    %205 = arith.addf %203, %204 : vector<8x128xf32>
    %206 = arith.negf %205 : vector<8x128xf32>
    %207 = math.exp %206 : vector<8x128xf32>
    %cst_61 = arith.constant 1.000000e+00 : f32
    %208 = vector.broadcast %cst_61 : f32 to vector<8x128xf32>
    %209 = arith.addf %208, %207 : vector<8x128xf32>
    %210 = arith.divf %208, %209 : vector<8x128xf32>
    %211 = vector.extract_strided_slice %192 {offsets = [0, 256], sizes = [8, 128], strides = [1, 1]} : vector<8x384xf32> to vector<8x128xf32>
    %212 = vector.extract_strided_slice %194 {offsets = [0, 256], sizes = [8, 128], strides = [1, 1]} : vector<8x384xf32> to vector<8x128xf32>
    %213 = vector.broadcast %7 : vector<1x128xf32> to vector<8x128xf32>
    %214 = arith.addf %212, %213 : vector<8x128xf32>
    %215 = arith.mulf %202, %214 : vector<8x128xf32>
    %216 = arith.addf %211, %215 : vector<8x128xf32>
    %217 = math.tanh %216 : vector<8x128xf32>
    %cst_62 = arith.constant 1.000000e+00 : f32
    %218 = vector.broadcast %cst_62 : f32 to vector<8x128xf32>
    %219 = arith.subf %218, %210 : vector<8x128xf32>
    %220 = arith.mulf %219, %217 : vector<8x128xf32>
    %221 = arith.mulf %210, %186 : vector<8x128xf32>
    %222 = arith.addf %220, %221 : vector<8x128xf32>
    %223 = arith.index_cast %190 : i32 to index
    %c0_63 = arith.constant 0 : index
    %224 = vector.load %arg10[%223, %c0_63] : memref<64x128xf32, #tpu.memory_space<vmem>>, vector<8x128xf32>
    tpu.vector_store %arg10[%223, %c0_63], %222 {strides = array<i32>} : memref<64x128xf32, #tpu.memory_space<vmem>>, vector<8x128xf32>,
    %c6_i32 = arith.constant 6 : i32
    %c8_i32_64 = arith.constant 8 : i32
    %225 = arith.muli %c6_i32, %c8_i32_64 : i32
    %226 = tpu.assume_multiple %225, 8 : i32
    %227 = arith.index_cast %226 : i32 to index
    %c0_65 = arith.constant 0 : index
    %228 = vector.load %arg13[%227, %c0_65] : memref<64x384xf32, #tpu.memory_space<vmem>>, vector<8x384xf32>
    %c0_66 = arith.constant 0 : index
    %c0_67 = arith.constant 0 : index
    %229 = vector.load %arg3[%c0_66, %c0_67] : memref<128x384xf32, #tpu.memory_space<vmem>>, vector<128x384xf32>
    %cst_68 = arith.constant dense<0.000000e+00> : vector<8x384xf32>
    %230 = tpu.matmul %222, %229, %cst_68 {dimension_numbers = #tpu.dot_dimension_numbers<[1], [0], [0], [1], [0, 0, 1, 1], [], []>} : vector<8x128xf32>, vector<128x384xf32>, vector<8x384xf32> -> vector<8x384xf32>
    %231 = vector.extract_strided_slice %228 {offsets = [0, 0], sizes = [8, 128], strides = [1, 1]} : vector<8x384xf32> to vector<8x128xf32>
    %232 = vector.extract_strided_slice %230 {offsets = [0, 0], sizes = [8, 128], strides = [1, 1]} : vector<8x384xf32> to vector<8x128xf32>
    %233 = arith.addf %231, %232 : vector<8x128xf32>
    %234 = arith.negf %233 : vector<8x128xf32>
    %235 = math.exp %234 : vector<8x128xf32>
    %cst_69 = arith.constant 1.000000e+00 : f32
    %236 = vector.broadcast %cst_69 : f32 to vector<8x128xf32>
    %237 = arith.addf %236, %235 : vector<8x128xf32>
    %238 = arith.divf %236, %237 : vector<8x128xf32>
    %239 = vector.extract_strided_slice %228 {offsets = [0, 128], sizes = [8, 128], strides = [1, 1]} : vector<8x384xf32> to vector<8x128xf32>
    %240 = vector.extract_strided_slice %230 {offsets = [0, 128], sizes = [8, 128], strides = [1, 1]} : vector<8x384xf32> to vector<8x128xf32>
    %241 = arith.addf %239, %240 : vector<8x128xf32>
    %242 = arith.negf %241 : vector<8x128xf32>
    %243 = math.exp %242 : vector<8x128xf32>
    %cst_70 = arith.constant 1.000000e+00 : f32
    %244 = vector.broadcast %cst_70 : f32 to vector<8x128xf32>
    %245 = arith.addf %244, %243 : vector<8x128xf32>
    %246 = arith.divf %244, %245 : vector<8x128xf32>
    %247 = vector.extract_strided_slice %228 {offsets = [0, 256], sizes = [8, 128], strides = [1, 1]} : vector<8x384xf32> to vector<8x128xf32>
    %248 = vector.extract_strided_slice %230 {offsets = [0, 256], sizes = [8, 128], strides = [1, 1]} : vector<8x384xf32> to vector<8x128xf32>
    %249 = vector.broadcast %7 : vector<1x128xf32> to vector<8x128xf32>
    %250 = arith.addf %248, %249 : vector<8x128xf32>
    %251 = arith.mulf %238, %250 : vector<8x128xf32>
    %252 = arith.addf %247, %251 : vector<8x128xf32>
    %253 = math.tanh %252 : vector<8x128xf32>
    %cst_71 = arith.constant 1.000000e+00 : f32
    %254 = vector.broadcast %cst_71 : f32 to vector<8x128xf32>
    %255 = arith.subf %254, %246 : vector<8x128xf32>
    %256 = arith.mulf %255, %253 : vector<8x128xf32>
    %257 = arith.mulf %246, %222 : vector<8x128xf32>
    %258 = arith.addf %256, %257 : vector<8x128xf32>
    %259 = arith.index_cast %226 : i32 to index
    %c0_72 = arith.constant 0 : index
    %260 = vector.load %arg10[%259, %c0_72] : memref<64x128xf32, #tpu.memory_space<vmem>>, vector<8x128xf32>
    tpu.vector_store %arg10[%259, %c0_72], %258 {strides = array<i32>} : memref<64x128xf32, #tpu.memory_space<vmem>>, vector<8x128xf32>,
    %c7_i32 = arith.constant 7 : i32
    %c8_i32_73 = arith.constant 8 : i32
    %261 = arith.muli %c7_i32, %c8_i32_73 : i32
    %262 = tpu.assume_multiple %261, 8 : i32
    %263 = arith.index_cast %262 : i32 to index
    %c0_74 = arith.constant 0 : index
    %264 = vector.load %arg13[%263, %c0_74] : memref<64x384xf32, #tpu.memory_space<vmem>>, vector<8x384xf32>
    %c0_75 = arith.constant 0 : index
    %c0_76 = arith.constant 0 : index
    %265 = vector.load %arg3[%c0_75, %c0_76] : memref<128x384xf32, #tpu.memory_space<vmem>>, vector<128x384xf32>
    %cst_77 = arith.constant dense<0.000000e+00> : vector<8x384xf32>
    %266 = tpu.matmul %258, %265, %cst_77 {dimension_numbers = #tpu.dot_dimension_numbers<[1], [0], [0], [1], [0, 0, 1, 1], [], []>} : vector<8x128xf32>, vector<128x384xf32>, vector<8x384xf32> -> vector<8x384xf32>
    %267 = vector.extract_strided_slice %264 {offsets = [0, 0], sizes = [8, 128], strides = [1, 1]} : vector<8x384xf32> to vector<8x128xf32>
    %268 = vector.extract_strided_slice %266 {offsets = [0, 0], sizes = [8, 128], strides = [1, 1]} : vector<8x384xf32> to vector<8x128xf32>
    %269 = arith.addf %267, %268 : vector<8x128xf32>
    %270 = arith.negf %269 : vector<8x128xf32>
    %271 = math.exp %270 : vector<8x128xf32>
    %cst_78 = arith.constant 1.000000e+00 : f32
    %272 = vector.broadcast %cst_78 : f32 to vector<8x128xf32>
    %273 = arith.addf %272, %271 : vector<8x128xf32>
    %274 = arith.divf %272, %273 : vector<8x128xf32>
    %275 = vector.extract_strided_slice %264 {offsets = [0, 128], sizes = [8, 128], strides = [1, 1]} : vector<8x384xf32> to vector<8x128xf32>
    %276 = vector.extract_strided_slice %266 {offsets = [0, 128], sizes = [8, 128], strides = [1, 1]} : vector<8x384xf32> to vector<8x128xf32>
    %277 = arith.addf %275, %276 : vector<8x128xf32>
    %278 = arith.negf %277 : vector<8x128xf32>
    %279 = math.exp %278 : vector<8x128xf32>
    %cst_79 = arith.constant 1.000000e+00 : f32
    %280 = vector.broadcast %cst_79 : f32 to vector<8x128xf32>
    %281 = arith.addf %280, %279 : vector<8x128xf32>
    %282 = arith.divf %280, %281 : vector<8x128xf32>
    %283 = vector.extract_strided_slice %264 {offsets = [0, 256], sizes = [8, 128], strides = [1, 1]} : vector<8x384xf32> to vector<8x128xf32>
    %284 = vector.extract_strided_slice %266 {offsets = [0, 256], sizes = [8, 128], strides = [1, 1]} : vector<8x384xf32> to vector<8x128xf32>
    %285 = vector.broadcast %7 : vector<1x128xf32> to vector<8x128xf32>
    %286 = arith.addf %284, %285 : vector<8x128xf32>
    %287 = arith.mulf %274, %286 : vector<8x128xf32>
    %288 = arith.addf %283, %287 : vector<8x128xf32>
    %289 = math.tanh %288 : vector<8x128xf32>
    %cst_80 = arith.constant 1.000000e+00 : f32
    %290 = vector.broadcast %cst_80 : f32 to vector<8x128xf32>
    %291 = arith.subf %290, %282 : vector<8x128xf32>
    %292 = arith.mulf %291, %289 : vector<8x128xf32>
    %293 = arith.mulf %282, %258 : vector<8x128xf32>
    %294 = arith.addf %292, %293 : vector<8x128xf32>
    %295 = arith.index_cast %262 : i32 to index
    %c0_81 = arith.constant 0 : index
    %296 = vector.load %arg10[%295, %c0_81] : memref<64x128xf32, #tpu.memory_space<vmem>>, vector<8x128xf32>
    tpu.vector_store %arg10[%295, %c0_81], %294 {strides = array<i32>} : memref<64x128xf32, #tpu.memory_space<vmem>>, vector<8x128xf32>,
    %c8_i32_82 = arith.constant 8 : i32
    %c0_83 = arith.constant 0 : index
    %c0_84 = arith.constant 0 : index
    %297 = vector.load %arg10[%c0_83, %c0_84] : memref<64x128xf32, #tpu.memory_space<vmem>>, vector<64x128xf32>
    %c0_85 = arith.constant 0 : index
    %c0_86 = arith.constant 0 : index
    %298 = vector.load %arg6[%c0_85, %c0_86] : memref<128x128xf32, #tpu.memory_space<vmem>>, vector<128x128xf32>
    %cst_87 = arith.constant dense<0.000000e+00> : vector<64x128xf32>
    %299 = tpu.matmul %297, %298, %cst_87 {dimension_numbers = #tpu.dot_dimension_numbers<[1], [0], [0], [1], [0, 0, 1, 1], [], []>} : vector<64x128xf32>, vector<128x128xf32>, vector<64x128xf32> -> vector<64x128xf32>
    %c0_88 = arith.constant 0 : index
    %c0_89 = arith.constant 0 : index
    %300 = vector.load %arg7[%c0_88, %c0_89] : memref<1x128xf32, #tpu.memory_space<vmem>>, vector<1x128xf32>
    %301 = vector.broadcast %300 : vector<1x128xf32> to vector<64x128xf32>
    %302 = arith.addf %299, %301 : vector<64x128xf32>
    %cst_90 = arith.constant 0.000000e+00 : f32
    %303 = vector.broadcast %cst_90 : f32 to vector<64x128xf32>
    %304 = arith.maximumf %302, %303 : vector<64x128xf32>
    %c0_91 = arith.constant 0 : index
    %c0_92 = arith.constant 0 : index
    %305 = vector.load %arg11[%c0_91, %c0_92] : memref<64x128xf32, #tpu.memory_space<vmem>>, vector<64x128xf32>
    tpu.vector_store %arg11[%c0_91, %c0_92], %304 {strides = array<i32>} : memref<64x128xf32, #tpu.memory_space<vmem>>, vector<64x128xf32>,
    %c0_93 = arith.constant 0 : index
    %c0_94 = arith.constant 0 : index
    %306 = vector.load %arg8[%c0_93, %c0_94] : memref<128x128xf32, #tpu.memory_space<vmem>>, vector<128x128xf32>
    %cst_95 = arith.constant dense<0.000000e+00> : vector<64x128xf32>
    %307 = tpu.matmul %304, %306, %cst_95 {dimension_numbers = #tpu.dot_dimension_numbers<[1], [0], [0], [1], [0, 0, 1, 1], [], []>} : vector<64x128xf32>, vector<128x128xf32>, vector<64x128xf32> -> vector<64x128xf32>
    %c0_96 = arith.constant 0 : index
    %c0_97 = arith.constant 0 : index
    %308 = vector.load %arg9[%c0_96, %c0_97] : memref<1x128xf32, #tpu.memory_space<vmem>>, vector<1x128xf32>
    %309 = vector.broadcast %308 : vector<1x128xf32> to vector<64x128xf32>
    %310 = arith.addf %307, %309 : vector<64x128xf32>
    %c0_98 = arith.constant 0 : index
    %c0_99 = arith.constant 0 : index
    %311 = vector.load %arg12[%c0_98, %c0_99] : memref<64x128xf32, #tpu.memory_space<vmem>>, vector<64x128xf32>
    tpu.vector_store %arg12[%c0_98, %c0_99], %310 {strides = array<i32>} : memref<64x128xf32, #tpu.memory_space<vmem>>, vector<64x128xf32>,
    return
  }
}

</mosaic_0001>

<llo_original>
// kernel: tpu_custom_call.1
$region0: #{tpu_custom_call.1}
  #allocation0 [shape = 'u32[]', space=smem, size = 0x4, offset = 0x4, fixed_abs, tag = 'smem constant byte address 0x4 - core index']
  #allocation1 [shape = 'u32[144,128]{1,0:T(1,128)}', space=vmem, size = 0x12000, scoped, tag = 'internal scratch']
  #allocation2 [shape = 'f32[64,384]{1,0:T(8,128)}', space=vmem, size = 0x18000, scoped, tag = 'scratch operand']
  %s0 = inlined_call_operand.vmem [shape: f32[8,128], index: 0, kind: input, shape index: {}]
  %s1 = inlined_call_operand.vmem [shape: f32[64,4], index: 1, kind: input, shape index: {}]
  %s2 = inlined_call_operand.vmem [shape: f32[4,384], index: 2, kind: input, shape index: {}]
  %s3 = inlined_call_operand.hbm [shape: f32[128,384], index: 3, kind: input, shape index: {}]
  %s4 = inlined_call_operand.vmem [shape: f32[1,384], index: 4, kind: input, shape index: {}]
  %s5 = inlined_call_operand.vmem [shape: f32[1,128], index: 5, kind: input, shape index: {}]
  %s6 = inlined_call_operand.hbm [shape: f32[128,128], index: 6, kind: input, shape index: {}]
  %s7 = inlined_call_operand.vmem [shape: f32[1,128], index: 7, kind: input, shape index: {}]
  %s8 = inlined_call_operand.hbm [shape: f32[128,128], index: 8, kind: input, shape index: {}]
  %s9 = inlined_call_operand.vmem [shape: f32[1,128], index: 9, kind: input, shape index: {}]
  %s10 = inlined_call_operand.hbm [shape: f32[64,128], index: 10, kind: output, shape index: {0}]
  %s11 = inlined_call_operand.hbm [shape: f32[64,128], index: 11, kind: output, shape index: {1}]
  %s12 = inlined_call_operand.hbm [shape: f32[64,128], index: 12, kind: output, shape index: {2}]
  %13 = xla_tuple %s10, %s11, %s12
  %s14 = sld [smem:[#allocation0]]
  $region78: #{tpu_custom_call.1} parent=0
    _
  %s16 = ssub.s32 1, %s14
  %s17 = scalar_select 0, %s16, %s14
  $region1: #{tpu_custom_call.1} parent=0
    #allocation3 [shape = 'u8[196608]{0}', space=vmem, size = 0x30000, scoped, tag = 'input window, operand 3, single buffered']
    #allocation4 [shape = 's32[1]{0}', space=sflag, size = 0x4, scoped, tag = 'scoped memory for tpu_custom_call.1']
    #allocation5 [shape = 's32[1]{0}', space=sflag, size = 0x4, scoped, tag = 'scoped memory for tpu_custom_call.1']
    #allocation6 [shape = 'u8[65536]{0}', space=vmem, size = 0x10000, scoped, tag = 'input window, operand 6, single buffered']
    #allocation7 [shape = 's32[1]{0}', space=sflag, size = 0x4, scoped, tag = 'scoped memory for tpu_custom_call.1']
    #allocation8 [shape = 'u8[65536]{0}', space=vmem, size = 0x10000, scoped, tag = 'input window, operand 8, single buffered']
    #allocation9 [shape = 'u8[32768]{0}', space=vmem, size = 0x8000, scoped, tag = 'output window, operand 0, single buffered']
    #allocation10 [shape = 'u8[32768]{0}', space=vmem, size = 0x8000, scoped, tag = 'output window, operand 1, single buffered']
    #allocation11 [shape = 's32[1]{0}', space=sflag, size = 0x4, scoped, tag = 'scoped memory for tpu_custom_call.1']
    #allocation12 [shape = 'u8[32768]{0}', space=vmem, size = 0x8000, scoped, tag = 'output window, operand 2, single buffered']
    %18 = vsyncpa [#allocation4], 0
    %19 = vsyncpa [#allocation7], 0
    %20 = vsyncpa [#allocation5], 0
    %21 = vsyncpa [#allocation11], 0
    // Predicated region
    $region2: #{tpu_custom_call.1} parent=1 // pred_check
      _
    $region3: #{tpu_custom_call.1} parent=1 // pred_check_branch
      %23 = sbr.rel (0) target = $region5
    $region4: #{tpu_custom_call.1} parent=1 // pred_region
      _
    $region5: #{tpu_custom_call.1} parent=1 // pred_fallthru
      _
    // Predicated region
    $region6: #{tpu_custom_call.1} parent=1 // pred_check
      _
    $region7: #{tpu_custom_call.1} parent=1 // pred_check_branch
      %25 = sbr.rel (0) target = $region9
    $region8: #{tpu_custom_call.1} parent=1 // pred_region
      _
    $region9: #{tpu_custom_call.1} parent=1 // pred_fallthru
      _
    // Predicated region
    $region10: #{tpu_custom_call.1} parent=1 // pred_check
      _
    $region11: #{tpu_custom_call.1} parent=1 // pred_check_branch
      %27 = sbr.rel (0) target = $region13
    $region12: #{tpu_custom_call.1} parent=1 // pred_region
      _
    $region13: #{tpu_custom_call.1} parent=1 // pred_fallthru
      _
    // Predicated region
    $region14: #{tpu_custom_call.1} parent=1 // pred_check
      _
    $region15: #{tpu_custom_call.1} parent=1 // pred_check_branch
      %29 = sbr.rel (0) target = $region17
    $region16: #{tpu_custom_call.1} parent=1 // pred_region
      %s31 = ssub.s32 6144, 6144
      %32 = vsyncadd [#allocation4], %s31
      %s33 = sshll.u32 [#allocation3], 4
      %s34 = int_to_ptr.vmem [resolvable:$true] %s33
      %39 = dma.hbm_to_vmem [thread:$0]  %s3, 6144, %s34, [#allocation4], 384, 384, 24
    $region17: #{tpu_custom_call.1} parent=1 // pred_fallthru
      _
    // Predicated region
    $region18: #{tpu_custom_call.1} parent=1 // pred_check
      _
    $region19: #{tpu_custom_call.1} parent=1 // pred_check_branch
      %41 = sbr.rel (0) target = $region21
    $region20: #{tpu_custom_call.1} parent=1 // pred_region
      _
    $region21: #{tpu_custom_call.1} parent=1 // pred_fallthru
      _
    // Predicated region
    $region22: #{tpu_custom_call.1} parent=1 // pred_check
      _
    $region23: #{tpu_custom_call.1} parent=1 // pred_check_branch
      %43 = sbr.rel (0) target = $region25
    $region24: #{tpu_custom_call.1} parent=1 // pred_region
      _
    $region25: #{tpu_custom_call.1} parent=1 // pred_fallthru
      _
    // Predicated region
    $region26: #{tpu_custom_call.1} parent=1 // pred_check
      _
    $region27: #{tpu_custom_call.1} parent=1 // pred_check_branch
      %45 = sbr.rel (0) target = $region29
    $region28: #{tpu_custom_call.1} parent=1 // pred_region
      %s47 = ssub.s32 2048, 2048
      %48 = vsyncadd [#allocation7], %s47
      %s49 = sshll.u32 [#allocation6], 4
      %s50 = int_to_ptr.vmem [resolvable:$true] %s49
      %55 = dma.hbm_to_vmem [thread:$0]  %s6, 2048, %s50, [#allocation7], 128, 128, 8
    $region29: #{tpu_custom_call.1} parent=1 // pred_fallthru
      _
    // Predicated region
    $region30: #{tpu_custom_call.1} parent=1 // pred_check
      _
    $region31: #{tpu_custom_call.1} parent=1 // pred_check_branch
      %57 = sbr.rel (0) target = $region33
    $region32: #{tpu_custom_call.1} parent=1 // pred_region
      _
    $region33: #{tpu_custom_call.1} parent=1 // pred_fallthru
      _
    // Predicated region
    $region34: #{tpu_custom_call.1} parent=1 // pred_check
      _
    $region35: #{tpu_custom_call.1} parent=1 // pred_check_branch
      %59 = sbr.rel (0) target = $region37
    $region36: #{tpu_custom_call.1} parent=1 // pred_region
      %s61 = ssub.s32 2048, 2048
      %62 = vsyncadd [#allocation7], %s61
      %s63 = sshll.u32 [#allocation8], 4
      %s64 = int_to_ptr.vmem [resolvable:$true] %s63
      %69 = dma.hbm_to_vmem [thread:$0]  %s8, 2048, %s64, [#allocation7], 128, 128, 8
    $region37: #{tpu_custom_call.1} parent=1 // pred_fallthru
      _
    // Predicated region
    $region38: #{tpu_custom_call.1} parent=1 // pred_check
      _
    $region39: #{tpu_custom_call.1} parent=1 // pred_check_branch
      %71 = sbr.rel (0) target = $region41
    $region40: #{tpu_custom_call.1} parent=1 // pred_region
      _
    $region41: #{tpu_custom_call.1} parent=1 // pred_fallthru
      _
    // Predicated region
    $region42: #{tpu_custom_call.1} parent=1 // pred_check
      _
    $region43: #{tpu_custom_call.1} parent=1 // pred_check_branch
      %73 = sbr.rel (0) target = $region45
    $region44: #{tpu_custom_call.1} parent=1 // pred_region
      %74 = dma.done [#allocation4], 6144
    $region45: #{tpu_custom_call.1} parent=1 // pred_fallthru
      _
    // Predicated region
    $region46: #{tpu_custom_call.1} parent=1 // pred_check
      _
    $region47: #{tpu_custom_call.1} parent=1 // pred_check_branch
      %76 = sbr.rel (0) target = $region49
    $region48: #{tpu_custom_call.1} parent=1 // pred_region
      %77 = dma.done [#allocation7], 2048
    $region49: #{tpu_custom_call.1} parent=1 // pred_fallthru
      _
    // Predicated region
    $region50: #{tpu_custom_call.1} parent=1 // pred_check
      _
    $region51: #{tpu_custom_call.1} parent=1 // pred_check_branch
      %79 = sbr.rel (0) target = $region53
    $region52: #{tpu_custom_call.1} parent=1 // pred_region
      %80 = dma.done [#allocation7], 2048
    $region53: #{tpu_custom_call.1} parent=1 // pred_fallthru
      _
    %v81 = vld [vmem:[%s1] sm:$0xff]
    %v82 = vld [vmem:[%s1 + $0x8] sm:$0xff]
    %v83 = vld [vmem:[%s1 + $0x10] sm:$0xff]
    %v84 = vld [vmem:[%s1 + $0x18] sm:$0xff]
    %v85 = vld [vmem:[%s1 + $0x20] sm:$0xff]
    %v86 = vld [vmem:[%s1 + $0x28] sm:$0xff]
    %v87 = vld [vmem:[%s1 + $0x30] sm:$0xff]
    %v88 = vld [vmem:[%s1 + $0x38] sm:$0xff]
    %v89 = vld [vmem:[%s2] sm:$0xff]
    %v90 = vld [vmem:[%s2 + $0x8] sm:$0xf]
    %v91 = vld [vmem:[%s4] sm:$0x7]
    %v93 = vlaneseq
    %v94 = vshrl.u32 %v93, 7
    %v95 = vsub.s32 0, %v94
    %v96 = vrot.slane %v91, %v95
    %v97 = vlaneseq
    %v98 = vshrl.u32 %v97, 7
    %v99 = vsub.s32 1, %v98
    %v100 = vrot.slane %v91, %v99
    %v101 = vlaneseq
    %v102 = vshrl.u32 %v101, 7
    %v103 = vsub.s32 2, %v102
    %v104 = vrot.slane %v91, %v103
    %v110 = vcombine.high %v89, %v89
    %vm111 = vcmask 31744
    %v113 = vsel %vm111, %v81, 0
    %v116 = vsel %vm111, %v82, 0
    %v119 = vsel %vm111, %v83, 0
    %v122 = vsel %vm111, %v84, 0
    %v125 = vsel %vm111, %v85, 0
    %v128 = vsel %vm111, %v86, 0
    %v131 = vsel %vm111, %v87, 0
    %v134 = vsel %vm111, %v88, 0
    %vm136 = vcmask 1043456
    %v137 = vsel %vm136, %v89, 0
    %v139 = vsel %vm136, %v110, 0
    %v141 = vsel %vm136, %v90, 0
    %143 = vmatprep.subr.mxu0 %v139
    %144 = vmatpush1.msra.mxu0 %v137
    %145 = vmatprep.subr.mxu0 0.0
    %146 = vmatpush1.msra.mxu0 0.0
    %147 = vmatprep.subr.mxu0 0.0
    %148 = vmatpush1.msra.mxu0 0.0
    %149 = vmatprep.subr.mxu0 0.0
    %150 = vmatpush1.msra.mxu0 0.0
    %151 = vmatprep.subr.mxu0 0.0
    %152 = vmatpush1.msra.mxu0 0.0
    %153 = vmatprep.subr.mxu0 0.0
    %154 = vmatpush1.msra.mxu0 0.0
    %155 = vmatprep.subr.mxu0 0.0
    %156 = vmatpush1.msra.mxu0 0.0
    %157 = vmatprep.subr.mxu0 0.0
    %158 = vmatpush1.msra.mxu0 0.0
    %159 = vmatprep.subr.mxu0 0.0
    %160 = vmatpush1.msra.mxu0 0.0
    %161 = vmatprep.subr.mxu0 0.0
    %162 = vmatpush1.msra.mxu0 0.0
    %163 = vmatprep.subr.mxu0 0.0
    %164 = vmatpush1.msra.mxu0 0.0
    %165 = vmatprep.subr.mxu0 0.0
    %166 = vmatpush1.msra.mxu0 0.0
    %167 = vmatprep.subr.mxu0 0.0
    %168 = vmatpush1.msra.mxu0 0.0
    %169 = vmatprep.subr.mxu0 0.0
    %170 = vmatpush1.msra.mxu0 0.0
    %171 = vmatprep.subr.mxu0 0.0
    %172 = vmatpush1.msra.mxu0 0.0
    %173 = vmatprep.subr.mxu0 0.0
    %174 = vmatpush1.msra.mxu0 0.0
    %175 = vmatprep.subr.mxu0 0.0
    %176 = vmatpush1.msra.mxu0 0.0
    %177 = vmatprep.subr.mxu0 0.0
    %178 = vmatpush1.msra.mxu0 0.0
    %179 = vmatprep.subr.mxu0 0.0
    %180 = vmatpush1.msra.mxu0 0.0
    %181 = vmatprep.subr.mxu0 0.0
    %182 = vmatpush1.msra.mxu0 0.0
    %183 = vmatprep.subr.mxu0 0.0
    %184 = vmatpush1.msra.mxu0 0.0
    %185 = vmatprep.subr.mxu0 0.0
    %186 = vmatpush1.msra.mxu0 0.0
    %187 = vmatprep.subr.mxu0 0.0
    %188 = vmatpush1.msra.mxu0 0.0
    %189 = vmatprep.subr.mxu0 0.0
    %190 = vmatpush1.msra.mxu0 0.0
    %191 = vmatprep.subr.mxu0 0.0
    %192 = vmatpush1.msra.mxu0 0.0
    %193 = vmatprep.subr.mxu0 0.0
    %194 = vmatpush1.msra.mxu0 0.0
    %195 = vmatprep.subr.mxu0 0.0
    %196 = vmatpush1.msra.mxu0 0.0
    %197 = vmatprep.subr.mxu0 0.0
    %198 = vmatpush1.msra.mxu0 0.0
    %199 = vmatprep.subr.mxu0 0.0
    %200 = vmatpush1.msra.mxu0 0.0
    %201 = vmatprep.subr.mxu0 0.0
    %202 = vmatpush1.msra.mxu0 0.0
    %203 = vmatprep.subr.mxu0 0.0
    %204 = vmatpush1.msra.mxu0 0.0
    %205 = vmatprep.subr.mxu0 0.0
    %206 = vmatpush1.msra.mxu0 0.0
    %207 = vmatprep.mubr.f32.mxu0 0.0
    %208 = vmatmul.mubr.f32.gmra.mrb[0].mxu0 %v113
    %v209 = vpop.f32.mrb[0].mxu0
    %v210 = vadd.f32 %v96, %v209
    %v211 = vpop.f32.mrb[0].mxu0
    %v212 = vadd.f32 %v100, %v211
    %213 = vmatprep.mubr.f32.mxu0 0.0
    %214 = vmatmul.mubr.f32.gmra.mrb[0].mxu0 %v116
    %v215 = vpop.f32.mrb[0].mxu0
    %v216 = vadd.f32 %v96, %v215
    %v217 = vpop.f32.mrb[0].mxu0
    %v218 = vadd.f32 %v100, %v217
    %219 = vmatprep.mubr.f32.mxu0 0.0
    %220 = vmatmul.mubr.f32.gmra.mrb[0].mxu0 %v119
    %v221 = vpop.f32.mrb[0].mxu0
    %v222 = vadd.f32 %v96, %v221
    %v223 = vpop.f32.mrb[0].mxu0
    %v224 = vadd.f32 %v100, %v223
    %225 = vmatprep.mubr.f32.mxu0 0.0
    %226 = vmatmul.mubr.f32.gmra.mrb[0].mxu0 %v122
    %v227 = vpop.f32.mrb[0].mxu0
    %v228 = vadd.f32 %v96, %v227
    %v229 = vpop.f32.mrb[0].mxu0
    %v230 = vadd.f32 %v100, %v229
    %231 = vmatprep.mubr.f32.mxu0 0.0
    %232 = vmatmul.mubr.f32.gmra.mrb[0].mxu0 %v125
    %v233 = vpop.f32.mrb[0].mxu0
    %v234 = vadd.f32 %v96, %v233
    %v235 = vpop.f32.mrb[0].mxu0
    %v236 = vadd.f32 %v100, %v235
    %237 = vmatprep.mubr.f32.mxu0 0.0
    %238 = vmatmul.mubr.f32.gmra.mrb[0].mxu0 %v128
    %v239 = vpop.f32.mrb[0].mxu0
    %v240 = vadd.f32 %v96, %v239
    %v241 = vpop.f32.mrb[0].mxu0
    %v242 = vadd.f32 %v100, %v241
    %243 = vmatprep.mubr.f32.mxu0 0.0
    %244 = vmatmul.mubr.f32.gmra.mrb[0].mxu0 %v131
    %v245 = vpop.f32.mrb[0].mxu0
    %v246 = vadd.f32 %v96, %v245
    %v247 = vpop.f32.mrb[0].mxu0
    %v248 = vadd.f32 %v100, %v247
    %249 = vmatprep.mubr.f32.mxu0 0.0
    %250 = vmatmul.mubr.f32.gmra.mrb[0].mxu0 %v134
    %v251 = vpop.f32.mrb[0].mxu0
    %v252 = vadd.f32 %v96, %v251
    %v253 = vpop.f32.mrb[0].mxu0
    %v254 = vadd.f32 %v100, %v253
    %255 = vdwg.mxu0
    %256 = vmatprep.subr.mxu0 0.0
    %257 = vmatpush1.msra.mxu0 %v141
    %258 = vmatprep.subr.mxu0 0.0
    %259 = vmatpush1.msra.mxu0 0.0
    %260 = vmatprep.subr.mxu0 0.0
    %261 = vmatpush1.msra.mxu0 0.0
    %262 = vmatprep.subr.mxu0 0.0
    %263 = vmatpush1.msra.mxu0 0.0
    %264 = vmatprep.subr.mxu0 0.0
    %265 = vmatpush1.msra.mxu0 0.0
    %266 = vmatprep.subr.mxu0 0.0
    %267 = vmatpush1.msra.mxu0 0.0
    %268 = vmatprep.subr.mxu0 0.0
    %269 = vmatpush1.msra.mxu0 0.0
    %270 = vmatprep.subr.mxu0 0.0
    %271 = vmatpush1.msra.mxu0 0.0
    %272 = vmatprep.subr.mxu0 0.0
    %273 = vmatpush1.msra.mxu0 0.0
    %274 = vmatprep.subr.mxu0 0.0
    %275 = vmatpush1.msra.mxu0 0.0
    %276 = vmatprep.subr.mxu0 0.0
    %277 = vmatpush1.msra.mxu0 0.0
    %278 = vmatprep.subr.mxu0 0.0
    %279 = vmatpush1.msra.mxu0 0.0
    %280 = vmatprep.subr.mxu0 0.0
    %281 = vmatpush1.msra.mxu0 0.0
    %282 = vmatprep.subr.mxu0 0.0
    %283 = vmatpush1.msra.mxu0 0.0
    %284 = vmatprep.subr.mxu0 0.0
    %285 = vmatpush1.msra.mxu0 0.0
    %286 = vmatprep.subr.mxu0 0.0
    %287 = vmatpush1.msra.mxu0 0.0
    %288 = vmatprep.subr.mxu0 0.0
    %289 = vmatpush1.msra.mxu0 0.0
    %290 = vmatprep.subr.mxu0 0.0
    %291 = vmatpush1.msra.mxu0 0.0
    %292 = vmatprep.subr.mxu0 0.0
    %293 = vmatpush1.msra.mxu0 0.0
    %294 = vmatprep.subr.mxu0 0.0
    %295 = vmatpush1.msra.mxu0 0.0
    %296 = vmatprep.subr.mxu0 0.0
    %297 = vmatpush1.msra.mxu0 0.0
    %298 = vmatprep.subr.mxu0 0.0
    %299 = vmatpush1.msra.mxu0 0.0
    %300 = vmatprep.subr.mxu0 0.0
    %301 = vmatpush1.msra.mxu0 0.0
    %302 = vmatprep.subr.mxu0 0.0
    %303 = vmatpush1.msra.mxu0 0.0
    %304 = vmatprep.subr.mxu0 0.0
    %305 = vmatpush1.msra.mxu0 0.0
    %306 = vmatprep.subr.mxu0 0.0
    %307 = vmatpush1.msra.mxu0 0.0
    %308 = vmatprep.subr.mxu0 0.0
    %309 = vmatpush1.msra.mxu0 0.0
    %310 = vmatprep.subr.mxu0 0.0
    %311 = vmatpush1.msra.mxu0 0.0
    %312 = vmatprep.subr.mxu0 0.0
    %313 = vmatpush1.msra.mxu0 0.0
    %314 = vmatprep.subr.mxu0 0.0
    %315 = vmatpush1.msra.mxu0 0.0
    %316 = vmatprep.subr.mxu0 0.0
    %317 = vmatpush1.msra.mxu0 0.0
    %318 = vmatprep.subr.mxu0 0.0
    %319 = vmatpush1.msra.mxu0 0.0
    %320 = vmatprep.mubr.f32.mxu0 0.0
    %321 = vmatmul.mubr.f32.gmra.mrb[0].mxu0 %v113
    %v322 = vpop.f32.mrb[0].mxu0
    %v323 = vadd.f32 %v104, %v322
    %v324 = vpop.f32.mrb[0].mxu0
    %325 = vmatprep.mubr.f32.mxu0 0.0
    %326 = vmatmul.mubr.f32.gmra.mrb[0].mxu0 %v116
    %v327 = vpop.f32.mrb[0].mxu0
    %v328 = vadd.f32 %v104, %v327
    %v329 = vpop.f32.mrb[0].mxu0
    %330 = vmatprep.mubr.f32.mxu0 0.0
    %331 = vmatmul.mubr.f32.gmra.mrb[0].mxu0 %v119
    %v332 = vpop.f32.mrb[0].mxu0
    %v333 = vadd.f32 %v104, %v332
    %v334 = vpop.f32.mrb[0].mxu0
    %335 = vmatprep.mubr.f32.mxu0 0.0
    %336 = vmatmul.mubr.f32.gmra.mrb[0].mxu0 %v122
    %v337 = vpop.f32.mrb[0].mxu0
    %v338 = vadd.f32 %v104, %v337
    %v339 = vpop.f32.mrb[0].mxu0
    %340 = vmatprep.mubr.f32.mxu0 0.0
    %341 = vmatmul.mubr.f32.gmra.mrb[0].mxu0 %v125
    %v342 = vpop.f32.mrb[0].mxu0
    %v343 = vadd.f32 %v104, %v342
    %v344 = vpop.f32.mrb[0].mxu0
    %345 = vmatprep.mubr.f32.mxu0 0.0
    %346 = vmatmul.mubr.f32.gmra.mrb[0].mxu0 %v128
    %v347 = vpop.f32.mrb[0].mxu0
    %v348 = vadd.f32 %v104, %v347
    %v349 = vpop.f32.mrb[0].mxu0
    %350 = vmatprep.mubr.f32.mxu0 0.0
    %351 = vmatmul.mubr.f32.gmra.mrb[0].mxu0 %v131
    %v352 = vpop.f32.mrb[0].mxu0
    %v353 = vadd.f32 %v104, %v352
    %v354 = vpop.f32.mrb[0].mxu0
    %355 = vmatprep.mubr.f32.mxu0 0.0
    %356 = vmatmul.mubr.f32.gmra.mrb[0].mxu0 %v134
    %v357 = vpop.f32.mrb[0].mxu0
    %v358 = vadd.f32 %v104, %v357
    %v359 = vpop.f32.mrb[0].mxu0
    %360 = vdwg.mxu0
    %361 = vst [vmem:[#allocation2] sm:$0xff] %v210
    %362 = vst [vmem:[#allocation2 + $0x8] sm:$0xff] %v212
    %363 = vst [vmem:[#allocation2 + $0x10] sm:$0xff] %v323
    %364 = vst [vmem:[#allocation2 + $0x18] sm:$0xff] %v216
    %365 = vst [vmem:[#allocation2 + $0x20] sm:$0xff] %v218
    %366 = vst [vmem:[#allocation2 + $0x28] sm:$0xff] %v328
    %367 = vst [vmem:[#allocation2 + $0x30] sm:$0xff] %v222
    %368 = vst [vmem:[#allocation2 + $0x38] sm:$0xff] %v224
    %369 = vst [vmem:[#allocation2 + $0x40] sm:$0xff] %v333
    %370 = vst [vmem:[#allocation2 + $0x48] sm:$0xff] %v228
    %371 = vst [vmem:[#allocation2 + $0x50] sm:$0xff] %v230
    %372 = vst [vmem:[#allocation2 + $0x58] sm:$0xff] %v338
    %373 = vst [vmem:[#allocation2 + $0x60] sm:$0xff] %v234
    %374 = vst [vmem:[#allocation2 + $0x68] sm:$0xff] %v236
    %375 = vst [vmem:[#allocation2 + $0x70] sm:$0xff] %v343
    %376 = vst [vmem:[#allocation2 + $0x78] sm:$0xff] %v240
    %377 = vst [vmem:[#allocation2 + $0x80] sm:$0xff] %v242
    %378 = vst [vmem:[#allocation2 + $0x88] sm:$0xff] %v348
    %379 = vst [vmem:[#allocation2 + $0x90] sm:$0xff] %v246
    %380 = vst [vmem:[#allocation2 + $0x98] sm:$0xff] %v248
    %381 = vst [vmem:[#allocation2 + $0xa0] sm:$0xff] %v353
    %382 = vst [vmem:[#allocation2 + $0xa8] sm:$0xff] %v252
    %383 = vst [vmem:[#allocation2 + $0xb0] sm:$0xff] %v254
    %384 = vst [vmem:[#allocation2 + $0xb8] sm:$0xff] %v358
    %v385 = vld [vmem:[%s5] sm:$0x1]
    %v386 = vld [vmem:[%s0] sm:$0xff]
    %s387 = smul.u32 0, 3
    %s388 = smul.addr %s387, 8
    %s389 = scalar_lea.vmem [#allocation2], %s388
    %v390 = vld [vmem:[%s389] sm:$0xff]
    %v391 = vld [vmem:[%s389 + $0x8] sm:$0xff]
    %v392 = vld [vmem:[%s389 + $0x10] sm:$0xff]
    %v393 = vld [vmem:[#allocation3] sm:$0xff]
    %v394 = vld [vmem:[#allocation3 + $0x8] sm:$0xff]
    %v395 = vld [vmem:[#allocation3 + $0x10] sm:$0xff]
    %v396 = vld [vmem:[#allocation3 + $0x18] sm:$0xff]
    %v397 = vld [vmem:[#allocation3 + $0x20] sm:$0xff]
    %v398 = vld [vmem:[#allocation3 + $0x28] sm:$0xff]
    %v399 = vld [vmem:[#allocation3 + $0x30] sm:$0xff]
    %v400 = vld [vmem:[#allocation3 + $0x38] sm:$0xff]
    %v401 = vld [vmem:[#allocation3 + $0x40] sm:$0xff]
    %v402 = vld [vmem:[#allocation3 + $0x48] sm:$0xff]
    %v403 = vld [vmem:[#allocation3 + $0x50] sm:$0xff]
    %v404 = vld [vmem:[#allocation3 + $0x58] sm:$0xff]
    %v405 = vld [vmem:[#allocation3 + $0x60] sm:$0xff]
    %v406 = vld [vmem:[#allocation3 + $0x68] sm:$0xff]
    %v407 = vld [vmem:[#allocation3 + $0x70] sm:$0xff]
    %v408 = vld [vmem:[#allocation3 + $0x78] sm:$0xff]
    %v409 = vld [vmem:[#allocation3 + $0x80] sm:$0xff]
    %v410 = vld [vmem:[#allocation3 + $0x88] sm:$0xff]
    %v411 = vld [vmem:[#allocation3 + $0x90] sm:$0xff]
    %v412 = vld [vmem:[#allocation3 + $0x98] sm:$0xff]
    %v413 = vld [vmem:[#allocation3 + $0xa0] sm:$0xff]
    %v414 = vld [vmem:[#allocation3 + $0xa8] sm:$0xff]
    %v415 = vld [vmem:[#allocation3 + $0xb0] sm:$0xff]
    %v416 = vld [vmem:[#allocation3 + $0xb8] sm:$0xff]
    %v417 = vld [vmem:[#allocation3 + $0xc0] sm:$0xff]
    %v418 = vld [vmem:[#allocation3 + $0xc8] sm:$0xff]
    %v419 = vld [vmem:[#allocation3 + $0xd0] sm:$0xff]
    %v420 = vld [vmem:[#allocation3 + $0xd8] sm:$0xff]
    %v421 = vld [vmem:[#allocation3 + $0xe0] sm:$0xff]
    %v422 = vld [vmem:[#allocation3 + $0xe8] sm:$0xff]
    %v423 = vld [vmem:[#allocation3 + $0xf0] sm:$0xff]
    %v424 = vld [vmem:[#allocation3 + $0xf8] sm:$0xff]
    %v425 = vld [vmem:[#allocation3 + $0x100] sm:$0xff]
    %v426 = vld [vmem:[#allocation3 + $0x108] sm:$0xff]
    %v427 = vld [vmem:[#allocation3 + $0x110] sm:$0xff]
    %v428 = vld [vmem:[#allocation3 + $0x118] sm:$0xff]
    %v429 = vld [vmem:[#allocation3 + $0x120] sm:$0xff]
    %v430 = vld [vmem:[#allocation3 + $0x128] sm:$0xff]
    %v431 = vld [vmem:[#allocation3 + $0x130] sm:$0xff]
    %v432 = vld [vmem:[#allocation3 + $0x138] sm:$0xff]
    %v433 = vld [vmem:[#allocation3 + $0x140] sm:$0xff]
    %v434 = vld [vmem:[#allocation3 + $0x148] sm:$0xff]
    %v435 = vld [vmem:[#allocation3 + $0x150] sm:$0xff]
    %v436 = vld [vmem:[#allocation3 + $0x158] sm:$0xff]
    %v437 = vld [vmem:[#allocation3 + $0x160] sm:$0xff]
    %v438 = vld [vmem:[#allocation3 + $0x168] sm:$0xff]
    %v439 = vld [vmem:[#allocation3 + $0x170] sm:$0xff]
    %v440 = vld [vmem:[#allocation3 + $0x178] sm:$0xff]
    %441 = vmatprep.subr.mxu0 %v394
    %442 = vmatpush1.msra.mxu0 %v393
    %443 = vmatprep.subr.mxu0 %v397
    %444 = vmatpush1.msra.mxu0 %v396
    %445 = vmatprep.subr.mxu0 %v400
    %446 = vmatpush1.msra.mxu0 %v399
    %447 = vmatprep.subr.mxu0 %v403
    %448 = vmatpush1.msra.mxu0 %v402
    %449 = vmatprep.subr.mxu0 %v406
    %450 = vmatpush1.msra.mxu0 %v405
    %451 = vmatprep.subr.mxu0 %v409
    %452 = vmatpush1.msra.mxu0 %v408
    %453 = vmatprep.subr.mxu0 %v412
    %454 = vmatpush1.msra.mxu0 %v411
    %455 = vmatprep.subr.mxu0 %v415
    %456 = vmatpush1.msra.mxu0 %v414
    %457 = vmatprep.subr.mxu0 %v418
    %458 = vmatpush1.msra.mxu0 %v417
    %459 = vmatprep.subr.mxu0 %v421
    %460 = vmatpush1.msra.mxu0 %v420
    %461 = vmatprep.subr.mxu0 %v424
    %462 = vmatpush1.msra.mxu0 %v423
    %463 = vmatprep.subr.mxu0 %v427
    %464 = vmatpush1.msra.mxu0 %v426
    %465 = vmatprep.subr.mxu0 %v430
    %466 = vmatpush1.msra.mxu0 %v429
    %467 = vmatprep.subr.mxu0 %v433
    %468 = vmatpush1.msra.mxu0 %v432
    %469 = vmatprep.subr.mxu0 %v436
    %470 = vmatpush1.msra.mxu0 %v435
    %471 = vmatprep.subr.mxu0 %v439
    %472 = vmatpush1.msra.mxu0 %v438
    %473 = vmatprep.subr.mxu0 0.0
    %474 = vmatpush1.msra.mxu0 0.0
    %475 = vmatprep.subr.mxu0 0.0
    %476 = vmatpush1.msra.mxu0 0.0
    %477 = vmatprep.subr.mxu0 0.0
    %478 = vmatpush1.msra.mxu0 0.0
    %479 = vmatprep.subr.mxu0 0.0
    %480 = vmatpush1.msra.mxu0 0.0
    %481 = vmatprep.subr.mxu0 0.0
    %482 = vmatpush1.msra.mxu0 0.0
    %483 = vmatprep.subr.mxu0 0.0
    %484 = vmatpush1.msra.mxu0 0.0
    %485 = vmatprep.subr.mxu0 0.0
    %486 = vmatpush1.msra.mxu0 0.0
    %487 = vmatprep.subr.mxu0 0.0
    %488 = vmatpush1.msra.mxu0 0.0
    %489 = vmatprep.subr.mxu0 0.0
    %490 = vmatpush1.msra.mxu0 0.0
    %491 = vmatprep.subr.mxu0 0.0
    %492 = vmatpush1.msra.mxu0 0.0
    %493 = vmatprep.subr.mxu0 0.0
    %494 = vmatpush1.msra.mxu0 0.0
    %495 = vmatprep.subr.mxu0 0.0
    %496 = vmatpush1.msra.mxu0 0.0
    %497 = vmatprep.subr.mxu0 0.0
    %498 = vmatpush1.msra.mxu0 0.0
    %499 = vmatprep.subr.mxu0 0.0
    %500 = vmatpush1.msra.mxu0 0.0
    %501 = vmatprep.subr.mxu0 0.0
    %502 = vmatpush1.msra.mxu0 0.0
    %503 = vmatprep.subr.mxu0 0.0
    %504 = vmatpush1.msra.mxu0 0.0
    %505 = vmatprep.mubr.f32.mxu0 0.0
    %506 = vmatmul.mubr.f32.gmra.mrb[0].mxu0 %v386
    %v507 = vpop.f32.mrb[0].mxu0
    %v508 = vadd.f32 0.0, %v507
    %v509 = vpop.f32.mrb[0].mxu0
    %v510 = vadd.f32 0.0, %v509
    %511 = vdwg.mxu0
    %512 = vmatprep.subr.mxu0 0.0
    %513 = vmatpush1.msra.mxu0 %v395
    %514 = vmatprep.subr.mxu0 0.0
    %515 = vmatpush1.msra.mxu0 %v398
    %516 = vmatprep.subr.mxu0 0.0
    %517 = vmatpush1.msra.mxu0 %v401
    %518 = vmatprep.subr.mxu0 0.0
    %519 = vmatpush1.msra.mxu0 %v404
    %520 = vmatprep.subr.mxu0 0.0
    %521 = vmatpush1.msra.mxu0 %v407
    %522 = vmatprep.subr.mxu0 0.0
    %523 = vmatpush1.msra.mxu0 %v410
    %524 = vmatprep.subr.mxu0 0.0
    %525 = vmatpush1.msra.mxu0 %v413
    %526 = vmatprep.subr.mxu0 0.0
    %527 = vmatpush1.msra.mxu0 %v416
    %528 = vmatprep.subr.mxu0 0.0
    %529 = vmatpush1.msra.mxu0 %v419
    %530 = vmatprep.subr.mxu0 0.0
    %531 = vmatpush1.msra.mxu0 %v422
    %532 = vmatprep.subr.mxu0 0.0
    %533 = vmatpush1.msra.mxu0 %v425
    %534 = vmatprep.subr.mxu0 0.0
    %535 = vmatpush1.msra.mxu0 %v428
    %536 = vmatprep.subr.mxu0 0.0
    %537 = vmatpush1.msra.mxu0 %v431
    %538 = vmatprep.subr.mxu0 0.0
    %539 = vmatpush1.msra.mxu0 %v434
    %540 = vmatprep.subr.mxu0 0.0
    %541 = vmatpush1.msra.mxu0 %v437
    %542 = vmatprep.subr.mxu0 0.0
    %543 = vmatpush1.msra.mxu0 %v440
    %544 = vmatprep.subr.mxu0 0.0
    %545 = vmatpush1.msra.mxu0 0.0
    %546 = vmatprep.subr.mxu0 0.0
    %547 = vmatpush1.msra.mxu0 0.0
    %548 = vmatprep.subr.mxu0 0.0
    %549 = vmatpush1.msra.mxu0 0.0
    %550 = vmatprep.subr.mxu0 0.0
    %551 = vmatpush1.msra.mxu0 0.0
    %552 = vmatprep.subr.mxu0 0.0
    %553 = vmatpush1.msra.mxu0 0.0
    %554 = vmatprep.subr.mxu0 0.0
    %555 = vmatpush1.msra.mxu0 0.0
    %556 = vmatprep.subr.mxu0 0.0
    %557 = vmatpush1.msra.mxu0 0.0
    %558 = vmatprep.subr.mxu0 0.0
    %559 = vmatpush1.msra.mxu0 0.0
    %560 = vmatprep.subr.mxu0 0.0
    %561 = vmatpush1.msra.mxu0 0.0
    %562 = vmatprep.subr.mxu0 0.0
    %563 = vmatpush1.msra.mxu0 0.0
    %564 = vmatprep.subr.mxu0 0.0
    %565 = vmatpush1.msra.mxu0 0.0
    %566 = vmatprep.subr.mxu0 0.0
    %567 = vmatpush1.msra.mxu0 0.0
    %568 = vmatprep.subr.mxu0 0.0
    %569 = vmatpush1.msra.mxu0 0.0
    %570 = vmatprep.subr.mxu0 0.0
    %571 = vmatpush1.msra.mxu0 0.0
    %572 = vmatprep.subr.mxu0 0.0
    %573 = vmatpush1.msra.mxu0 0.0
    %574 = vmatprep.subr.mxu0 0.0
    %575 = vmatpush1.msra.mxu0 0.0
    %576 = vmatprep.mubr.f32.mxu0 0.0
    %577 = vmatmul.mubr.f32.gmra.mrb[0].mxu0 %v386
    %v578 = vpop.f32.mrb[0].mxu0
    %v579 = vadd.f32 0.0, %v578
    %v580 = vpop.f32.mrb[0].mxu0
    %581 = vdwg.mxu0
    %v582 = vadd.f32 %v390, %v508
    %v583 = vxor.u32 %v582, 2147483648
    %v584 = vmul.f32 %v583, 1.442695
    %v585 = vpow.pop %v584
    %v586 = vadd.f32 %v585, 1.0
    %v587 = vrcp.pop %v586
    %v588 = vmul.f32 1.0, %v587
    %v589 = vadd.f32 %v391, %v510
    %v590 = vxor.u32 %v589, 2147483648
    %v591 = vmul.f32 %v590, 1.442695
    %v592 = vpow.pop %v591
    %v593 = vadd.f32 %v592, 1.0
    %v594 = vrcp.pop %v593
    %v595 = vmul.f32 1.0, %v594
    %v597 = vlaneseq
    %v598 = vshrl.u32 %v597, 7
    %v599 = vsub.s32 0, %v598
    %v600 = vrot.slane %v385, %v599
    %v602 = vadd.f32 %v579, %v600
    %v603 = vmul.f32 %v588, %v602
    %v604 = vadd.f32 %v392, %v603
    %v605 = vtanh.pop %v604
    %v606 = vsub.f32 1.0, %v595
    %v607 = vmul.f32 %v606, %v605
    %v608 = vmul.f32 %v595, %v386
    %v609 = vadd.f32 %v607, %v608
    %610 = vst [vmem:[#allocation9] sm:$0xff] %v609
    %s611 = smul.u32 1, 3
    %s612 = smul.addr %s611, 8
    %s613 = scalar_lea.vmem [#allocation2], %s612
    %v614 = vld [vmem:[%s613] sm:$0xff]
    %v615 = vld [vmem:[%s613 + $0x8] sm:$0xff]
    %v616 = vld [vmem:[%s613 + $0x10] sm:$0xff]
    %v617 = vld [vmem:[#allocation3] sm:$0xff]
    %v618 = vld [vmem:[#allocation3 + $0x8] sm:$0xff]
    %v619 = vld [vmem:[#allocation3 + $0x10] sm:$0xff]
    %v620 = vld [vmem:[#allocation3 + $0x18] sm:$0xff]
    %v621 = vld [vmem:[#allocation3 + $0x20] sm:$0xff]
    %v622 = vld [vmem:[#allocation3 + $0x28] sm:$0xff]
    %v623 = vld [vmem:[#allocation3 + $0x30] sm:$0xff]
    %v624 = vld [vmem:[#allocation3 + $0x38] sm:$0xff]
    %v625 = vld [vmem:[#allocation3 + $0x40] sm:$0xff]
    %v626 = vld [vmem:[#allocation3 + $0x48] sm:$0xff]
    %v627 = vld [vmem:[#allocation3 + $0x50] sm:$0xff]
    %v628 = vld [vmem:[#allocation3 + $0x58] sm:$0xff]
    %v629 = vld [vmem:[#allocation3 + $0x60] sm:$0xff]
    %v630 = vld [vmem:[#allocation3 + $0x68] sm:$0xff]
    %v631 = vld [vmem:[#allocation3 + $0x70] sm:$0xff]
    %v632 = vld [vmem:[#allocation3 + $0x78] sm:$0xff]
    %v633 = vld [vmem:[#allocation3 + $0x80] sm:$0xff]
    %v634 = vld [vmem:[#allocation3 + $0x88] sm:$0xff]
    %v635 = vld [vmem:[#allocation3 + $0x90] sm:$0xff]
    %v636 = vld [vmem:[#allocation3 + $0x98] sm:$0xff]
    %v637 = vld [vmem:[#allocation3 + $0xa0] sm:$0xff]
    %v638 = vld [vmem:[#allocation3 + $0xa8] sm:$0xff]
    %v639 = vld [vmem:[#allocation3 + $0xb0] sm:$0xff]
    %v640 = vld [vmem:[#allocation3 + $0xb8] sm:$0xff]
    %v641 = vld [vmem:[#allocation3 + $0xc0] sm:$0xff]
    %v642 = vld [vmem:[#allocation3 + $0xc8] sm:$0xff]
    %v643 = vld [vmem:[#allocation3 + $0xd0] sm:$0xff]
    %v644 = vld [vmem:[#allocation3 + $0xd8] sm:$0xff]
    %v645 = vld [vmem:[#allocation3 + $0xe0] sm:$0xff]
    %v646 = vld [vmem:[#allocation3 + $0xe8] sm:$0xff]
    %v647 = vld [vmem:[#allocation3 + $0xf0] sm:$0xff]
    %v648 = vld [vmem:[#allocation3 + $0xf8] sm:$0xff]
    %v649 = vld [vmem:[#allocation3 + $0x100] sm:$0xff]
    %v650 = vld [vmem:[#allocation3 + $0x108] sm:$0xff]
    %v651 = vld [vmem:[#allocation3 + $0x110] sm:$0xff]
    %v652 = vld [vmem:[#allocation3 + $0x118] sm:$0xff]
    %v653 = vld [vmem:[#allocation3 + $0x120] sm:$0xff]
    %v654 = vld [vmem:[#allocation3 + $0x128] sm:$0xff]
    %v655 = vld [vmem:[#allocation3 + $0x130] sm:$0xff]
    %v656 = vld [vmem:[#allocation3 + $0x138] sm:$0xff]
    %v657 = vld [vmem:[#allocation3 + $0x140] sm:$0xff]
    %v658 = vld [vmem:[#allocation3 + $0x148] sm:$0xff]
    %v659 = vld [vmem:[#allocation3 + $0x150] sm:$0xff]
    %v660 = vld [vmem:[#allocation3 + $0x158] sm:$0xff]
    %v661 = vld [vmem:[#allocation3 + $0x160] sm:$0xff]
    %v662 = vld [vmem:[#allocation3 + $0x168] sm:$0xff]
    %v663 = vld [vmem:[#allocation3 + $0x170] sm:$0xff]
    %v664 = vld [vmem:[#allocation3 + $0x178] sm:$0xff]
    %665 = vmatprep.subr.mxu0 %v618
    %666 = vmatpush1.msra.mxu0 %v617
    %667 = vmatprep.subr.mxu0 %v621
    %668 = vmatpush1.msra.mxu0 %v620
    %669 = vmatprep.subr.mxu0 %v624
    %670 = vmatpush1.msra.mxu0 %v623
    %671 = vmatprep.subr.mxu0 %v627
    %672 = vmatpush1.msra.mxu0 %v626
    %673 = vmatprep.subr.mxu0 %v630
    %674 = vmatpush1.msra.mxu0 %v629
    %675 = vmatprep.subr.mxu0 %v633
    %676 = vmatpush1.msra.mxu0 %v632
    %677 = vmatprep.subr.mxu0 %v636
    %678 = vmatpush1.msra.mxu0 %v635
    %679 = vmatprep.subr.mxu0 %v639
    %680 = vmatpush1.msra.mxu0 %v638
    %681 = vmatprep.subr.mxu0 %v642
    %682 = vmatpush1.msra.mxu0 %v641
    %683 = vmatprep.subr.mxu0 %v645
    %684 = vmatpush1.msra.mxu0 %v644
    %685 = vmatprep.subr.mxu0 %v648
    %686 = vmatpush1.msra.mxu0 %v647
    %687 = vmatprep.subr.mxu0 %v651
    %688 = vmatpush1.msra.mxu0 %v650
    %689 = vmatprep.subr.mxu0 %v654
    %690 = vmatpush1.msra.mxu0 %v653
    %691 = vmatprep.subr.mxu0 %v657
    %692 = vmatpush1.msra.mxu0 %v656
    %693 = vmatprep.subr.mxu0 %v660
    %694 = vmatpush1.msra.mxu0 %v659
    %695 = vmatprep.subr.mxu0 %v663
    %696 = vmatpush1.msra.mxu0 %v662
    %697 = vmatprep.subr.mxu0 0.0
    %698 = vmatpush1.msra.mxu0 0.0
    %699 = vmatprep.subr.mxu0 0.0
    %700 = vmatpush1.msra.mxu0 0.0
    %701 = vmatprep.subr.mxu0 0.0
    %702 = vmatpush1.msra.mxu0 0.0
    %703 = vmatprep.subr.mxu0 0.0
    %704 = vmatpush1.msra.mxu0 0.0
    %705 = vmatprep.subr.mxu0 0.0
    %706 = vmatpush1.msra.mxu0 0.0
    %707 = vmatprep.subr.mxu0 0.0
    %708 = vmatpush1.msra.mxu0 0.0
    %709 = vmatprep.subr.mxu0 0.0
    %710 = vmatpush1.msra.mxu0 0.0
    %711 = vmatprep.subr.mxu0 0.0
    %712 = vmatpush1.msra.mxu0 0.0
    %713 = vmatprep.subr.mxu0 0.0
    %714 = vmatpush1.msra.mxu0 0.0
    %715 = vmatprep.subr.mxu0 0.0
    %716 = vmatpush1.msra.mxu0 0.0
    %717 = vmatprep.subr.mxu0 0.0
    %718 = vmatpush1.msra.mxu0 0.0
    %719 = vmatprep.subr.mxu0 0.0
    %720 = vmatpush1.msra.mxu0 0.0
    %721 = vmatprep.subr.mxu0 0.0
    %722 = vmatpush1.msra.mxu0 0.0
    %723 = vmatprep.subr.mxu0 0.0
    %724 = vmatpush1.msra.mxu0 0.0
    %725 = vmatprep.subr.mxu0 0.0
    %726 = vmatpush1.msra.mxu0 0.0
    %727 = vmatprep.subr.mxu0 0.0
    %728 = vmatpush1.msra.mxu0 0.0
    %729 = vmatprep.mubr.f32.mxu0 0.0
    %730 = vmatmul.mubr.f32.gmra.mrb[0].mxu0 %v609
    %v731 = vpop.f32.mrb[0].mxu0
    %v732 = vadd.f32 0.0, %v731
    %v733 = vpop.f32.mrb[0].mxu0
    %v734 = vadd.f32 0.0, %v733
    %735 = vdwg.mxu0
    %736 = vmatprep.subr.mxu0 0.0
    %737 = vmatpush1.msra.mxu0 %v619
    %738 = vmatprep.subr.mxu0 0.0
    %739 = vmatpush1.msra.mxu0 %v622
    %740 = vmatprep.subr.mxu0 0.0
    %741 = vmatpush1.msra.mxu0 %v625
    %742 = vmatprep.subr.mxu0 0.0
    %743 = vmatpush1.msra.mxu0 %v628
    %744 = vmatprep.subr.mxu0 0.0
    %745 = vmatpush1.msra.mxu0 %v631
    %746 = vmatprep.subr.mxu0 0.0
    %747 = vmatpush1.msra.mxu0 %v634
    %748 = vmatprep.subr.mxu0 0.0
    %749 = vmatpush1.msra.mxu0 %v637
    %750 = vmatprep.subr.mxu0 0.0
    %751 = vmatpush1.msra.mxu0 %v640
    %752 = vmatprep.subr.mxu0 0.0
    %753 = vmatpush1.msra.mxu0 %v643
    %754 = vmatprep.subr.mxu0 0.0
    %755 = vmatpush1.msra.mxu0 %v646
    %756 = vmatprep.subr.mxu0 0.0
    %757 = vmatpush1.msra.mxu0 %v649
    %758 = vmatprep.subr.mxu0 0.0
    %759 = vmatpush1.msra.mxu0 %v652
    %760 = vmatprep.subr.mxu0 0.0
    %761 = vmatpush1.msra.mxu0 %v655
    %762 = vmatprep.subr.mxu0 0.0
    %763 = vmatpush1.msra.mxu0 %v658
    %764 = vmatprep.subr.mxu0 0.0
    %765 = vmatpush1.msra.mxu0 %v661
    %766 = vmatprep.subr.mxu0 0.0
    %767 = vmatpush1.msra.mxu0 %v664
    %768 = vmatprep.subr.mxu0 0.0
    %769 = vmatpush1.msra.mxu0 0.0
    %770 = vmatprep.subr.mxu0 0.0
    %771 = vmatpush1.msra.mxu0 0.0
    %772 = vmatprep.subr.mxu0 0.0
    %773 = vmatpush1.msra.mxu0 0.0
    %774 = vmatprep.subr.mxu0 0.0
    %775 = vmatpush1.msra.mxu0 0.0
    %776 = vmatprep.subr.mxu0 0.0
    %777 = vmatpush1.msra.mxu0 0.0
    %778 = vmatprep.subr.mxu0 0.0
    %779 = vmatpush1.msra.mxu0 0.0
    %780 = vmatprep.subr.mxu0 0.0
    %781 = vmatpush1.msra.mxu0 0.0
    %782 = vmatprep.subr.mxu0 0.0
    %783 = vmatpush1.msra.mxu0 0.0
    %784 = vmatprep.subr.mxu0 0.0
    %785 = vmatpush1.msra.mxu0 0.0
    %786 = vmatprep.subr.mxu0 0.0
    %787 = vmatpush1.msra.mxu0 0.0
    %788 = vmatprep.subr.mxu0 0.0
    %789 = vmatpush1.msra.mxu0 0.0
    %790 = vmatprep.subr.mxu0 0.0
    %791 = vmatpush1.msra.mxu0 0.0
    %792 = vmatprep.subr.mxu0 0.0
    %793 = vmatpush1.msra.mxu0 0.0
    %794 = vmatprep.subr.mxu0 0.0
    %795 = vmatpush1.msra.mxu0 0.0
    %796 = vmatprep.subr.mxu0 0.0
    %797 = vmatpush1.msra.mxu0 0.0
    %798 = vmatprep.subr.mxu0 0.0
    %799 = vmatpush1.msra.mxu0 0.0
    %800 = vmatprep.mubr.f32.mxu0 0.0
    %801 = vmatmul.mubr.f32.gmra.mrb[0].mxu0 %v609
    %v802 = vpop.f32.mrb[0].mxu0
    %v803 = vadd.f32 0.0, %v802
    %v804 = vpop.f32.mrb[0].mxu0
    %805 = vdwg.mxu0
    %v806 = vadd.f32 %v614, %v732
    %v807 = vxor.u32 %v806, 2147483648
    %v808 = vmul.f32 %v807, 1.442695
    %v809 = vpow.pop %v808
    %v810 = vadd.f32 %v809, 1.0
    %v811 = vrcp.pop %v810
    %v812 = vmul.f32 1.0, %v811
    %v813 = vadd.f32 %v615, %v734
    %v814 = vxor.u32 %v813, 2147483648
    %v815 = vmul.f32 %v814, 1.442695
    %v816 = vpow.pop %v815
    %v817 = vadd.f32 %v816, 1.0
    %v818 = vrcp.pop %v817
    %v819 = vmul.f32 1.0, %v818
    %v820 = vadd.f32 %v803, %v600
    %v821 = vmul.f32 %v812, %v820
    %v822 = vadd.f32 %v616, %v821
    %v823 = vtanh.pop %v822
    %v824 = vsub.f32 1.0, %v819
    %v825 = vmul.f32 %v824, %v823
    %v826 = vmul.f32 %v819, %v609
    %v827 = vadd.f32 %v825, %v826
    %s828 = scalar_lea.vmem [#allocation9], 8
    %829 = vst [vmem:[%s828] sm:$0xff] %v827
    %s830 = smul.u32 2, 3
    %s831 = smul.addr %s830, 8
    %s832 = scalar_lea.vmem [#allocation2], %s831
    %v833 = vld [vmem:[%s832] sm:$0xff]
    %v834 = vld [vmem:[%s832 + $0x8] sm:$0xff]
    %v835 = vld [vmem:[%s832 + $0x10] sm:$0xff]
    %v836 = vld [vmem:[#allocation3] sm:$0xff]
    %v837 = vld [vmem:[#allocation3 + $0x8] sm:$0xff]
    %v838 = vld [vmem:[#allocation3 + $0x10] sm:$0xff]
    %v839 = vld [vmem:[#allocation3 + $0x18] sm:$0xff]
    %v840 = vld [vmem:[#allocation3 + $0x20] sm:$0xff]
    %v841 = vld [vmem:[#allocation3 + $0x28] sm:$0xff]
    %v842 = vld [vmem:[#allocation3 + $0x30] sm:$0xff]
    %v843 = vld [vmem:[#allocation3 + $0x38] sm:$0xff]
    %v844 = vld [vmem:[#allocation3 + $0x40] sm:$0xff]
    %v845 = vld [vmem:[#allocation3 + $0x48] sm:$0xff]
    %v846 = vld [vmem:[#allocation3 + $0x50] sm:$0xff]
    %v847 = vld [vmem:[#allocation3 + $0x58] sm:$0xff]
    %v848 = vld [vmem:[#allocation3 + $0x60] sm:$0xff]
    %v849 = vld [vmem:[#allocation3 + $0x68] sm:$0xff]
    %v850 = vld [vmem:[#allocation3 + $0x70] sm:$0xff]
    %v851 = vld [vmem:[#allocation3 + $0x78] sm:$0xff]
    %v852 = vld [vmem:[#allocation3 + $0x80] sm:$0xff]
    %v853 = vld [vmem:[#allocation3 + $0x88] sm:$0xff]
    %v854 = vld [vmem:[#allocation3 + $0x90] sm:$0xff]
    %v855 = vld [vmem:[#allocation3 + $0x98] sm:$0xff]
    %v856 = vld [vmem:[#allocation3 + $0xa0] sm:$0xff]
    %v857 = vld [vmem:[#allocation3 + $0xa8] sm:$0xff]
    %v858 = vld [vmem:[#allocation3 + $0xb0] sm:$0xff]
    %v859 = vld [vmem:[#allocation3 + $0xb8] sm:$0xff]
    %v860 = vld [vmem:[#allocation3 + $0xc0] sm:$0xff]
    %v861 = vld [vmem:[#allocation3 + $0xc8] sm:$0xff]
    %v862 = vld [vmem:[#allocation3 + $0xd0] sm:$0xff]
    %v863 = vld [vmem:[#allocation3 + $0xd8] sm:$0xff]
    %v864 = vld [vmem:[#allocation3 + $0xe0] sm:$0xff]
    %v865 = vld [vmem:[#allocation3 + $0xe8] sm:$0xff]
    %v866 = vld [vmem:[#allocation3 + $0xf0] sm:$0xff]
    %v867 = vld [vmem:[#allocation3 + $0xf8] sm:$0xff]
    %v868 = vld [vmem:[#allocation3 + $0x100] sm:$0xff]
    %v869 = vld [vmem:[#allocation3 + $0x108] sm:$0xff]
    %v870 = vld [vmem:[#allocation3 + $0x110] sm:$0xff]
    %v871 = vld [vmem:[#allocation3 + $0x118] sm:$0xff]
    %v872 = vld [vmem:[#allocation3 + $0x120] sm:$0xff]
    %v873 = vld [vmem:[#allocation3 + $0x128] sm:$0xff]
    %v874 = vld [vmem:[#allocation3 + $0x130] sm:$0xff]
    %v875 = vld [vmem:[#allocation3 + $0x138] sm:$0xff]
    %v876 = vld [vmem:[#allocation3 + $0x140] sm:$0xff]
    %v877 = vld [vmem:[#allocation3 + $0x148] sm:$0xff]
    %v878 = vld [vmem:[#allocation3 + $0x150] sm:$0xff]
    %v879 = vld [vmem:[#allocation3 + $0x158] sm:$0xff]
    %v880 = vld [vmem:[#allocation3 + $0x160] sm:$0xff]
    %v881 = vld [vmem:[#allocation3 + $0x168] sm:$0xff]
    %v882 = vld [vmem:[#allocation3 + $0x170] sm:$0xff]
    %v883 = vld [vmem:[#allocation3 + $0x178] sm:$0xff]
    %884 = vmatprep.subr.mxu0 %v837
    %885 = vmatpush1.msra.mxu0 %v836
    %886 = vmatprep.subr.mxu0 %v840
    %887 = vmatpush1.msra.mxu0 %v839
    %888 = vmatprep.subr.mxu0 %v843
    %889 = vmatpush1.msra.mxu0 %v842
    %890 = vmatprep.subr.mxu0 %v846
    %891 = vmatpush1.msra.mxu0 %v845
    %892 = vmatprep.subr.mxu0 %v849
    %893 = vmatpush1.msra.mxu0 %v848
    %894 = vmatprep.subr.mxu0 %v852
    %895 = vmatpush1.msra.mxu0 %v851
    %896 = vmatprep.subr.mxu0 %v855
    %897 = vmatpush1.msra.mxu0 %v854
    %898 = vmatprep.subr.mxu0 %v858
    %899 = vmatpush1.msra.mxu0 %v857
    %900 = vmatprep.subr.mxu0 %v861
    %901 = vmatpush1.msra.mxu0 %v860
    %902 = vmatprep.subr.mxu0 %v864
    %903 = vmatpush1.msra.mxu0 %v863
    %904 = vmatprep.subr.mxu0 %v867
    %905 = vmatpush1.msra.mxu0 %v866
    %906 = vmatprep.subr.mxu0 %v870
    %907 = vmatpush1.msra.mxu0 %v869
    %908 = vmatprep.subr.mxu0 %v873
    %909 = vmatpush1.msra.mxu0 %v872
    %910 = vmatprep.subr.mxu0 %v876
    %911 = vmatpush1.msra.mxu0 %v875
    %912 = vmatprep.subr.mxu0 %v879
    %913 = vmatpush1.msra.mxu0 %v878
    %914 = vmatprep.subr.mxu0 %v882
    %915 = vmatpush1.msra.mxu0 %v881
    %916 = vmatprep.subr.mxu0 0.0
    %917 = vmatpush1.msra.mxu0 0.0
    %918 = vmatprep.subr.mxu0 0.0
    %919 = vmatpush1.msra.mxu0 0.0
    %920 = vmatprep.subr.mxu0 0.0
    %921 = vmatpush1.msra.mxu0 0.0
    %922 = vmatprep.subr.mxu0 0.0
    %923 = vmatpush1.msra.mxu0 0.0
    %924 = vmatprep.subr.mxu0 0.0
    %925 = vmatpush1.msra.mxu0 0.0
    %926 = vmatprep.subr.mxu0 0.0
    %927 = vmatpush1.msra.mxu0 0.0
    %928 = vmatprep.subr.mxu0 0.0
    %929 = vmatpush1.msra.mxu0 0.0
    %930 = vmatprep.subr.mxu0 0.0
    %931 = vmatpush1.msra.mxu0 0.0
    %932 = vmatprep.subr.mxu0 0.0
    %933 = vmatpush1.msra.mxu0 0.0
    %934 = vmatprep.subr.mxu0 0.0
    %935 = vmatpush1.msra.mxu0 0.0
    %936 = vmatprep.subr.mxu0 0.0
    %937 = vmatpush1.msra.mxu0 0.0
    %938 = vmatprep.subr.mxu0 0.0
    %939 = vmatpush1.msra.mxu0 0.0
    %940 = vmatprep.subr.mxu0 0.0
    %941 = vmatpush1.msra.mxu0 0.0
    %942 = vmatprep.subr.mxu0 0.0
    %943 = vmatpush1.msra.mxu0 0.0
    %944 = vmatprep.subr.mxu0 0.0
    %945 = vmatpush1.msra.mxu0 0.0
    %946 = vmatprep.subr.mxu0 0.0
    %947 = vmatpush1.msra.mxu0 0.0
    %948 = vmatprep.mubr.f32.mxu0 0.0
    %949 = vmatmul.mubr.f32.gmra.mrb[0].mxu0 %v827
    %v950 = vpop.f32.mrb[0].mxu0
    %v951 = vadd.f32 0.0, %v950
    %v952 = vpop.f32.mrb[0].mxu0
    %v953 = vadd.f32 0.0, %v952
    %954 = vdwg.mxu0
    %955 = vmatprep.subr.mxu0 0.0
    %956 = vmatpush1.msra.mxu0 %v838
    %957 = vmatprep.subr.mxu0 0.0
    %958 = vmatpush1.msra.mxu0 %v841
    %959 = vmatprep.subr.mxu0 0.0
    %960 = vmatpush1.msra.mxu0 %v844
    %961 = vmatprep.subr.mxu0 0.0
    %962 = vmatpush1.msra.mxu0 %v847
    %963 = vmatprep.subr.mxu0 0.0
    %964 = vmatpush1.msra.mxu0 %v850
    %965 = vmatprep.subr.mxu0 0.0
    %966 = vmatpush1.msra.mxu0 %v853
    %967 = vmatprep.subr.mxu0 0.0
    %968 = vmatpush1.msra.mxu0 %v856
    %969 = vmatprep.subr.mxu0 0.0
    %970 = vmatpush1.msra.mxu0 %v859
    %971 = vmatprep.subr.mxu0 0.0
    %972 = vmatpush1.msra.mxu0 %v862
    %973 = vmatprep.subr.mxu0 0.0
    %974 = vmatpush1.msra.mxu0 %v865
    %975 = vmatprep.subr.mxu0 0.0
    %976 = vmatpush1.msra.mxu0 %v868
    %977 = vmatprep.subr.mxu0 0.0
    %978 = vmatpush1.msra.mxu0 %v871
    %979 = vmatprep.subr.mxu0 0.0
    %980 = vmatpush1.msra.mxu0 %v874
    %981 = vmatprep.subr.mxu0 0.0
    %982 = vmatpush1.msra.mxu0 %v877
    %983 = vmatprep.subr.mxu0 0.0
    %984 = vmatpush1.msra.mxu0 %v880
    %985 = vmatprep.subr.mxu0 0.0
    %986 = vmatpush1.msra.mxu0 %v883
    %987 = vmatprep.subr.mxu0 0.0
    %988 = vmatpush1.msra.mxu0 0.0
    %989 = vmatprep.subr.mxu0 0.0
    %990 = vmatpush1.msra.mxu0 0.0
    %991 = vmatprep.subr.mxu0 0.0
    %992 = vmatpush1.msra.mxu0 0.0
    %993 = vmatprep.subr.mxu0 0.0
    %994 = vmatpush1.msra.mxu0 0.0
    %995 = vmatprep.subr.mxu0 0.0
    %996 = vmatpush1.msra.mxu0 0.0
    %997 = vmatprep.subr.mxu0 0.0
    %998 = vmatpush1.msra.mxu0 0.0
    %999 = vmatprep.subr.mxu0 0.0
    %1000 = vmatpush1.msra.mxu0 0.0
    %1001 = vmatprep.subr.mxu0 0.0
    %1002 = vmatpush1.msra.mxu0 0.0
    %1003 = vmatprep.subr.mxu0 0.0
    %1004 = vmatpush1.msra.mxu0 0.0
    %1005 = vmatprep.subr.mxu0 0.0
    %1006 = vmatpush1.msra.mxu0 0.0
    %1007 = vmatprep.subr.mxu0 0.0
    %1008 = vmatpush1.msra.mxu0 0.0
    %1009 = vmatprep.subr.mxu0 0.0
    %1010 = vmatpush1.msra.mxu0 0.0
    %1011 = vmatprep.subr.mxu0 0.0
    %1012 = vmatpush1.msra.mxu0 0.0
    %1013 = vmatprep.subr.mxu0 0.0
    %1014 = vmatpush1.msra.mxu0 0.0
    %1015 = vmatprep.subr.mxu0 0.0
    %1016 = vmatpush1.msra.mxu0 0.0
    %1017 = vmatprep.subr.mxu0 0.0
    %1018 = vmatpush1.msra.mxu0 0.0
    %1019 = vmatprep.mubr.f32.mxu0 0.0
    %1020 = vmatmul.mubr.f32.gmra.mrb[0].mxu0 %v827
    %v1021 = vpop.f32.mrb[0].mxu0
    %v1022 = vadd.f32 0.0, %v1021
    %v1023 = vpop.f32.mrb[0].mxu0
    %1024 = vdwg.mxu0
    %v1025 = vadd.f32 %v833, %v951
    %v1026 = vxor.u32 %v1025, 2147483648
    %v1027 = vmul.f32 %v1026, 1.442695
    %v1028 = vpow.pop %v1027
    %v1029 = vadd.f32 %v1028, 1.0
    %v1030 = vrcp.pop %v1029
    %v1031 = vmul.f32 1.0, %v1030
    %v1032 = vadd.f32 %v834, %v953
    %v1033 = vxor.u32 %v1032, 2147483648
    %v1034 = vmul.f32 %v1033, 1.442695
    %v1035 = vpow.pop %v1034
    %v1036 = vadd.f32 %v1035, 1.0
    %v1037 = vrcp.pop %v1036
    %v1038 = vmul.f32 1.0, %v1037
    %v1039 = vadd.f32 %v1022, %v600
    %v1040 = vmul.f32 %v1031, %v1039
    %v1041 = vadd.f32 %v835, %v1040
    %v1042 = vtanh.pop %v1041
    %v1043 = vsub.f32 1.0, %v1038
    %v1044 = vmul.f32 %v1043, %v1042
    %v1045 = vmul.f32 %v1038, %v827
    %v1046 = vadd.f32 %v1044, %v1045
    %s1047 = scalar_lea.vmem [#allocation9], 16
    %1048 = vst [vmem:[%s1047] sm:$0xff] %v1046
    %s1049 = smul.u32 3, 3
    %s1050 = smul.addr %s1049, 8
    %s1051 = scalar_lea.vmem [#allocation2], %s1050
    %v1052 = vld [vmem:[%s1051] sm:$0xff]
    %v1053 = vld [vmem:[%s1051 + $0x8] sm:$0xff]
    %v1054 = vld [vmem:[%s1051 + $0x10] sm:$0xff]
    %v1055 = vld [vmem:[#allocation3] sm:$0xff]
    %v1056 = vld [vmem:[#allocation3 + $0x8] sm:$0xff]
    %v1057 = vld [vmem:[#allocation3 + $0x10] sm:$0xff]
    %v1058 = vld [vmem:[#allocation3 + $0x18] sm:$0xff]
    %v1059 = vld [vmem:[#allocation3 + $0x20] sm:$0xff]
    %v1060 = vld [vmem:[#allocation3 + $0x28] sm:$0xff]
    %v1061 = vld [vmem:[#allocation3 + $0x30] sm:$0xff]
    %v1062 = vld [vmem:[#allocation3 + $0x38] sm:$0xff]
    %v1063 = vld [vmem:[#allocation3 + $0x40] sm:$0xff]
    %v1064 = vld [vmem:[#allocation3 + $0x48] sm:$0xff]
    %v1065 = vld [vmem:[#allocation3 + $0x50] sm:$0xff]
    %v1066 = vld [vmem:[#allocation3 + $0x58] sm:$0xff]
    %v1067 = vld [vmem:[#allocation3 + $0x60] sm:$0xff]
    %v1068 = vld [vmem:[#allocation3 + $0x68] sm:$0xff]
    %v1069 = vld [vmem:[#allocation3 + $0x70] sm:$0xff]
    %v1070 = vld [vmem:[#allocation3 + $0x78] sm:$0xff]
    %v1071 = vld [vmem:[#allocation3 + $0x80] sm:$0xff]
    %v1072 = vld [vmem:[#allocation3 + $0x88] sm:$0xff]
    %v1073 = vld [vmem:[#allocation3 + $0x90] sm:$0xff]
    %v1074 = vld [vmem:[#allocation3 + $0x98] sm:$0xff]
    %v1075 = vld [vmem:[#allocation3 + $0xa0] sm:$0xff]
    %v1076 = vld [vmem:[#allocation3 + $0xa8] sm:$0xff]
    %v1077 = vld [vmem:[#allocation3 + $0xb0] sm:$0xff]
    %v1078 = vld [vmem:[#allocation3 + $0xb8] sm:$0xff]
    %v1079 = vld [vmem:[#allocation3 + $0xc0] sm:$0xff]
    %v1080 = vld [vmem:[#allocation3 + $0xc8] sm:$0xff]
    %v1081 = vld [vmem:[#allocation3 + $0xd0] sm:$0xff]
    %v1082 = vld [vmem:[#allocation3 + $0xd8] sm:$0xff]
    %v1083 = vld [vmem:[#allocation3 + $0xe0] sm:$0xff]
    %v1084 = vld [vmem:[#allocation3 + $0xe8] sm:$0xff]
    %v1085 = vld [vmem:[#allocation3 + $0xf0] sm:$0xff]
    %v1086 = vld [vmem:[#allocation3 + $0xf8] sm:$0xff]
    %v1087 = vld [vmem:[#allocation3 + $0x100] sm:$0xff]
    %v1088 = vld [vmem:[#allocation3 + $0x108] sm:$0xff]
    %v1089 = vld [vmem:[#allocation3 + $0x110] sm:$0xff]
    %v1090 = vld [vmem:[#allocation3 + $0x118] sm:$0xff]
    %v1091 = vld [vmem:[#allocation3 + $0x120] sm:$0xff]
    %v1092 = vld [vmem:[#allocation3 + $0x128] sm:$0xff]
    %v1093 = vld [vmem:[#allocation3 + $0x130] sm:$0xff]
    %v1094 = vld [vmem:[#allocation3 + $0x138] sm:$0xff]
    %v1095 = vld [vmem:[#allocation3 + $0x140] sm:$0xff]
    %v1096 = vld [vmem:[#allocation3 + $0x148] sm:$0xff]
    %v1097 = vld [vmem:[#allocation3 + $0x150] sm:$0xff]
    %v1098 = vld [vmem:[#allocation3 + $0x158] sm:$0xff]
    %v1099 = vld [vmem:[#allocation3 + $0x160] sm:$0xff]
    %v1100 = vld [vmem:[#allocation3 + $0x168] sm:$0xff]
    %v1101 = vld [vmem:[#allocation3 + $0x170] sm:$0xff]
    %v1102 = vld [vmem:[#allocation3 + $0x178] sm:$0xff]
    %1103 = vmatprep.subr.mxu0 %v1056
    %1104 = vmatpush1.msra.mxu0 %v1055
    %1105 = vmatprep.subr.mxu0 %v1059
    %1106 = vmatpush1.msra.mxu0 %v1058
    %1107 = vmatprep.subr.mxu0 %v1062
    %1108 = vmatpush1.msra.mxu0 %v1061
    %1109 = vmatprep.subr.mxu0 %v1065
    %1110 = vmatpush1.msra.mxu0 %v1064
    %1111 = vmatprep.subr.mxu0 %v1068
    %1112 = vmatpush1.msra.mxu0 %v1067
    %1113 = vmatprep.subr.mxu0 %v1071
    %1114 = vmatpush1.msra.mxu0 %v1070
    %1115 = vmatprep.subr.mxu0 %v1074
    %1116 = vmatpush1.msra.mxu0 %v1073
    %1117 = vmatprep.subr.mxu0 %v1077
    %1118 = vmatpush1.msra.mxu0 %v1076
    %1119 = vmatprep.subr.mxu0 %v1080
    %1120 = vmatpush1.msra.mxu0 %v1079
    %1121 = vmatprep.subr.mxu0 %v1083
    %1122 = vmatpush1.msra.mxu0 %v1082
    %1123 = vmatprep.subr.mxu0 %v1086
    %1124 = vmatpush1.msra.mxu0 %v1085
    %1125 = vmatprep.subr.mxu0 %v1089
    %1126 = vmatpush1.msra.mxu0 %v1088
    %1127 = vmatprep.subr.mxu0 %v1092
    %1128 = vmatpush1.msra.mxu0 %v1091
    %1129 = vmatprep.subr.mxu0 %v1095
    %1130 = vmatpush1.msra.mxu0 %v1094
    %1131 = vmatprep.subr.mxu0 %v1098
    %1132 = vmatpush1.msra.mxu0 %v1097
    %1133 = vmatprep.subr.mxu0 %v1101
    %1134 = vmatpush1.msra.mxu0 %v1100
    %1135 = vmatprep.subr.mxu0 0.0
    %1136 = vmatpush1.msra.mxu0 0.0
    %1137 = vmatprep.subr.mxu0 0.0
    %1138 = vmatpush1.msra.mxu0 0.0
    %1139 = vmatprep.subr.mxu0 0.0
    %1140 = vmatpush1.msra.mxu0 0.0
    %1141 = vmatprep.subr.mxu0 0.0
    %1142 = vmatpush1.msra.mxu0 0.0
    %1143 = vmatprep.subr.mxu0 0.0
    %1144 = vmatpush1.msra.mxu0 0.0
    %1145 = vmatprep.subr.mxu0 0.0
    %1146 = vmatpush1.msra.mxu0 0.0
    %1147 = vmatprep.subr.mxu0 0.0
    %1148 = vmatpush1.msra.mxu0 0.0
    %1149 = vmatprep.subr.mxu0 0.0
    %1150 = vmatpush1.msra.mxu0 0.0
    %1151 = vmatprep.subr.mxu0 0.0
    %1152 = vmatpush1.msra.mxu0 0.0
    %1153 = vmatprep.subr.mxu0 0.0
    %1154 = vmatpush1.msra.mxu0 0.0
    %1155 = vmatprep.subr.mxu0 0.0
    %1156 = vmatpush1.msra.mxu0 0.0
    %1157 = vmatprep.subr.mxu0 0.0
    %1158 = vmatpush1.msra.mxu0 0.0
    %1159 = vmatprep.subr.mxu0 0.0
    %1160 = vmatpush1.msra.mxu0 0.0
    %1161 = vmatprep.subr.mxu0 0.0
    %1162 = vmatpush1.msra.mxu0 0.0
    %1163 = vmatprep.subr.mxu0 0.0
    %1164 = vmatpush1.msra.mxu0 0.0
    %1165 = vmatprep.subr.mxu0 0.0
    %1166 = vmatpush1.msra.mxu0 0.0
    %1167 = vmatprep.mubr.f32.mxu0 0.0
    %1168 = vmatmul.mubr.f32.gmra.mrb[0].mxu0 %v1046
    %v1169 = vpop.f32.mrb[0].mxu0
    %v1170 = vadd.f32 0.0, %v1169
    %v1171 = vpop.f32.mrb[0].mxu0
    %v1172 = vadd.f32 0.0, %v1171
    %1173 = vdwg.mxu0
    %1174 = vmatprep.subr.mxu0 0.0
    %1175 = vmatpush1.msra.mxu0 %v1057
    %1176 = vmatprep.subr.mxu0 0.0
    %1177 = vmatpush1.msra.mxu0 %v1060
    %1178 = vmatprep.subr.mxu0 0.0
    %1179 = vmatpush1.msra.mxu0 %v1063
    %1180 = vmatprep.subr.mxu0 0.0
    %1181 = vmatpush1.msra.mxu0 %v1066
    %1182 = vmatprep.subr.mxu0 0.0
    %1183 = vmatpush1.msra.mxu0 %v1069
    %1184 = vmatprep.subr.mxu0 0.0
    %1185 = vmatpush1.msra.mxu0 %v1072
    %1186 = vmatprep.subr.mxu0 0.0
    %1187 = vmatpush1.msra.mxu0 %v1075
    %1188 = vmatprep.subr.mxu0 0.0
    %1189 = vmatpush1.msra.mxu0 %v1078
    %1190 = vmatprep.subr.mxu0 0.0
    %1191 = vmatpush1.msra.mxu0 %v1081
    %1192 = vmatprep.subr.mxu0 0.0
    %1193 = vmatpush1.msra.mxu0 %v1084
    %1194 = vmatprep.subr.mxu0 0.0
    %1195 = vmatpush1.msra.mxu0 %v1087
    %1196 = vmatprep.subr.mxu0 0.0
    %1197 = vmatpush1.msra.mxu0 %v1090
    %1198 = vmatprep.subr.mxu0 0.0
    %1199 = vmatpush1.msra.mxu0 %v1093
    %1200 = vmatprep.subr.mxu0 0.0
    %1201 = vmatpush1.msra.mxu0 %v1096
    %1202 = vmatprep.subr.mxu0 0.0
    %1203 = vmatpush1.msra.mxu0 %v1099
    %1204 = vmatprep.subr.mxu0 0.0
    %1205 = vmatpush1.msra.mxu0 %v1102
    %1206 = vmatprep.subr.mxu0 0.0
    %1207 = vmatpush1.msra.mxu0 0.0
    %1208 = vmatprep.subr.mxu0 0.0
    %1209 = vmatpush1.msra.mxu0 0.0
    %1210 = vmatprep.subr.mxu0 0.0
    %1211 = vmatpush1.msra.mxu0 0.0
    %1212 = vmatprep.subr.mxu0 0.0
    %1213 = vmatpush1.msra.mxu0 0.0
    %1214 = vmatprep.subr.mxu0 0.0
    %1215 = vmatpush1.msra.mxu0 0.0
    %1216 = vmatprep.subr.mxu0 0.0
    %1217 = vmatpush1.msra.mxu0 0.0
    %1218 = vmatprep.subr.mxu0 0.0
    %1219 = vmatpush1.msra.mxu0 0.0
    %1220 = vmatprep.subr.mxu0 0.0
    %1221 = vmatpush1.msra.mxu0 0.0
    %1222 = vmatprep.subr.mxu0 0.0
    %1223 = vmatpush1.msra.mxu0 0.0
    %1224 = vmatprep.subr.mxu0 0.0
    %1225 = vmatpush1.msra.mxu0 0.0
    %1226 = vmatprep.subr.mxu0 0.0
    %1227 = vmatpush1.msra.mxu0 0.0
    %1228 = vmatprep.subr.mxu0 0.0
    %1229 = vmatpush1.msra.mxu0 0.0
    %1230 = vmatprep.subr.mxu0 0.0
    %1231 = vmatpush1.msra.mxu0 0.0
    %1232 = vmatprep.subr.mxu0 0.0
    %1233 = vmatpush1.msra.mxu0 0.0
    %1234 = vmatprep.subr.mxu0 0.0
    %1235 = vmatpush1.msra.mxu0 0.0
    %1236 = vmatprep.subr.mxu0 0.0
    %1237 = vmatpush1.msra.mxu0 0.0
    %1238 = vmatprep.mubr.f32.mxu0 0.0
    %1239 = vmatmul.mubr.f32.gmra.mrb[0].mxu0 %v1046
    %v1240 = vpop.f32.mrb[0].mxu0
    %v1241 = vadd.f32 0.0, %v1240
    %v1242 = vpop.f32.mrb[0].mxu0
    %1243 = vdwg.mxu0
    %v1244 = vadd.f32 %v1052, %v1170
    %v1245 = vxor.u32 %v1244, 2147483648
    %v1246 = vmul.f32 %v1245, 1.442695
    %v1247 = vpow.pop %v1246
    %v1248 = vadd.f32 %v1247, 1.0
    %v1249 = vrcp.pop %v1248
    %v1250 = vmul.f32 1.0, %v1249
    %v1251 = vadd.f32 %v1053, %v1172
    %v1252 = vxor.u32 %v1251, 2147483648
    %v1253 = vmul.f32 %v1252, 1.442695
    %v1254 = vpow.pop %v1253
    %v1255 = vadd.f32 %v1254, 1.0
    %v1256 = vrcp.pop %v1255
    %v1257 = vmul.f32 1.0, %v1256
    %v1258 = vadd.f32 %v1241, %v600
    %v1259 = vmul.f32 %v1250, %v1258
    %v1260 = vadd.f32 %v1054, %v1259
    %v1261 = vtanh.pop %v1260
    %v1262 = vsub.f32 1.0, %v1257
    %v1263 = vmul.f32 %v1262, %v1261
    %v1264 = vmul.f32 %v1257, %v1046
    %v1265 = vadd.f32 %v1263, %v1264
    %s1266 = scalar_lea.vmem [#allocation9], 24
    %1267 = vst [vmem:[%s1266] sm:$0xff] %v1265
    %s1268 = smul.u32 4, 3
    %s1269 = smul.addr %s1268, 8
    %s1270 = scalar_lea.vmem [#allocation2], %s1269
    %v1271 = vld [vmem:[%s1270] sm:$0xff]
    %v1272 = vld [vmem:[%s1270 + $0x8] sm:$0xff]
    %v1273 = vld [vmem:[%s1270 + $0x10] sm:$0xff]
    %v1274 = vld [vmem:[#allocation3] sm:$0xff]
    %v1275 = vld [vmem:[#allocation3 + $0x8] sm:$0xff]
    %v1276 = vld [vmem:[#allocation3 + $0x10] sm:$0xff]
    %v1277 = vld [vmem:[#allocation3 + $0x18] sm:$0xff]
    %v1278 = vld [vmem:[#allocation3 + $0x20] sm:$0xff]
    %v1279 = vld [vmem:[#allocation3 + $0x28] sm:$0xff]
    %v1280 = vld [vmem:[#allocation3 + $0x30] sm:$0xff]
    %v1281 = vld [vmem:[#allocation3 + $0x38] sm:$0xff]
    %v1282 = vld [vmem:[#allocation3 + $0x40] sm:$0xff]
    %v1283 = vld [vmem:[#allocation3 + $0x48] sm:$0xff]
    %v1284 = vld [vmem:[#allocation3 + $0x50] sm:$0xff]
    %v1285 = vld [vmem:[#allocation3 + $0x58] sm:$0xff]
    %v1286 = vld [vmem:[#allocation3 + $0x60] sm:$0xff]
    %v1287 = vld [vmem:[#allocation3 + $0x68] sm:$0xff]
    %v1288 = vld [vmem:[#allocation3 + $0x70] sm:$0xff]
    %v1289 = vld [vmem:[#allocation3 + $0x78] sm:$0xff]
    %v1290 = vld [vmem:[#allocation3 + $0x80] sm:$0xff]
    %v1291 = vld [vmem:[#allocation3 + $0x88] sm:$0xff]
    %v1292 = vld [vmem:[#allocation3 + $0x90] sm:$0xff]
    %v1293 = vld [vmem:[#allocation3 + $0x98] sm:$0xff]
    %v1294 = vld [vmem:[#allocation3 + $0xa0] sm:$0xff]
    %v1295 = vld [vmem:[#allocation3 + $0xa8] sm:$0xff]
    %v1296 = vld [vmem:[#allocation3 + $0xb0] sm:$0xff]
    %v1297 = vld [vmem:[#allocation3 + $0xb8] sm:$0xff]
    %v1298 = vld [vmem:[#allocation3 + $0xc0] sm:$0xff]
    %v1299 = vld [vmem:[#allocation3 + $0xc8] sm:$0xff]
    %v1300 = vld [vmem:[#allocation3 + $0xd0] sm:$0xff]
    %v1301 = vld [vmem:[#allocation3 + $0xd8] sm:$0xff]
    %v1302 = vld [vmem:[#allocation3 + $0xe0] sm:$0xff]
    %v1303 = vld [vmem:[#allocation3 + $0xe8] sm:$0xff]
    %v1304 = vld [vmem:[#allocation3 + $0xf0] sm:$0xff]
    %v1305 = vld [vmem:[#allocation3 + $0xf8] sm:$0xff]
    %v1306 = vld [vmem:[#allocation3 + $0x100] sm:$0xff]
    %v1307 = vld [vmem:[#allocation3 + $0x108] sm:$0xff]
    %v1308 = vld [vmem:[#allocation3 + $0x110] sm:$0xff]
    %v1309 = vld [vmem:[#allocation3 + $0x118] sm:$0xff]
    %v1310 = vld [vmem:[#allocation3 + $0x120] sm:$0xff]
    %v1311 = vld [vmem:[#allocation3 + $0x128] sm:$0xff]
    %v1312 = vld [vmem:[#allocation3 + $0x130] sm:$0xff]
    %v1313 = vld [vmem:[#allocation3 + $0x138] sm:$0xff]
    %v1314 = vld [vmem:[#allocation3 + $0x140] sm:$0xff]
    %v1315 = vld [vmem:[#allocation3 + $0x148] sm:$0xff]
    %v1316 = vld [vmem:[#allocation3 + $0x150] sm:$0xff]
    %v1317 = vld [vmem:[#allocation3 + $0x158] sm:$0xff]
    %v1318 = vld [vmem:[#allocation3 + $0x160] sm:$0xff]
    %v1319 = vld [vmem:[#allocation3 + $0x168] sm:$0xff]
    %v1320 = vld [vmem:[#allocation3 + $0x170] sm:$0xff]
    %v1321 = vld [vmem:[#allocation3 + $0x178] sm:$0xff]
    %1322 = vmatprep.subr.mxu0 %v1275
    %1323 = vmatpush1.msra.mxu0 %v1274
    %1324 = vmatprep.subr.mxu0 %v1278
    %1325 = vmatpush1.msra.mxu0 %v1277
    %1326 = vmatprep.subr.mxu0 %v1281
    %1327 = vmatpush1.msra.mxu0 %v1280
    %1328 = vmatprep.subr.mxu0 %v1284
    %1329 = vmatpush1.msra.mxu0 %v1283
    %1330 = vmatprep.subr.mxu0 %v1287
    %1331 = vmatpush1.msra.mxu0 %v1286
    %1332 = vmatprep.subr.mxu0 %v1290
    %1333 = vmatpush1.msra.mxu0 %v1289
    %1334 = vmatprep.subr.mxu0 %v1293
    %1335 = vmatpush1.msra.mxu0 %v1292
    %1336 = vmatprep.subr.mxu0 %v1296
    %1337 = vmatpush1.msra.mxu0 %v1295
    %1338 = vmatprep.subr.mxu0 %v1299
    %1339 = vmatpush1.msra.mxu0 %v1298
    %1340 = vmatprep.subr.mxu0 %v1302
    %1341 = vmatpush1.msra.mxu0 %v1301
    %1342 = vmatprep.subr.mxu0 %v1305
    %1343 = vmatpush1.msra.mxu0 %v1304
    %1344 = vmatprep.subr.mxu0 %v1308
    %1345 = vmatpush1.msra.mxu0 %v1307
    %1346 = vmatprep.subr.mxu0 %v1311
    %1347 = vmatpush1.msra.mxu0 %v1310
    %1348 = vmatprep.subr.mxu0 %v1314
    %1349 = vmatpush1.msra.mxu0 %v1313
    %1350 = vmatprep.subr.mxu0 %v1317
    %1351 = vmatpush1.msra.mxu0 %v1316
    %1352 = vmatprep.subr.mxu0 %v1320
    %1353 = vmatpush1.msra.mxu0 %v1319
    %1354 = vmatprep.subr.mxu0 0.0
    %1355 = vmatpush1.msra.mxu0 0.0
    %1356 = vmatprep.subr.mxu0 0.0
    %1357 = vmatpush1.msra.mxu0 0.0
    %1358 = vmatprep.subr.mxu0 0.0
    %1359 = vmatpush1.msra.mxu0 0.0
    %1360 = vmatprep.subr.mxu0 0.0
    %1361 = vmatpush1.msra.mxu0 0.0
    %1362 = vmatprep.subr.mxu0 0.0
    %1363 = vmatpush1.msra.mxu0 0.0
    %1364 = vmatprep.subr.mxu0 0.0
    %1365 = vmatpush1.msra.mxu0 0.0
    %1366 = vmatprep.subr.mxu0 0.0
    %1367 = vmatpush1.msra.mxu0 0.0
    %1368 = vmatprep.subr.mxu0 0.0
    %1369 = vmatpush1.msra.mxu0 0.0
    %1370 = vmatprep.subr.mxu0 0.0
    %1371 = vmatpush1.msra.mxu0 0.0
    %1372 = vmatprep.subr.mxu0 0.0
    %1373 = vmatpush1.msra.mxu0 0.0
    %1374 = vmatprep.subr.mxu0 0.0
    %1375 = vmatpush1.msra.mxu0 0.0
    %1376 = vmatprep.subr.mxu0 0.0
    %1377 = vmatpush1.msra.mxu0 0.0
    %1378 = vmatprep.subr.mxu0 0.0
    %1379 = vmatpush1.msra.mxu0 0.0
    %1380 = vmatprep.subr.mxu0 0.0
    %1381 = vmatpush1.msra.mxu0 0.0
    %1382 = vmatprep.subr.mxu0 0.0
    %1383 = vmatpush1.msra.mxu0 0.0
    %1384 = vmatprep.subr.mxu0 0.0
    %1385 = vmatpush1.msra.mxu0 0.0
    %1386 = vmatprep.mubr.f32.mxu0 0.0
    %1387 = vmatmul.mubr.f32.gmra.mrb[0].mxu0 %v1265
    %v1388 = vpop.f32.mrb[0].mxu0
    %v1389 = vadd.f32 0.0, %v1388
    %v1390 = vpop.f32.mrb[0].mxu0
    %v1391 = vadd.f32 0.0, %v1390
    %1392 = vdwg.mxu0
    %1393 = vmatprep.subr.mxu0 0.0
    %1394 = vmatpush1.msra.mxu0 %v1276
    %1395 = vmatprep.subr.mxu0 0.0
    %1396 = vmatpush1.msra.mxu0 %v1279
    %1397 = vmatprep.subr.mxu0 0.0
    %1398 = vmatpush1.msra.mxu0 %v1282
    %1399 = vmatprep.subr.mxu0 0.0
    %1400 = vmatpush1.msra.mxu0 %v1285
    %1401 = vmatprep.subr.mxu0 0.0
    %1402 = vmatpush1.msra.mxu0 %v1288
    %1403 = vmatprep.subr.mxu0 0.0
    %1404 = vmatpush1.msra.mxu0 %v1291
    %1405 = vmatprep.subr.mxu0 0.0
    %1406 = vmatpush1.msra.mxu0 %v1294
    %1407 = vmatprep.subr.mxu0 0.0
    %1408 = vmatpush1.msra.mxu0 %v1297
    %1409 = vmatprep.subr.mxu0 0.0
    %1410 = vmatpush1.msra.mxu0 %v1300
    %1411 = vmatprep.subr.mxu0 0.0
    %1412 = vmatpush1.msra.mxu0 %v1303
    %1413 = vmatprep.subr.mxu0 0.0
    %1414 = vmatpush1.msra.mxu0 %v1306
    %1415 = vmatprep.subr.mxu0 0.0
    %1416 = vmatpush1.msra.mxu0 %v1309
    %1417 = vmatprep.subr.mxu0 0.0
    %1418 = vmatpush1.msra.mxu0 %v1312
    %1419 = vmatprep.subr.mxu0 0.0
    %1420 = vmatpush1.msra.mxu0 %v1315
    %1421 = vmatprep.subr.mxu0 0.0
    %1422 = vmatpush1.msra.mxu0 %v1318
    %1423 = vmatprep.subr.mxu0 0.0
    %1424 = vmatpush1.msra.mxu0 %v1321
    %1425 = vmatprep.subr.mxu0 0.0
    %1426 = vmatpush1.msra.mxu0 0.0
    %1427 = vmatprep.subr.mxu0 0.0
    %1428 = vmatpush1.msra.mxu0 0.0
    %1429 = vmatprep.subr.mxu0 0.0
    %1430 = vmatpush1.msra.mxu0 0.0
    %1431 = vmatprep.subr.mxu0 0.0
    %1432 = vmatpush1.msra.mxu0 0.0
    %1433 = vmatprep.subr.mxu0 0.0
    %1434 = vmatpush1.msra.mxu0 0.0
    %1435 = vmatprep.subr.mxu0 0.0
    %1436 = vmatpush1.msra.mxu0 0.0
    %1437 = vmatprep.subr.mxu0 0.0
    %1438 = vmatpush1.msra.mxu0 0.0
    %1439 = vmatprep.subr.mxu0 0.0
    %1440 = vmatpush1.msra.mxu0 0.0
    %1441 = vmatprep.subr.mxu0 0.0
    %1442 = vmatpush1.msra.mxu0 0.0
    %1443 = vmatprep.subr.mxu0 0.0
    %1444 = vmatpush1.msra.mxu0 0.0
    %1445 = vmatprep.subr.mxu0 0.0
    %1446 = vmatpush1.msra.mxu0 0.0
    %1447 = vmatprep.subr.mxu0 0.0
    %1448 = vmatpush1.msra.mxu0 0.0
    %1449 = vmatprep.subr.mxu0 0.0
    %1450 = vmatpush1.msra.mxu0 0.0
    %1451 = vmatprep.subr.mxu0 0.0
    %1452 = vmatpush1.msra.mxu0 0.0
    %1453 = vmatprep.subr.mxu0 0.0
    %1454 = vmatpush1.msra.mxu0 0.0
    %1455 = vmatprep.subr.mxu0 0.0
    %1456 = vmatpush1.msra.mxu0 0.0
    %1457 = vmatprep.mubr.f32.mxu0 0.0
    %1458 = vmatmul.mubr.f32.gmra.mrb[0].mxu0 %v1265
    %v1459 = vpop.f32.mrb[0].mxu0
    %v1460 = vadd.f32 0.0, %v1459
    %v1461 = vpop.f32.mrb[0].mxu0
    %1462 = vdwg.mxu0
    %v1463 = vadd.f32 %v1271, %v1389
    %v1464 = vxor.u32 %v1463, 2147483648
    %v1465 = vmul.f32 %v1464, 1.442695
    %v1466 = vpow.pop %v1465
    %v1467 = vadd.f32 %v1466, 1.0
    %v1468 = vrcp.pop %v1467
    %v1469 = vmul.f32 1.0, %v1468
    %v1470 = vadd.f32 %v1272, %v1391
    %v1471 = vxor.u32 %v1470, 2147483648
    %v1472 = vmul.f32 %v1471, 1.442695
    %v1473 = vpow.pop %v1472
    %v1474 = vadd.f32 %v1473, 1.0
    %v1475 = vrcp.pop %v1474
    %v1476 = vmul.f32 1.0, %v1475
    %v1477 = vadd.f32 %v1460, %v600
    %v1478 = vmul.f32 %v1469, %v1477
    %v1479 = vadd.f32 %v1273, %v1478
    %v1480 = vtanh.pop %v1479
    %v1481 = vsub.f32 1.0, %v1476
    %v1482 = vmul.f32 %v1481, %v1480
    %v1483 = vmul.f32 %v1476, %v1265
    %v1484 = vadd.f32 %v1482, %v1483
    %s1485 = scalar_lea.vmem [#allocation9], 32
    %1486 = vst [vmem:[%s1485] sm:$0xff] %v1484
    %s1487 = smul.u32 5, 3
    %s1488 = smul.addr %s1487, 8
    %s1489 = scalar_lea.vmem [#allocation2], %s1488
    %v1490 = vld [vmem:[%s1489] sm:$0xff]
    %v1491 = vld [vmem:[%s1489 + $0x8] sm:$0xff]
    %v1492 = vld [vmem:[%s1489 + $0x10] sm:$0xff]
    %v1493 = vld [vmem:[#allocation3] sm:$0xff]
    %v1494 = vld [vmem:[#allocation3 + $0x8] sm:$0xff]
    %v1495 = vld [vmem:[#allocation3 + $0x10] sm:$0xff]
    %v1496 = vld [vmem:[#allocation3 + $0x18] sm:$0xff]
    %v1497 = vld [vmem:[#allocation3 + $0x20] sm:$0xff]
    %v1498 = vld [vmem:[#allocation3 + $0x28] sm:$0xff]
    %v1499 = vld [vmem:[#allocation3 + $0x30] sm:$0xff]
    %v1500 = vld [vmem:[#allocation3 + $0x38] sm:$0xff]
    %v1501 = vld [vmem:[#allocation3 + $0x40] sm:$0xff]
    %v1502 = vld [vmem:[#allocation3 + $0x48] sm:$0xff]
    %v1503 = vld [vmem:[#allocation3 + $0x50] sm:$0xff]
    %v1504 = vld [vmem:[#allocation3 + $0x58] sm:$0xff]
    %v1505 = vld [vmem:[#allocation3 + $0x60] sm:$0xff]
    %v1506 = vld [vmem:[#allocation3 + $0x68] sm:$0xff]
    %v1507 = vld [vmem:[#allocation3 + $0x70] sm:$0xff]
    %v1508 = vld [vmem:[#allocation3 + $0x78] sm:$0xff]
    %v1509 = vld [vmem:[#allocation3 + $0x80] sm:$0xff]
    %v1510 = vld [vmem:[#allocation3 + $0x88] sm:$0xff]
    %v1511 = vld [vmem:[#allocation3 + $0x90] sm:$0xff]
    %v1512 = vld [vmem:[#allocation3 + $0x98] sm:$0xff]
    %v1513 = vld [vmem:[#allocation3 + $0xa0] sm:$0xff]
    %v1514 = vld [vmem:[#allocation3 + $0xa8] sm:$0xff]
    %v1515 = vld [vmem:[#allocation3 + $0xb0] sm:$0xff]
    %v1516 = vld [vmem:[#allocation3 + $0xb8] sm:$0xff]
    %v1517 = vld [vmem:[#allocation3 + $0xc0] sm:$0xff]
    %v1518 = vld [vmem:[#allocation3 + $0xc8] sm:$0xff]
    %v1519 = vld [vmem:[#allocation3 + $0xd0] sm:$0xff]
    %v1520 = vld [vmem:[#allocation3 + $0xd8] sm:$0xff]
    %v1521 = vld [vmem:[#allocation3 + $0xe0] sm:$0xff]
    %v1522 = vld [vmem:[#allocation3 + $0xe8] sm:$0xff]
    %v1523 = vld [vmem:[#allocation3 + $0xf0] sm:$0xff]
    %v1524 = vld [vmem:[#allocation3 + $0xf8] sm:$0xff]
    %v1525 = vld [vmem:[#allocation3 + $0x100] sm:$0xff]
    %v1526 = vld [vmem:[#allocation3 + $0x108] sm:$0xff]
    %v1527 = vld [vmem:[#allocation3 + $0x110] sm:$0xff]
    %v1528 = vld [vmem:[#allocation3 + $0x118] sm:$0xff]
    %v1529 = vld [vmem:[#allocation3 + $0x120] sm:$0xff]
    %v1530 = vld [vmem:[#allocation3 + $0x128] sm:$0xff]
    %v1531 = vld [vmem:[#allocation3 + $0x130] sm:$0xff]
    %v1532 = vld [vmem:[#allocation3 + $0x138] sm:$0xff]
    %v1533 = vld [vmem:[#allocation3 + $0x140] sm:$0xff]
    %v1534 = vld [vmem:[#allocation3 + $0x148] sm:$0xff]
    %v1535 = vld [vmem:[#allocation3 + $0x150] sm:$0xff]
    %v1536 = vld [vmem:[#allocation3 + $0x158] sm:$0xff]
    %v1537 = vld [vmem:[#allocation3 + $0x160] sm:$0xff]
    %v1538 = vld [vmem:[#allocation3 + $0x168] sm:$0xff]
    %v1539 = vld [vmem:[#allocation3 + $0x170] sm:$0xff]
    %v1540 = vld [vmem:[#allocation3 + $0x178] sm:$0xff]
    %1541 = vmatprep.subr.mxu0 %v1494
    %1542 = vmatpush1.msra.mxu0 %v1493
    %1543 = vmatprep.subr.mxu0 %v1497
    %1544 = vmatpush1.msra.mxu0 %v1496
    %1545 = vmatprep.subr.mxu0 %v1500
    %1546 = vmatpush1.msra.mxu0 %v1499
    %1547 = vmatprep.subr.mxu0 %v1503
    %1548 = vmatpush1.msra.mxu0 %v1502
    %1549 = vmatprep.subr.mxu0 %v1506
    %1550 = vmatpush1.msra.mxu0 %v1505
    %1551 = vmatprep.subr.mxu0 %v1509
    %1552 = vmatpush1.msra.mxu0 %v1508
    %1553 = vmatprep.subr.mxu0 %v1512
    %1554 = vmatpush1.msra.mxu0 %v1511
    %1555 = vmatprep.subr.mxu0 %v1515
    %1556 = vmatpush1.msra.mxu0 %v1514
    %1557 = vmatprep.subr.mxu0 %v1518
    %1558 = vmatpush1.msra.mxu0 %v1517
    %1559 = vmatprep.subr.mxu0 %v1521
    %1560 = vmatpush1.msra.mxu0 %v1520
    %1561 = vmatprep.subr.mxu0 %v1524
    %1562 = vmatpush1.msra.mxu0 %v1523
    %1563 = vmatprep.subr.mxu0 %v1527
    %1564 = vmatpush1.msra.mxu0 %v1526
    %1565 = vmatprep.subr.mxu0 %v1530
    %1566 = vmatpush1.msra.mxu0 %v1529
    %1567 = vmatprep.subr.mxu0 %v1533
    %1568 = vmatpush1.msra.mxu0 %v1532
    %1569 = vmatprep.subr.mxu0 %v1536
    %1570 = vmatpush1.msra.mxu0 %v1535
    %1571 = vmatprep.subr.mxu0 %v1539
    %1572 = vmatpush1.msra.mxu0 %v1538
    %1573 = vmatprep.subr.mxu0 0.0
    %1574 = vmatpush1.msra.mxu0 0.0
    %1575 = vmatprep.subr.mxu0 0.0
    %1576 = vmatpush1.msra.mxu0 0.0
    %1577 = vmatprep.subr.mxu0 0.0
    %1578 = vmatpush1.msra.mxu0 0.0
    %1579 = vmatprep.subr.mxu0 0.0
    %1580 = vmatpush1.msra.mxu0 0.0
    %1581 = vmatprep.subr.mxu0 0.0
    %1582 = vmatpush1.msra.mxu0 0.0
    %1583 = vmatprep.subr.mxu0 0.0
    %1584 = vmatpush1.msra.mxu0 0.0
    %1585 = vmatprep.subr.mxu0 0.0
    %1586 = vmatpush1.msra.mxu0 0.0
    %1587 = vmatprep.subr.mxu0 0.0
    %1588 = vmatpush1.msra.mxu0 0.0
    %1589 = vmatprep.subr.mxu0 0.0
    %1590 = vmatpush1.msra.mxu0 0.0
    %1591 = vmatprep.subr.mxu0 0.0
    %1592 = vmatpush1.msra.mxu0 0.0
    %1593 = vmatprep.subr.mxu0 0.0
    %1594 = vmatpush1.msra.mxu0 0.0
    %1595 = vmatprep.subr.mxu0 0.0
    %1596 = vmatpush1.msra.mxu0 0.0
    %1597 = vmatprep.subr.mxu0 0.0
    %1598 = vmatpush1.msra.mxu0 0.0
    %1599 = vmatprep.subr.mxu0 0.0
    %1600 = vmatpush1.msra.mxu0 0.0
    %1601 = vmatprep.subr.mxu0 0.0
    %1602 = vmatpush1.msra.mxu0 0.0
    %1603 = vmatprep.subr.mxu0 0.0
    %1604 = vmatpush1.msra.mxu0 0.0
    %1605 = vmatprep.mubr.f32.mxu0 0.0
    %1606 = vmatmul.mubr.f32.gmra.mrb[0].mxu0 %v1484
    %v1607 = vpop.f32.mrb[0].mxu0
    %v1608 = vadd.f32 0.0, %v1607
    %v1609 = vpop.f32.mrb[0].mxu0
    %v1610 = vadd.f32 0.0, %v1609
    %1611 = vdwg.mxu0
    %1612 = vmatprep.subr.mxu0 0.0
    %1613 = vmatpush1.msra.mxu0 %v1495
    %1614 = vmatprep.subr.mxu0 0.0
    %1615 = vmatpush1.msra.mxu0 %v1498
    %1616 = vmatprep.subr.mxu0 0.0
    %1617 = vmatpush1.msra.mxu0 %v1501
    %1618 = vmatprep.subr.mxu0 0.0
    %1619 = vmatpush1.msra.mxu0 %v1504
    %1620 = vmatprep.subr.mxu0 0.0
    %1621 = vmatpush1.msra.mxu0 %v1507
    %1622 = vmatprep.subr.mxu0 0.0
    %1623 = vmatpush1.msra.mxu0 %v1510
    %1624 = vmatprep.subr.mxu0 0.0
    %1625 = vmatpush1.msra.mxu0 %v1513
    %1626 = vmatprep.subr.mxu0 0.0
    %1627 = vmatpush1.msra.mxu0 %v1516
    %1628 = vmatprep.subr.mxu0 0.0
    %1629 = vmatpush1.msra.mxu0 %v1519
    %1630 = vmatprep.subr.mxu0 0.0
    %1631 = vmatpush1.msra.mxu0 %v1522
    %1632 = vmatprep.subr.mxu0 0.0
    %1633 = vmatpush1.msra.mxu0 %v1525
    %1634 = vmatprep.subr.mxu0 0.0
    %1635 = vmatpush1.msra.mxu0 %v1528
    %1636 = vmatprep.subr.mxu0 0.0
    %1637 = vmatpush1.msra.mxu0 %v1531
    %1638 = vmatprep.subr.mxu0 0.0
    %1639 = vmatpush1.msra.mxu0 %v1534
    %1640 = vmatprep.subr.mxu0 0.0
    %1641 = vmatpush1.msra.mxu0 %v1537
    %1642 = vmatprep.subr.mxu0 0.0
    %1643 = vmatpush1.msra.mxu0 %v1540
    %1644 = vmatprep.subr.mxu0 0.0
    %1645 = vmatpush1.msra.mxu0 0.0
    %1646 = vmatprep.subr.mxu0 0.0
    %1647 = vmatpush1.msra.mxu0 0.0
    %1648 = vmatprep.subr.mxu0 0.0
    %1649 = vmatpush1.msra.mxu0 0.0
    %1650 = vmatprep.subr.mxu0 0.0
    %1651 = vmatpush1.msra.mxu0 0.0
    %1652 = vmatprep.subr.mxu0 0.0
    %1653 = vmatpush1.msra.mxu0 0.0
    %1654 = vmatprep.subr.mxu0 0.0
    %1655 = vmatpush1.msra.mxu0 0.0
    %1656 = vmatprep.subr.mxu0 0.0
    %1657 = vmatpush1.msra.mxu0 0.0
    %1658 = vmatprep.subr.mxu0 0.0
    %1659 = vmatpush1.msra.mxu0 0.0
    %1660 = vmatprep.subr.mxu0 0.0
    %1661 = vmatpush1.msra.mxu0 0.0
    %1662 = vmatprep.subr.mxu0 0.0
    %1663 = vmatpush1.msra.mxu0 0.0
    %1664 = vmatprep.subr.mxu0 0.0
    %1665 = vmatpush1.msra.mxu0 0.0
    %1666 = vmatprep.subr.mxu0 0.0
    %1667 = vmatpush1.msra.mxu0 0.0
    %1668 = vmatprep.subr.mxu0 0.0
    %1669 = vmatpush1.msra.mxu0 0.0
    %1670 = vmatprep.subr.mxu0 0.0
    %1671 = vmatpush1.msra.mxu0 0.0
    %1672 = vmatprep.subr.mxu0 0.0
    %1673 = vmatpush1.msra.mxu0 0.0
    %1674 = vmatprep.subr.mxu0 0.0
    %1675 = vmatpush1.msra.mxu0 0.0
    %1676 = vmatprep.mubr.f32.mxu0 0.0
    %1677 = vmatmul.mubr.f32.gmra.mrb[0].mxu0 %v1484
    %v1678 = vpop.f32.mrb[0].mxu0
    %v1679 = vadd.f32 0.0, %v1678
    %v1680 = vpop.f32.mrb[0].mxu0
    %1681 = vdwg.mxu0
    %v1682 = vadd.f32 %v1490, %v1608
    %v1683 = vxor.u32 %v1682, 2147483648
    %v1684 = vmul.f32 %v1683, 1.442695
    %v1685 = vpow.pop %v1684
    %v1686 = vadd.f32 %v1685, 1.0
    %v1687 = vrcp.pop %v1686
    %v1688 = vmul.f32 1.0, %v1687
    %v1689 = vadd.f32 %v1491, %v1610
    %v1690 = vxor.u32 %v1689, 2147483648
    %v1691 = vmul.f32 %v1690, 1.442695
    %v1692 = vpow.pop %v1691
    %v1693 = vadd.f32 %v1692, 1.0
    %v1694 = vrcp.pop %v1693
    %v1695 = vmul.f32 1.0, %v1694
    %v1696 = vadd.f32 %v1679, %v600
    %v1697 = vmul.f32 %v1688, %v1696
    %v1698 = vadd.f32 %v1492, %v1697
    %v1699 = vtanh.pop %v1698
    %v1700 = vsub.f32 1.0, %v1695
    %v1701 = vmul.f32 %v1700, %v1699
    %v1702 = vmul.f32 %v1695, %v1484
    %v1703 = vadd.f32 %v1701, %v1702
    %s1704 = scalar_lea.vmem [#allocation9], 40
    %1705 = vst [vmem:[%s1704] sm:$0xff] %v1703
    %s1706 = smul.u32 6, 3
    %s1707 = smul.addr %s1706, 8
    %s1708 = scalar_lea.vmem [#allocation2], %s1707
    %v1709 = vld [vmem:[%s1708] sm:$0xff]
    %v1710 = vld [vmem:[%s1708 + $0x8] sm:$0xff]
    %v1711 = vld [vmem:[%s1708 + $0x10] sm:$0xff]
    %v1712 = vld [vmem:[#allocation3] sm:$0xff]
    %v1713 = vld [vmem:[#allocation3 + $0x8] sm:$0xff]
    %v1714 = vld [vmem:[#allocation3 + $0x10] sm:$0xff]
    %v1715 = vld [vmem:[#allocation3 + $0x18] sm:$0xff]
    %v1716 = vld [vmem:[#allocation3 + $0x20] sm:$0xff]
    %v1717 = vld [vmem:[#allocation3 + $0x28] sm:$0xff]
    %v1718 = vld [vmem:[#allocation3 + $0x30] sm:$0xff]
    %v1719 = vld [vmem:[#allocation3 + $0x38] sm:$0xff]
    %v1720 = vld [vmem:[#allocation3 + $0x40] sm:$0xff]
    %v1721 = vld [vmem:[#allocation3 + $0x48] sm:$0xff]
    %v1722 = vld [vmem:[#allocation3 + $0x50] sm:$0xff]
    %v1723 = vld [vmem:[#allocation3 + $0x58] sm:$0xff]
    %v1724 = vld [vmem:[#allocation3 + $0x60] sm:$0xff]
    %v1725 = vld [vmem:[#allocation3 + $0x68] sm:$0xff]
    %v1726 = vld [vmem:[#allocation3 + $0x70] sm:$0xff]
    %v1727 = vld [vmem:[#allocation3 + $0x78] sm:$0xff]
    %v1728 = vld [vmem:[#allocation3 + $0x80] sm:$0xff]
    %v1729 = vld [vmem:[#allocation3 + $0x88] sm:$0xff]
    %v1730 = vld [vmem:[#allocation3 + $0x90] sm:$0xff]
    %v1731 = vld [vmem:[#allocation3 + $0x98] sm:$0xff]
    %v1732 = vld [vmem:[#allocation3 + $0xa0] sm:$0xff]
    %v1733 = vld [vmem:[#allocation3 + $0xa8] sm:$0xff]
    %v1734 = vld [vmem:[#allocation3 + $0xb0] sm:$0xff]
    %v1735 = vld [vmem:[#allocation3 + $0xb8] sm:$0xff]
    %v1736 = vld [vmem:[#allocation3 + $0xc0] sm:$0xff]
    %v1737 = vld [vmem:[#allocation3 + $0xc8] sm:$0xff]
    %v1738 = vld [vmem:[#allocation3 + $0xd0] sm:$0xff]
    %v1739 = vld [vmem:[#allocation3 + $0xd8] sm:$0xff]
    %v1740 = vld [vmem:[#allocation3 + $0xe0] sm:$0xff]
    %v1741 = vld [vmem:[#allocation3 + $0xe8] sm:$0xff]
    %v1742 = vld [vmem:[#allocation3 + $0xf0] sm:$0xff]
    %v1743 = vld [vmem:[#allocation3 + $0xf8] sm:$0xff]
    %v1744 = vld [vmem:[#allocation3 + $0x100] sm:$0xff]
    %v1745 = vld [vmem:[#allocation3 + $0x108] sm:$0xff]
    %v1746 = vld [vmem:[#allocation3 + $0x110] sm:$0xff]
    %v1747 = vld [vmem:[#allocation3 + $0x118] sm:$0xff]
    %v1748 = vld [vmem:[#allocation3 + $0x120] sm:$0xff]
    %v1749 = vld [vmem:[#allocation3 + $0x128] sm:$0xff]
    %v1750 = vld [vmem:[#allocation3 + $0x130] sm:$0xff]
    %v1751 = vld [vmem:[#allocation3 + $0x138] sm:$0xff]
    %v1752 = vld [vmem:[#allocation3 + $0x140] sm:$0xff]
    %v1753 = vld [vmem:[#allocation3 + $0x148] sm:$0xff]
    %v1754 = vld [vmem:[#allocation3 + $0x150] sm:$0xff]
    %v1755 = vld [vmem:[#allocation3 + $0x158] sm:$0xff]
    %v1756 = vld [vmem:[#allocation3 + $0x160] sm:$0xff]
    %v1757 = vld [vmem:[#allocation3 + $0x168] sm:$0xff]
    %v1758 = vld [vmem:[#allocation3 + $0x170] sm:$0xff]
    %v1759 = vld [vmem:[#allocation3 + $0x178] sm:$0xff]
    %1760 = vmatprep.subr.mxu0 %v1713
    %1761 = vmatpush1.msra.mxu0 %v1712
    %1762 = vmatprep.subr.mxu0 %v1716
    %1763 = vmatpush1.msra.mxu0 %v1715
    %1764 = vmatprep.subr.mxu0 %v1719
    %1765 = vmatpush1.msra.mxu0 %v1718
    %1766 = vmatprep.subr.mxu0 %v1722
    %1767 = vmatpush1.msra.mxu0 %v1721
    %1768 = vmatprep.subr.mxu0 %v1725
    %1769 = vmatpush1.msra.mxu0 %v1724
    %1770 = vmatprep.subr.mxu0 %v1728
    %1771 = vmatpush1.msra.mxu0 %v1727
    %1772 = vmatprep.subr.mxu0 %v1731
    %1773 = vmatpush1.msra.mxu0 %v1730
    %1774 = vmatprep.subr.mxu0 %v1734
    %1775 = vmatpush1.msra.mxu0 %v1733
    %1776 = vmatprep.subr.mxu0 %v1737
    %1777 = vmatpush1.msra.mxu0 %v1736
    %1778 = vmatprep.subr.mxu0 %v1740
    %1779 = vmatpush1.msra.mxu0 %v1739
    %1780 = vmatprep.subr.mxu0 %v1743
    %1781 = vmatpush1.msra.mxu0 %v1742
    %1782 = vmatprep.subr.mxu0 %v1746
    %1783 = vmatpush1.msra.mxu0 %v1745
    %1784 = vmatprep.subr.mxu0 %v1749
    %1785 = vmatpush1.msra.mxu0 %v1748
    %1786 = vmatprep.subr.mxu0 %v1752
    %1787 = vmatpush1.msra.mxu0 %v1751
    %1788 = vmatprep.subr.mxu0 %v1755
    %1789 = vmatpush1.msra.mxu0 %v1754
    %1790 = vmatprep.subr.mxu0 %v1758
    %1791 = vmatpush1.msra.mxu0 %v1757
    %1792 = vmatprep.subr.mxu0 0.0
    %1793 = vmatpush1.msra.mxu0 0.0
    %1794 = vmatprep.subr.mxu0 0.0
    %1795 = vmatpush1.msra.mxu0 0.0
    %1796 = vmatprep.subr.mxu0 0.0
    %1797 = vmatpush1.msra.mxu0 0.0
    %1798 = vmatprep.subr.mxu0 0.0
    %1799 = vmatpush1.msra.mxu0 0.0
    %1800 = vmatprep.subr.mxu0 0.0
    %1801 = vmatpush1.msra.mxu0 0.0
    %1802 = vmatprep.subr.mxu0 0.0
    %1803 = vmatpush1.msra.mxu0 0.0
    %1804 = vmatprep.subr.mxu0 0.0
    %1805 = vmatpush1.msra.mxu0 0.0
    %1806 = vmatprep.subr.mxu0 0.0
    %1807 = vmatpush1.msra.mxu0 0.0
    %1808 = vmatprep.subr.mxu0 0.0
    %1809 = vmatpush1.msra.mxu0 0.0
    %1810 = vmatprep.subr.mxu0 0.0
    %1811 = vmatpush1.msra.mxu0 0.0
    %1812 = vmatprep.subr.mxu0 0.0
    %1813 = vmatpush1.msra.mxu0 0.0
    %1814 = vmatprep.subr.mxu0 0.0
    %1815 = vmatpush1.msra.mxu0 0.0
    %1816 = vmatprep.subr.mxu0 0.0
    %1817 = vmatpush1.msra.mxu0 0.0
    %1818 = vmatprep.subr.mxu0 0.0
    %1819 = vmatpush1.msra.mxu0 0.0
    %1820 = vmatprep.subr.mxu0 0.0
    %1821 = vmatpush1.msra.mxu0 0.0
    %1822 = vmatprep.subr.mxu0 0.0
    %1823 = vmatpush1.msra.mxu0 0.0
    %1824 = vmatprep.mubr.f32.mxu0 0.0
    %1825 = vmatmul.mubr.f32.gmra.mrb[0].mxu0 %v1703
    %v1826 = vpop.f32.mrb[0].mxu0
    %v1827 = vadd.f32 0.0, %v1826
    %v1828 = vpop.f32.mrb[0].mxu0
    %v1829 = vadd.f32 0.0, %v1828
    %1830 = vdwg.mxu0
    %1831 = vmatprep.subr.mxu0 0.0
    %1832 = vmatpush1.msra.mxu0 %v1714
    %1833 = vmatprep.subr.mxu0 0.0
    %1834 = vmatpush1.msra.mxu0 %v1717
    %1835 = vmatprep.subr.mxu0 0.0
    %1836 = vmatpush1.msra.mxu0 %v1720
    %1837 = vmatprep.subr.mxu0 0.0
    %1838 = vmatpush1.msra.mxu0 %v1723
    %1839 = vmatprep.subr.mxu0 0.0
    %1840 = vmatpush1.msra.mxu0 %v1726
    %1841 = vmatprep.subr.mxu0 0.0
    %1842 = vmatpush1.msra.mxu0 %v1729
    %1843 = vmatprep.subr.mxu0 0.0
    %1844 = vmatpush1.msra.mxu0 %v1732
    %1845 = vmatprep.subr.mxu0 0.0
    %1846 = vmatpush1.msra.mxu0 %v1735
    %1847 = vmatprep.subr.mxu0 0.0
    %1848 = vmatpush1.msra.mxu0 %v1738
    %1849 = vmatprep.subr.mxu0 0.0
    %1850 = vmatpush1.msra.mxu0 %v1741
    %1851 = vmatprep.subr.mxu0 0.0
    %1852 = vmatpush1.msra.mxu0 %v1744
    %1853 = vmatprep.subr.mxu0 0.0
    %1854 = vmatpush1.msra.mxu0 %v1747
    %1855 = vmatprep.subr.mxu0 0.0
    %1856 = vmatpush1.msra.mxu0 %v1750
    %1857 = vmatprep.subr.mxu0 0.0
    %1858 = vmatpush1.msra.mxu0 %v1753
    %1859 = vmatprep.subr.mxu0 0.0
    %1860 = vmatpush1.msra.mxu0 %v1756
    %1861 = vmatprep.subr.mxu0 0.0
    %1862 = vmatpush1.msra.mxu0 %v1759
    %1863 = vmatprep.subr.mxu0 0.0
    %1864 = vmatpush1.msra.mxu0 0.0
    %1865 = vmatprep.subr.mxu0 0.0
    %1866 = vmatpush1.msra.mxu0 0.0
    %1867 = vmatprep.subr.mxu0 0.0
    %1868 = vmatpush1.msra.mxu0 0.0
    %1869 = vmatprep.subr.mxu0 0.0
    %1870 = vmatpush1.msra.mxu0 0.0
    %1871 = vmatprep.subr.mxu0 0.0
    %1872 = vmatpush1.msra.mxu0 0.0
    %1873 = vmatprep.subr.mxu0 0.0
    %1874 = vmatpush1.msra.mxu0 0.0
    %1875 = vmatprep.subr.mxu0 0.0
    %1876 = vmatpush1.msra.mxu0 0.0
    %1877 = vmatprep.subr.mxu0 0.0
    %1878 = vmatpush1.msra.mxu0 0.0
    %1879 = vmatprep.subr.mxu0 0.0
    %1880 = vmatpush1.msra.mxu0 0.0
    %1881 = vmatprep.subr.mxu0 0.0
    %1882 = vmatpush1.msra.mxu0 0.0
    %1883 = vmatprep.subr.mxu0 0.0
    %1884 = vmatpush1.msra.mxu0 0.0
    %1885 = vmatprep.subr.mxu0 0.0
    %1886 = vmatpush1.msra.mxu0 0.0
    %1887 = vmatprep.subr.mxu0 0.0
    %1888 = vmatpush1.msra.mxu0 0.0
    %1889 = vmatprep.subr.mxu0 0.0
    %1890 = vmatpush1.msra.mxu0 0.0
    %1891 = vmatprep.subr.mxu0 0.0
    %1892 = vmatpush1.msra.mxu0 0.0
    %1893 = vmatprep.subr.mxu0 0.0
    %1894 = vmatpush1.msra.mxu0 0.0
    %1895 = vmatprep.mubr.f32.mxu0 0.0
    %1896 = vmatmul.mubr.f32.gmra.mrb[0].mxu0 %v1703
    %v1897 = vpop.f32.mrb[0].mxu0
    %v1898 = vadd.f32 0.0, %v1897
    %v1899 = vpop.f32.mrb[0].mxu0
    %1900 = vdwg.mxu0
    %v1901 = vadd.f32 %v1709, %v1827
    %v1902 = vxor.u32 %v1901, 2147483648
    %v1903 = vmul.f32 %v1902, 1.442695
    %v1904 = vpow.pop %v1903
    %v1905 = vadd.f32 %v1904, 1.0
    %v1906 = vrcp.pop %v1905
    %v1907 = vmul.f32 1.0, %v1906
    %v1908 = vadd.f32 %v1710, %v1829
    %v1909 = vxor.u32 %v1908, 2147483648
    %v1910 = vmul.f32 %v1909, 1.442695
    %v1911 = vpow.pop %v1910
    %v1912 = vadd.f32 %v1911, 1.0
    %v1913 = vrcp.pop %v1912
    %v1914 = vmul.f32 1.0, %v1913
    %v1915 = vadd.f32 %v1898, %v600
    %v1916 = vmul.f32 %v1907, %v1915
    %v1917 = vadd.f32 %v1711, %v1916
    %v1918 = vtanh.pop %v1917
    %v1919 = vsub.f32 1.0, %v1914
    %v1920 = vmul.f32 %v1919, %v1918
    %v1921 = vmul.f32 %v1914, %v1703
    %v1922 = vadd.f32 %v1920, %v1921
    %s1923 = scalar_lea.vmem [#allocation9], 48
    %1924 = vst [vmem:[%s1923] sm:$0xff] %v1922
    %s1925 = smul.u32 7, 3
    %s1926 = smul.addr %s1925, 8
    %s1927 = scalar_lea.vmem [#allocation2], %s1926
    %v1928 = vld [vmem:[%s1927] sm:$0xff]
    %v1929 = vld [vmem:[%s1927 + $0x8] sm:$0xff]
    %v1930 = vld [vmem:[%s1927 + $0x10] sm:$0xff]
    %v1931 = vld [vmem:[#allocation3] sm:$0xff]
    %v1932 = vld [vmem:[#allocation3 + $0x8] sm:$0xff]
    %v1933 = vld [vmem:[#allocation3 + $0x10] sm:$0xff]
    %v1934 = vld [vmem:[#allocation3 + $0x18] sm:$0xff]
    %v1935 = vld [vmem:[#allocation3 + $0x20] sm:$0xff]
    %v1936 = vld [vmem:[#allocation3 + $0x28] sm:$0xff]
    %v1937 = vld [vmem:[#allocation3 + $0x30] sm:$0xff]
    %v1938 = vld [vmem:[#allocation3 + $0x38] sm:$0xff]
    %v1939 = vld [vmem:[#allocation3 + $0x40] sm:$0xff]
    %v1940 = vld [vmem:[#allocation3 + $0x48] sm:$0xff]
    %v1941 = vld [vmem:[#allocation3 + $0x50] sm:$0xff]
    %v1942 = vld [vmem:[#allocation3 + $0x58] sm:$0xff]
    %v1943 = vld [vmem:[#allocation3 + $0x60] sm:$0xff]
    %v1944 = vld [vmem:[#allocation3 + $0x68] sm:$0xff]
    %v1945 = vld [vmem:[#allocation3 + $0x70] sm:$0xff]
    %v1946 = vld [vmem:[#allocation3 + $0x78] sm:$0xff]
    %v1947 = vld [vmem:[#allocation3 + $0x80] sm:$0xff]
    %v1948 = vld [vmem:[#allocation3 + $0x88] sm:$0xff]
    %v1949 = vld [vmem:[#allocation3 + $0x90] sm:$0xff]
    %v1950 = vld [vmem:[#allocation3 + $0x98] sm:$0xff]
    %v1951 = vld [vmem:[#allocation3 + $0xa0] sm:$0xff]
    %v1952 = vld [vmem:[#allocation3 + $0xa8] sm:$0xff]
    %v1953 = vld [vmem:[#allocation3 + $0xb0] sm:$0xff]
    %v1954 = vld [vmem:[#allocation3 + $0xb8] sm:$0xff]
    %v1955 = vld [vmem:[#allocation3 + $0xc0] sm:$0xff]
    %v1956 = vld [vmem:[#allocation3 + $0xc8] sm:$0xff]
    %v1957 = vld [vmem:[#allocation3 + $0xd0] sm:$0xff]
    %v1958 = vld [vmem:[#allocation3 + $0xd8] sm:$0xff]
    %v1959 = vld [vmem:[#allocation3 + $0xe0] sm:$0xff]
    %v1960 = vld [vmem:[#allocation3 + $0xe8] sm:$0xff]
    %v1961 = vld [vmem:[#allocation3 + $0xf0] sm:$0xff]
    %v1962 = vld [vmem:[#allocation3 + $0xf8] sm:$0xff]
    %v1963 = vld [vmem:[#allocation3 + $0x100] sm:$0xff]
    %v1964 = vld [vmem:[#allocation3 + $0x108] sm:$0xff]
    %v1965 = vld [vmem:[#allocation3 + $0x110] sm:$0xff]
    %v1966 = vld [vmem:[#allocation3 + $0x118] sm:$0xff]
    %v1967 = vld [vmem:[#allocation3 + $0x120] sm:$0xff]
    %v1968 = vld [vmem:[#allocation3 + $0x128] sm:$0xff]
    %v1969 = vld [vmem:[#allocation3 + $0x130] sm:$0xff]
    %v1970 = vld [vmem:[#allocation3 + $0x138] sm:$0xff]
    %v1971 = vld [vmem:[#allocation3 + $0x140] sm:$0xff]
    %v1972 = vld [vmem:[#allocation3 + $0x148] sm:$0xff]
    %v1973 = vld [vmem:[#allocation3 + $0x150] sm:$0xff]
    %v1974 = vld [vmem:[#allocation3 + $0x158] sm:$0xff]
    %v1975 = vld [vmem:[#allocation3 + $0x160] sm:$0xff]
    %v1976 = vld [vmem:[#allocation3 + $0x168] sm:$0xff]
    %v1977 = vld [vmem:[#allocation3 + $0x170] sm:$0xff]
    %v1978 = vld [vmem:[#allocation3 + $0x178] sm:$0xff]
    %1979 = vmatprep.subr.mxu0 %v1932
    %1980 = vmatpush1.msra.mxu0 %v1931
    %1981 = vmatprep.subr.mxu0 %v1935
    %1982 = vmatpush1.msra.mxu0 %v1934
    %1983 = vmatprep.subr.mxu0 %v1938
    %1984 = vmatpush1.msra.mxu0 %v1937
    %1985 = vmatprep.subr.mxu0 %v1941
    %1986 = vmatpush1.msra.mxu0 %v1940
    %1987 = vmatprep.subr.mxu0 %v1944
    %1988 = vmatpush1.msra.mxu0 %v1943
    %1989 = vmatprep.subr.mxu0 %v1947
    %1990 = vmatpush1.msra.mxu0 %v1946
    %1991 = vmatprep.subr.mxu0 %v1950
    %1992 = vmatpush1.msra.mxu0 %v1949
    %1993 = vmatprep.subr.mxu0 %v1953
    %1994 = vmatpush1.msra.mxu0 %v1952
    %1995 = vmatprep.subr.mxu0 %v1956
    %1996 = vmatpush1.msra.mxu0 %v1955
    %1997 = vmatprep.subr.mxu0 %v1959
    %1998 = vmatpush1.msra.mxu0 %v1958
    %1999 = vmatprep.subr.mxu0 %v1962
    %2000 = vmatpush1.msra.mxu0 %v1961
    %2001 = vmatprep.subr.mxu0 %v1965
    %2002 = vmatpush1.msra.mxu0 %v1964
    %2003 = vmatprep.subr.mxu0 %v1968
    %2004 = vmatpush1.msra.mxu0 %v1967
    %2005 = vmatprep.subr.mxu0 %v1971
    %2006 = vmatpush1.msra.mxu0 %v1970
    %2007 = vmatprep.subr.mxu0 %v1974
    %2008 = vmatpush1.msra.mxu0 %v1973
    %2009 = vmatprep.subr.mxu0 %v1977
    %2010 = vmatpush1.msra.mxu0 %v1976
    %2011 = vmatprep.subr.mxu0 0.0
    %2012 = vmatpush1.msra.mxu0 0.0
    %2013 = vmatprep.subr.mxu0 0.0
    %2014 = vmatpush1.msra.mxu0 0.0
    %2015 = vmatprep.subr.mxu0 0.0
    %2016 = vmatpush1.msra.mxu0 0.0
    %2017 = vmatprep.subr.mxu0 0.0
    %2018 = vmatpush1.msra.mxu0 0.0
    %2019 = vmatprep.subr.mxu0 0.0
    %2020 = vmatpush1.msra.mxu0 0.0
    %2021 = vmatprep.subr.mxu0 0.0
    %2022 = vmatpush1.msra.mxu0 0.0
    %2023 = vmatprep.subr.mxu0 0.0
    %2024 = vmatpush1.msra.mxu0 0.0
    %2025 = vmatprep.subr.mxu0 0.0
    %2026 = vmatpush1.msra.mxu0 0.0
    %2027 = vmatprep.subr.mxu0 0.0
    %2028 = vmatpush1.msra.mxu0 0.0
    %2029 = vmatprep.subr.mxu0 0.0
    %2030 = vmatpush1.msra.mxu0 0.0
    %2031 = vmatprep.subr.mxu0 0.0
    %2032 = vmatpush1.msra.mxu0 0.0
    %2033 = vmatprep.subr.mxu0 0.0
    %2034 = vmatpush1.msra.mxu0 0.0
    %2035 = vmatprep.subr.mxu0 0.0
    %2036 = vmatpush1.msra.mxu0 0.0
    %2037 = vmatprep.subr.mxu0 0.0
    %2038 = vmatpush1.msra.mxu0 0.0
    %2039 = vmatprep.subr.mxu0 0.0
    %2040 = vmatpush1.msra.mxu0 0.0
    %2041 = vmatprep.subr.mxu0 0.0
    %2042 = vmatpush1.msra.mxu0 0.0
    %2043 = vmatprep.mubr.f32.mxu0 0.0
    %2044 = vmatmul.mubr.f32.gmra.mrb[0].mxu0 %v1922
    %v2045 = vpop.f32.mrb[0].mxu0
    %v2046 = vadd.f32 0.0, %v2045
    %v2047 = vpop.f32.mrb[0].mxu0
    %v2048 = vadd.f32 0.0, %v2047
    %2049 = vdwg.mxu0
    %2050 = vmatprep.subr.mxu0 0.0
    %2051 = vmatpush1.msra.mxu0 %v1933
    %2052 = vmatprep.subr.mxu0 0.0
    %2053 = vmatpush1.msra.mxu0 %v1936
    %2054 = vmatprep.subr.mxu0 0.0
    %2055 = vmatpush1.msra.mxu0 %v1939
    %2056 = vmatprep.subr.mxu0 0.0
    %2057 = vmatpush1.msra.mxu0 %v1942
    %2058 = vmatprep.subr.mxu0 0.0
    %2059 = vmatpush1.msra.mxu0 %v1945
    %2060 = vmatprep.subr.mxu0 0.0
    %2061 = vmatpush1.msra.mxu0 %v1948
    %2062 = vmatprep.subr.mxu0 0.0
    %2063 = vmatpush1.msra.mxu0 %v1951
    %2064 = vmatprep.subr.mxu0 0.0
    %2065 = vmatpush1.msra.mxu0 %v1954
    %2066 = vmatprep.subr.mxu0 0.0
    %2067 = vmatpush1.msra.mxu0 %v1957
    %2068 = vmatprep.subr.mxu0 0.0
    %2069 = vmatpush1.msra.mxu0 %v1960
    %2070 = vmatprep.subr.mxu0 0.0
    %2071 = vmatpush1.msra.mxu0 %v1963
    %2072 = vmatprep.subr.mxu0 0.0
    %2073 = vmatpush1.msra.mxu0 %v1966
    %2074 = vmatprep.subr.mxu0 0.0
    %2075 = vmatpush1.msra.mxu0 %v1969
    %2076 = vmatprep.subr.mxu0 0.0
    %2077 = vmatpush1.msra.mxu0 %v1972
    %2078 = vmatprep.subr.mxu0 0.0
    %2079 = vmatpush1.msra.mxu0 %v1975
    %2080 = vmatprep.subr.mxu0 0.0
    %2081 = vmatpush1.msra.mxu0 %v1978
    %2082 = vmatprep.subr.mxu0 0.0
    %2083 = vmatpush1.msra.mxu0 0.0
    %2084 = vmatprep.subr.mxu0 0.0
    %2085 = vmatpush1.msra.mxu0 0.0
    %2086 = vmatprep.subr.mxu0 0.0
    %2087 = vmatpush1.msra.mxu0 0.0
    %2088 = vmatprep.subr.mxu0 0.0
    %2089 = vmatpush1.msra.mxu0 0.0
    %2090 = vmatprep.subr.mxu0 0.0
    %2091 = vmatpush1.msra.mxu0 0.0
    %2092 = vmatprep.subr.mxu0 0.0
    %2093 = vmatpush1.msra.mxu0 0.0
    %2094 = vmatprep.subr.mxu0 0.0
    %2095 = vmatpush1.msra.mxu0 0.0
    %2096 = vmatprep.subr.mxu0 0.0
    %2097 = vmatpush1.msra.mxu0 0.0
    %2098 = vmatprep.subr.mxu0 0.0
    %2099 = vmatpush1.msra.mxu0 0.0
    %2100 = vmatprep.subr.mxu0 0.0
    %2101 = vmatpush1.msra.mxu0 0.0
    %2102 = vmatprep.subr.mxu0 0.0
    %2103 = vmatpush1.msra.mxu0 0.0
    %2104 = vmatprep.subr.mxu0 0.0
    %2105 = vmatpush1.msra.mxu0 0.0
    %2106 = vmatprep.subr.mxu0 0.0
    %2107 = vmatpush1.msra.mxu0 0.0
    %2108 = vmatprep.subr.mxu0 0.0
    %2109 = vmatpush1.msra.mxu0 0.0
    %2110 = vmatprep.subr.mxu0 0.0
    %2111 = vmatpush1.msra.mxu0 0.0
    %2112 = vmatprep.subr.mxu0 0.0
    %2113 = vmatpush1.msra.mxu0 0.0
    %2114 = vmatprep.mubr.f32.mxu0 0.0
    %2115 = vmatmul.mubr.f32.gmra.mrb[0].mxu0 %v1922
    %v2116 = vpop.f32.mrb[0].mxu0
    %v2117 = vadd.f32 0.0, %v2116
    %v2118 = vpop.f32.mrb[0].mxu0
    %2119 = vdwg.mxu0
    %v2120 = vadd.f32 %v1928, %v2046
    %v2121 = vxor.u32 %v2120, 2147483648
    %v2122 = vmul.f32 %v2121, 1.442695
    %v2123 = vpow.pop %v2122
    %v2124 = vadd.f32 %v2123, 1.0
    %v2125 = vrcp.pop %v2124
    %v2126 = vmul.f32 1.0, %v2125
    %v2127 = vadd.f32 %v1929, %v2048
    %v2128 = vxor.u32 %v2127, 2147483648
    %v2129 = vmul.f32 %v2128, 1.442695
    %v2130 = vpow.pop %v2129
    %v2131 = vadd.f32 %v2130, 1.0
    %v2132 = vrcp.pop %v2131
    %v2133 = vmul.f32 1.0, %v2132
    %v2134 = vadd.f32 %v2117, %v600
    %v2135 = vmul.f32 %v2126, %v2134
    %v2136 = vadd.f32 %v1930, %v2135
    %v2137 = vtanh.pop %v2136
    %v2138 = vsub.f32 1.0, %v2133
    %v2139 = vmul.f32 %v2138, %v2137
    %v2140 = vmul.f32 %v2133, %v1922
    %v2141 = vadd.f32 %v2139, %v2140
    %s2142 = scalar_lea.vmem [#allocation9], 56
    %2143 = vst [vmem:[%s2142] sm:$0xff] %v2141
    %v2144 = vld [vmem:[#allocation9] sm:$0xff]
    %v2145 = vld [vmem:[#allocation9 + $0x8] sm:$0xff]
    %v2146 = vld [vmem:[#allocation9 + $0x10] sm:$0xff]
    %v2147 = vld [vmem:[#allocation9 + $0x18] sm:$0xff]
    %v2148 = vld [vmem:[#allocation9 + $0x20] sm:$0xff]
    %v2149 = vld [vmem:[#allocation9 + $0x28] sm:$0xff]
    %v2150 = vld [vmem:[#allocation9 + $0x30] sm:$0xff]
    %v2151 = vld [vmem:[#allocation9 + $0x38] sm:$0xff]
    %v2152 = vld [vmem:[#allocation6] sm:$0xff]
    %v2153 = vld [vmem:[#allocation6 + $0x8] sm:$0xff]
    %v2154 = vld [vmem:[#allocation6 + $0x10] sm:$0xff]
    %v2155 = vld [vmem:[#allocation6 + $0x18] sm:$0xff]
    %v2156 = vld [vmem:[#allocation6 + $0x20] sm:$0xff]
    %v2157 = vld [vmem:[#allocation6 + $0x28] sm:$0xff]
    %v2158 = vld [vmem:[#allocation6 + $0x30] sm:$0xff]
    %v2159 = vld [vmem:[#allocation6 + $0x38] sm:$0xff]
    %v2160 = vld [vmem:[#allocation6 + $0x40] sm:$0xff]
    %v2161 = vld [vmem:[#allocation6 + $0x48] sm:$0xff]
    %v2162 = vld [vmem:[#allocation6 + $0x50] sm:$0xff]
    %v2163 = vld [vmem:[#allocation6 + $0x58] sm:$0xff]
    %v2164 = vld [vmem:[#allocation6 + $0x60] sm:$0xff]
    %v2165 = vld [vmem:[#allocation6 + $0x68] sm:$0xff]
    %v2166 = vld [vmem:[#allocation6 + $0x70] sm:$0xff]
    %v2167 = vld [vmem:[#allocation6 + $0x78] sm:$0xff]
    %v2168 = vld [vmem:[%s7] sm:$0x1]
    %v2170 = vlaneseq
    %v2171 = vshrl.u32 %v2170, 7
    %v2172 = vsub.s32 0, %v2171
    %v2173 = vrot.slane %v2168, %v2172
    %2175 = vmatprep.subr.mxu0 0.0
    %2176 = vmatpush1.msra.mxu0 %v2152
    %2177 = vmatprep.subr.mxu0 0.0
    %2178 = vmatpush1.msra.mxu0 %v2153
    %2179 = vmatprep.subr.mxu0 0.0
    %2180 = vmatpush1.msra.mxu0 %v2154
    %2181 = vmatprep.subr.mxu0 0.0
    %2182 = vmatpush1.msra.mxu0 %v2155
    %2183 = vmatprep.subr.mxu0 0.0
    %2184 = vmatpush1.msra.mxu0 %v2156
    %2185 = vmatprep.subr.mxu0 0.0
    %2186 = vmatpush1.msra.mxu0 %v2157
    %2187 = vmatprep.subr.mxu0 0.0
    %2188 = vmatpush1.msra.mxu0 %v2158
    %2189 = vmatprep.subr.mxu0 0.0
    %2190 = vmatpush1.msra.mxu0 %v2159
    %2191 = vmatprep.subr.mxu0 0.0
    %2192 = vmatpush1.msra.mxu0 %v2160
    %2193 = vmatprep.subr.mxu0 0.0
    %2194 = vmatpush1.msra.mxu0 %v2161
    %2195 = vmatprep.subr.mxu0 0.0
    %2196 = vmatpush1.msra.mxu0 %v2162
    %2197 = vmatprep.subr.mxu0 0.0
    %2198 = vmatpush1.msra.mxu0 %v2163
    %2199 = vmatprep.subr.mxu0 0.0
    %2200 = vmatpush1.msra.mxu0 %v2164
    %2201 = vmatprep.subr.mxu0 0.0
    %2202 = vmatpush1.msra.mxu0 %v2165
    %2203 = vmatprep.subr.mxu0 0.0
    %2204 = vmatpush1.msra.mxu0 %v2166
    %2205 = vmatprep.subr.mxu0 0.0
    %2206 = vmatpush1.msra.mxu0 %v2167
    %2207 = vmatprep.subr.mxu0 0.0
    %2208 = vmatpush1.msra.mxu0 0.0
    %2209 = vmatprep.subr.mxu0 0.0
    %2210 = vmatpush1.msra.mxu0 0.0
    %2211 = vmatprep.subr.mxu0 0.0
    %2212 = vmatpush1.msra.mxu0 0.0
    %2213 = vmatprep.subr.mxu0 0.0
    %2214 = vmatpush1.msra.mxu0 0.0
    %2215 = vmatprep.subr.mxu0 0.0
    %2216 = vmatpush1.msra.mxu0 0.0
    %2217 = vmatprep.subr.mxu0 0.0
    %2218 = vmatpush1.msra.mxu0 0.0
    %2219 = vmatprep.subr.mxu0 0.0
    %2220 = vmatpush1.msra.mxu0 0.0
    %2221 = vmatprep.subr.mxu0 0.0
    %2222 = vmatpush1.msra.mxu0 0.0
    %2223 = vmatprep.subr.mxu0 0.0
    %2224 = vmatpush1.msra.mxu0 0.0
    %2225 = vmatprep.subr.mxu0 0.0
    %2226 = vmatpush1.msra.mxu0 0.0
    %2227 = vmatprep.subr.mxu0 0.0
    %2228 = vmatpush1.msra.mxu0 0.0
    %2229 = vmatprep.subr.mxu0 0.0
    %2230 = vmatpush1.msra.mxu0 0.0
    %2231 = vmatprep.subr.mxu0 0.0
    %2232 = vmatpush1.msra.mxu0 0.0
    %2233 = vmatprep.subr.mxu0 0.0
    %2234 = vmatpush1.msra.mxu0 0.0
    %2235 = vmatprep.subr.mxu0 0.0
    %2236 = vmatpush1.msra.mxu0 0.0
    %2237 = vmatprep.subr.mxu0 0.0
    %2238 = vmatpush1.msra.mxu0 0.0
    %2239 = vmatprep.mubr.f32.mxu0 0.0
    %2240 = vmatmul.mubr.f32.gmra.mrb[0].mxu0 %v2144
    %v2241 = vpop.f32.mrb[0].mxu0
    %v2242 = vadd.f32 %v2173, %v2241
    %v2243 = vpop.f32.mrb[0].mxu0
    %2244 = vmatprep.mubr.f32.mxu0 0.0
    %2245 = vmatmul.mubr.f32.gmra.mrb[0].mxu0 %v2145
    %v2246 = vpop.f32.mrb[0].mxu0
    %v2247 = vadd.f32 %v2173, %v2246
    %v2248 = vpop.f32.mrb[0].mxu0
    %2249 = vmatprep.mubr.f32.mxu0 0.0
    %2250 = vmatmul.mubr.f32.gmra.mrb[0].mxu0 %v2146
    %v2251 = vpop.f32.mrb[0].mxu0
    %v2252 = vadd.f32 %v2173, %v2251
    %v2253 = vpop.f32.mrb[0].mxu0
    %2254 = vmatprep.mubr.f32.mxu0 0.0
    %2255 = vmatmul.mubr.f32.gmra.mrb[0].mxu0 %v2147
    %v2256 = vpop.f32.mrb[0].mxu0
    %v2257 = vadd.f32 %v2173, %v2256
    %v2258 = vpop.f32.mrb[0].mxu0
    %2259 = vmatprep.mubr.f32.mxu0 0.0
    %2260 = vmatmul.mubr.f32.gmra.mrb[0].mxu0 %v2148
    %v2261 = vpop.f32.mrb[0].mxu0
    %v2262 = vadd.f32 %v2173, %v2261
    %v2263 = vpop.f32.mrb[0].mxu0
    %2264 = vmatprep.mubr.f32.mxu0 0.0
    %2265 = vmatmul.mubr.f32.gmra.mrb[0].mxu0 %v2149
    %v2266 = vpop.f32.mrb[0].mxu0
    %v2267 = vadd.f32 %v2173, %v2266
    %v2268 = vpop.f32.mrb[0].mxu0
    %2269 = vmatprep.mubr.f32.mxu0 0.0
    %2270 = vmatmul.mubr.f32.gmra.mrb[0].mxu0 %v2150
    %v2271 = vpop.f32.mrb[0].mxu0
    %v2272 = vadd.f32 %v2173, %v2271
    %v2273 = vpop.f32.mrb[0].mxu0
    %2274 = vmatprep.mubr.f32.mxu0 0.0
    %2275 = vmatmul.mubr.f32.gmra.mrb[0].mxu0 %v2151
    %v2276 = vpop.f32.mrb[0].mxu0
    %v2277 = vadd.f32 %v2173, %v2276
    %v2278 = vpop.f32.mrb[0].mxu0
    %2279 = vdwg.mxu0
    %v2280 = vmax.f32 %v2242, 0.0
    %v2281 = vmax.f32 %v2247, 0.0
    %v2282 = vmax.f32 %v2252, 0.0
    %v2283 = vmax.f32 %v2257, 0.0
    %v2284 = vmax.f32 %v2262, 0.0
    %v2285 = vmax.f32 %v2267, 0.0
    %v2286 = vmax.f32 %v2272, 0.0
    %v2287 = vmax.f32 %v2277, 0.0
    %2288 = vst [vmem:[#allocation10] sm:$0xff] %v2280
    %2289 = vst [vmem:[#allocation10 + $0x8] sm:$0xff] %v2281
    %2290 = vst [vmem:[#allocation10 + $0x10] sm:$0xff] %v2282
    %2291 = vst [vmem:[#allocation10 + $0x18] sm:$0xff] %v2283
    %2292 = vst [vmem:[#allocation10 + $0x20] sm:$0xff] %v2284
    %2293 = vst [vmem:[#allocation10 + $0x28] sm:$0xff] %v2285
    %2294 = vst [vmem:[#allocation10 + $0x30] sm:$0xff] %v2286
    %2295 = vst [vmem:[#allocation10 + $0x38] sm:$0xff] %v2287
    %v2296 = vld [vmem:[#allocation8] sm:$0xff]
    %v2297 = vld [vmem:[#allocation8 + $0x8] sm:$0xff]
    %v2298 = vld [vmem:[#allocation8 + $0x10] sm:$0xff]
    %v2299 = vld [vmem:[#allocation8 + $0x18] sm:$0xff]
    %v2300 = vld [vmem:[#allocation8 + $0x20] sm:$0xff]
    %v2301 = vld [vmem:[#allocation8 + $0x28] sm:$0xff]
    %v2302 = vld [vmem:[#allocation8 + $0x30] sm:$0xff]
    %v2303 = vld [vmem:[#allocation8 + $0x38] sm:$0xff]
    %v2304 = vld [vmem:[#allocation8 + $0x40] sm:$0xff]
    %v2305 = vld [vmem:[#allocation8 + $0x48] sm:$0xff]
    %v2306 = vld [vmem:[#allocation8 + $0x50] sm:$0xff]
    %v2307 = vld [vmem:[#allocation8 + $0x58] sm:$0xff]
    %v2308 = vld [vmem:[#allocation8 + $0x60] sm:$0xff]
    %v2309 = vld [vmem:[#allocation8 + $0x68] sm:$0xff]
    %v2310 = vld [vmem:[#allocation8 + $0x70] sm:$0xff]
    %v2311 = vld [vmem:[#allocation8 + $0x78] sm:$0xff]
    %v2312 = vld [vmem:[%s9] sm:$0x1]
    %v2314 = vlaneseq
    %v2315 = vshrl.u32 %v2314, 7
    %v2316 = vsub.s32 0, %v2315
    %v2317 = vrot.slane %v2312, %v2316
    %2319 = vmatprep.subr.mxu0 0.0
    %2320 = vmatpush1.msra.mxu0 %v2296
    %2321 = vmatprep.subr.mxu0 0.0
    %2322 = vmatpush1.msra.mxu0 %v2297
    %2323 = vmatprep.subr.mxu0 0.0
    %2324 = vmatpush1.msra.mxu0 %v2298
    %2325 = vmatprep.subr.mxu0 0.0
    %2326 = vmatpush1.msra.mxu0 %v2299
    %2327 = vmatprep.subr.mxu0 0.0
    %2328 = vmatpush1.msra.mxu0 %v2300
    %2329 = vmatprep.subr.mxu0 0.0
    %2330 = vmatpush1.msra.mxu0 %v2301
    %2331 = vmatprep.subr.mxu0 0.0
    %2332 = vmatpush1.msra.mxu0 %v2302
    %2333 = vmatprep.subr.mxu0 0.0
    %2334 = vmatpush1.msra.mxu0 %v2303
    %2335 = vmatprep.subr.mxu0 0.0
    %2336 = vmatpush1.msra.mxu0 %v2304
    %2337 = vmatprep.subr.mxu0 0.0
    %2338 = vmatpush1.msra.mxu0 %v2305
    %2339 = vmatprep.subr.mxu0 0.0
    %2340 = vmatpush1.msra.mxu0 %v2306
    %2341 = vmatprep.subr.mxu0 0.0
    %2342 = vmatpush1.msra.mxu0 %v2307
    %2343 = vmatprep.subr.mxu0 0.0
    %2344 = vmatpush1.msra.mxu0 %v2308
    %2345 = vmatprep.subr.mxu0 0.0
    %2346 = vmatpush1.msra.mxu0 %v2309
    %2347 = vmatprep.subr.mxu0 0.0
    %2348 = vmatpush1.msra.mxu0 %v2310
    %2349 = vmatprep.subr.mxu0 0.0
    %2350 = vmatpush1.msra.mxu0 %v2311
    %2351 = vmatprep.subr.mxu0 0.0
    %2352 = vmatpush1.msra.mxu0 0.0
    %2353 = vmatprep.subr.mxu0 0.0
    %2354 = vmatpush1.msra.mxu0 0.0
    %2355 = vmatprep.subr.mxu0 0.0
    %2356 = vmatpush1.msra.mxu0 0.0
    %2357 = vmatprep.subr.mxu0 0.0
    %2358 = vmatpush1.msra.mxu0 0.0
    %2359 = vmatprep.subr.mxu0 0.0
    %2360 = vmatpush1.msra.mxu0 0.0
    %2361 = vmatprep.subr.mxu0 0.0
    %2362 = vmatpush1.msra.mxu0 0.0
    %2363 = vmatprep.subr.mxu0 0.0
    %2364 = vmatpush1.msra.mxu0 0.0
    %2365 = vmatprep.subr.mxu0 0.0
    %2366 = vmatpush1.msra.mxu0 0.0
    %2367 = vmatprep.subr.mxu0 0.0
    %2368 = vmatpush1.msra.mxu0 0.0
    %2369 = vmatprep.subr.mxu0 0.0
    %2370 = vmatpush1.msra.mxu0 0.0
    %2371 = vmatprep.subr.mxu0 0.0
    %2372 = vmatpush1.msra.mxu0 0.0
    %2373 = vmatprep.subr.mxu0 0.0
    %2374 = vmatpush1.msra.mxu0 0.0
    %2375 = vmatprep.subr.mxu0 0.0
    %2376 = vmatpush1.msra.mxu0 0.0
    %2377 = vmatprep.subr.mxu0 0.0
    %2378 = vmatpush1.msra.mxu0 0.0
    %2379 = vmatprep.subr.mxu0 0.0
    %2380 = vmatpush1.msra.mxu0 0.0
    %2381 = vmatprep.subr.mxu0 0.0
    %2382 = vmatpush1.msra.mxu0 0.0
    %2383 = vmatprep.mubr.f32.mxu0 0.0
    %2384 = vmatmul.mubr.f32.gmra.mrb[0].mxu0 %v2280
    %v2385 = vpop.f32.mrb[0].mxu0
    %v2386 = vadd.f32 %v2317, %v2385
    %v2387 = vpop.f32.mrb[0].mxu0
    %2388 = vmatprep.mubr.f32.mxu0 0.0
    %2389 = vmatmul.mubr.f32.gmra.mrb[0].mxu0 %v2281
    %v2390 = vpop.f32.mrb[0].mxu0
    %v2391 = vadd.f32 %v2317, %v2390
    %v2392 = vpop.f32.mrb[0].mxu0
    %2393 = vmatprep.mubr.f32.mxu0 0.0
    %2394 = vmatmul.mubr.f32.gmra.mrb[0].mxu0 %v2282
    %v2395 = vpop.f32.mrb[0].mxu0
    %v2396 = vadd.f32 %v2317, %v2395
    %v2397 = vpop.f32.mrb[0].mxu0
    %2398 = vmatprep.mubr.f32.mxu0 0.0
    %2399 = vmatmul.mubr.f32.gmra.mrb[0].mxu0 %v2283
    %v2400 = vpop.f32.mrb[0].mxu0
    %v2401 = vadd.f32 %v2317, %v2400
    %v2402 = vpop.f32.mrb[0].mxu0
    %2403 = vmatprep.mubr.f32.mxu0 0.0
    %2404 = vmatmul.mubr.f32.gmra.mrb[0].mxu0 %v2284
    %v2405 = vpop.f32.mrb[0].mxu0
    %v2406 = vadd.f32 %v2317, %v2405
    %v2407 = vpop.f32.mrb[0].mxu0
    %2408 = vmatprep.mubr.f32.mxu0 0.0
    %2409 = vmatmul.mubr.f32.gmra.mrb[0].mxu0 %v2285
    %v2410 = vpop.f32.mrb[0].mxu0
    %v2411 = vadd.f32 %v2317, %v2410
    %v2412 = vpop.f32.mrb[0].mxu0
    %2413 = vmatprep.mubr.f32.mxu0 0.0
    %2414 = vmatmul.mubr.f32.gmra.mrb[0].mxu0 %v2286
    %v2415 = vpop.f32.mrb[0].mxu0
    %v2416 = vadd.f32 %v2317, %v2415
    %v2417 = vpop.f32.mrb[0].mxu0
    %2418 = vmatprep.mubr.f32.mxu0 0.0
    %2419 = vmatmul.mubr.f32.gmra.mrb[0].mxu0 %v2287
    %v2420 = vpop.f32.mrb[0].mxu0
    %v2421 = vadd.f32 %v2317, %v2420
    %v2422 = vpop.f32.mrb[0].mxu0
    %2423 = vdwg.mxu0
    %2424 = vst [vmem:[#allocation12] sm:$0xff] %v2386
    %2425 = vst [vmem:[#allocation12 + $0x8] sm:$0xff] %v2391
    %2426 = vst [vmem:[#allocation12 + $0x10] sm:$0xff] %v2396
    %2427 = vst [vmem:[#allocation12 + $0x18] sm:$0xff] %v2401
    %2428 = vst [vmem:[#allocation12 + $0x20] sm:$0xff] %v2406
    %2429 = vst [vmem:[#allocation12 + $0x28] sm:$0xff] %v2411
    %2430 = vst [vmem:[#allocation12 + $0x30] sm:$0xff] %v2416
    %2431 = vst [vmem:[#allocation12 + $0x38] sm:$0xff] %v2421
    // Predicated region
    $region54: #{tpu_custom_call.1} parent=1 // pred_check
      _
    $region55: #{tpu_custom_call.1} parent=1 // pred_check_branch
      %2433 = sbr.rel (0) target = $region57
    $region56: #{tpu_custom_call.1} parent=1 // pred_region
      %s2435 = ssub.s32 1024, 1024
      %2436 = vsyncadd [#allocation5], %s2435
      %s2437 = sshll.u32 [#allocation9], 4
      %s2438 = int_to_ptr.vmem [resolvable:$true] %s2437
      %2443 = dma.vmem_to_hbm [thread:$0]  %s2438, 1024, %s10, [#allocation5], 128, 128, 8
    $region57: #{tpu_custom_call.1} parent=1 // pred_fallthru
      _
    // Predicated region
    $region58: #{tpu_custom_call.1} parent=1 // pred_check
      _
    $region59: #{tpu_custom_call.1} parent=1 // pred_check_branch
      %2445 = sbr.rel (0) target = $region61
    $region60: #{tpu_custom_call.1} parent=1 // pred_region
      %s2447 = ssub.s32 1024, 1024
      %2448 = vsyncadd [#allocation11], %s2447
      %s2449 = sshll.u32 [#allocation10], 4
      %s2450 = int_to_ptr.vmem [resolvable:$true] %s2449
      %2455 = dma.vmem_to_hbm [thread:$0]  %s2450, 1024, %s11, [#allocation11], 128, 128, 8
    $region61: #{tpu_custom_call.1} parent=1 // pred_fallthru
      _
    // Predicated region
    $region62: #{tpu_custom_call.1} parent=1 // pred_check
      _
    $region63: #{tpu_custom_call.1} parent=1 // pred_check_branch
      %2457 = sbr.rel (0) target = $region65
    $region64: #{tpu_custom_call.1} parent=1 // pred_region
      %s2459 = ssub.s32 1024, 1024
      %2460 = vsyncadd [#allocation11], %s2459
      %s2461 = sshll.u32 [#allocation12], 4
      %s2462 = int_to_ptr.vmem [resolvable:$true] %s2461
      %2467 = dma.vmem_to_hbm [thread:$0]  %s2462, 1024, %s12, [#allocation11], 128, 128, 8
    $region65: #{tpu_custom_call.1} parent=1 // pred_fallthru
      _
    // Predicated region
    $region66: #{tpu_custom_call.1} parent=1 // pred_check
      _
    $region67: #{tpu_custom_call.1} parent=1 // pred_check_branch
      %2469 = sbr.rel (0) target = $region69
    $region68: #{tpu_custom_call.1} parent=1 // pred_region
      %2470 = dma.done [#allocation5], 1024
    $region69: #{tpu_custom_call.1} parent=1 // pred_fallthru
      _
    // Predicated region
    $region70: #{tpu_custom_call.1} parent=1 // pred_check
      _
    $region71: #{tpu_custom_call.1} parent=1 // pred_check_branch
      %2472 = sbr.rel (0) target = $region73
    $region72: #{tpu_custom_call.1} parent=1 // pred_region
      %2473 = dma.done [#allocation11], 1024
    $region73: #{tpu_custom_call.1} parent=1 // pred_fallthru
      _
    // Predicated region
    $region74: #{tpu_custom_call.1} parent=1 // pred_check
      _
    $region75: #{tpu_custom_call.1} parent=1 // pred_check_branch
      %2475 = sbr.rel (0) target = $region77
    $region76: #{tpu_custom_call.1} parent=1 // pred_region
      %2476 = dma.done [#allocation11], 1024
    $region77: #{tpu_custom_call.1} parent=1 // pred_fallthru
      _
    %2477 = vsyncpa [#allocation4], 1
    %2478 = vsyncpa [#allocation7], 1
    %2479 = vsyncpa [#allocation5], 1
    %2480 = vsyncpa [#allocation11], 1

</llo_original>
